<compile_context>
chip_gen: v7x
topology: tpu7x:2x2x1
jax: 0.10.0
libtpu: 0.0.40
codegen_flags: <defaults>
</compile_context>

<pallas_src>
import functools

import jax
import jax.numpy as jnp
from jax.experimental import pallas as pl
from jax.experimental.pallas import tpu as pltpu

LANE = 128


def _round_up(v, m):
    return (v + m - 1) // m * m


def _cdiv(a, b):
    return -(-a // b)


def _pad2(m, rows, cols):
    return jnp.pad(m, ((0, rows - m.shape[0]), (0, cols - m.shape[1])))


def _compact(v, n_rows, pitch, keep):
    """(n_rows*pitch, C) -> (n_rows*keep, C): drop per-row pitch-padding cols."""
    c = v.shape[-1]
    return v.reshape(n_rows, pitch, c)[:, :keep, :].reshape(n_rows * keep, c)


def _vmem_limit_bytes():
    try:
        cap = pltpu.get_tpu_info().vmem_capacity_bytes
        return int(min(100 * 2**20, max(32 * 2**20, cap * 3 // 4)))
    except Exception:  # no TPU info available (e.g. interpret mode)
        return 64 * 2**20


# ---------------------------------------------------------------------------
# Fused bottleneck kernel.
#   x_ref : (1, x_rows, Cin_p)      padded input (bf16 stride-1 / f32 stride-2)
#   w1_ref: (Cin_p, Cmid_p)         bf16
#   w2_ref: (3, 3*Cmid_p, Cmid_p)   bf16, per-kh stacked (kw-major, in, out)
#   w3_ref: (Cmid_p, Cout_p)        bf16
#   wd_ref: (Cin_p, Cout_p)         bf16 (downsample variant only)
#   o_ref : (1, TRo*Wo_pad, Cout_p) f32, compacted rows
#   h1_ref: (h1_rows, Cmid_p)       conv1 scratch (bf16 / f32)
#   xs_ref: (h1_rows, Cin_p)        staged input band (stride-2 variant only)
# ---------------------------------------------------------------------------
def _bottleneck_kernel(x_ref, w1_ref, w2_ref, w3_ref, *rest,
                       stride, Wp, Wo_pad, TRo, band, h1_rows):
    if stride == 2:
        wd_ref, o_ref, h1_ref, xs_ref = rest
    else:
        wd_ref = None
        o_ref, h1_ref = rest
        xs_ref = None

    t = pl.program_id(1)
    src0 = pl.multiple_of(t * (stride * band), 8)

    # Stage the input band (contiguous, dynamic start).  For stride 2 it goes
    # through a VMEM scratch so the strided residual gather later uses a
    # STATIC-start strided ref read (dynamic-start strided ref reads crash).
    if stride == 2:
        xs_ref[...] = x_ref[0, pl.ds(src0, h1_rows), :]
        xb = xs_ref[...]
    else:
        xb = x_ref[0, pl.ds(src0, h1_rows), :]

    # conv1 (1x1) + ReLU -> VMEM scratch.
    h1 = jnp.dot(xb.astype(jnp.bfloat16), w1_ref[...],
                 preferred_element_type=jnp.float32)
    h1_ref[...] = jnp.maximum(h1, 0.0).astype(h1_ref.dtype)

    # conv2 (3x3, stride s, pad 1): one K=3*Cmid matmul per kh (3 total).
    acc = None
    for kh in range(3):
        taps = []
        for kw in range(3):
            off = kh * Wp + kw                       # static start
            if stride == 1:
                tap = h1_ref[pl.ds(off, band), :]
            else:
                tap = h1_ref[pl.ds(off, band, stride), :]
            taps.append(tap.astype(jnp.bfloat16))
        slab = jnp.concatenate(taps, axis=-1)        # (band, 3*Cmid_p)
        part = jnp.dot(slab, w2_ref[kh], preferred_element_type=jnp.float32)
        acc = part if acc is None else acc + part
    h2 = jnp.maximum(acc, 0.0)

    # Compact away the padded-pitch junk columns before conv3 / residual /
    # store: (TRo*Wp, C) -> (TRo*Wo_pad, C).
    h2c = _compact(h2, TRo, Wp, Wo_pad).astype(jnp.bfloat16)

    # conv3 (1x1).
    out = jnp.dot(h2c, w3_ref[...], preferred_element_type=jnp.float32)

    # Residual (also compacted).
    if stride == 2:
        xres = xs_ref[pl.ds(Wp + 1, band, 2), :]     # static-start strided
    else:
        xres = x_ref[0, pl.ds(src0 + Wp + 1, band), :]   # contiguous dynamic
    xrc = _compact(xres, TRo, Wp, Wo_pad)
    if wd_ref is not None:                           # 1x1 stride-2 projection
        res = jnp.dot(xrc.astype(jnp.bfloat16), wd_ref[...],
                      preferred_element_type=jnp.float32)
    else:                                            # identity: plain VPU add
        res = xrc.astype(jnp.float32)

    o_ref[0] = jnp.maximum(out + res, 0.0)


# ---------------------------------------------------------------------------
# Wrapper: NCHW in / NCHW out, PyTorch OIHW weights.  Everything here is
# layout plumbing; all matmuls / ReLUs / adds run inside the single kernel.
# ---------------------------------------------------------------------------
def bottleneck_forward(x, w1, w2, w3, wd):
    N, Cin, H, W = x.shape
    Cmid = w1.shape[0]
    Cout = w3.shape[0]
    stride = 2 if wd is not None else 1
    if wd is None:
        assert Cin == Cout, "identity residual requires Cin == Cout"

    Ho = (H - 1) // stride + 1
    Wo = (W - 1) // stride + 1
    Hp = H + 2
    Wp = _round_up(W + 2, 8)            # 8-aligned row pitch
    Wo_pad = _round_up(Wo, 8)

    Cp_in = _round_up(Cin, LANE)
    Cp_mid = _round_up(Cmid, LANE)
    Cp_out = _round_up(Cout, LANE)

    # Row-band tiling: ~1K accumulator rows per band, at least 2 bands.
    TRo = max(1, min(1024 // Wp if Wp <= 1024 else 1, Ho))
    if Ho >= 2:
        TRo = min(TRo, _cdiv(Ho, 2))
    n_bands = _cdiv(Ho, TRo)
    band = TRo * Wp
    h1_rows = _round_up(stride * band + 2 * Wp + 8, 16)
    x_rows = _round_up(max(Hp * Wp, (n_bands - 1) * stride * band + h1_rows), 8)

    # bf16 input for the stride-1 path (halves DMA); f32 for stride-2 so the
    # strided sublane reads stay on 32-bit data.
    x_dtype = jnp.bfloat16 if stride == 1 else jnp.float32

    # Input: NCHW -> NHWC, spatial pad 1 (+ pitch pad), channel pad, flatten.
    xt = jnp.transpose(x, (0, 2, 3, 1)).astype(x_dtype)
    xp = jnp.pad(xt, ((0, 0), (1, 1), (1, Wp - W - 1), (0, Cp_in - Cin)))
    x_flat = xp.reshape(N, Hp * Wp, Cp_in)
    x_flat = jnp.pad(x_flat, ((0, 0), (0, x_rows - Hp * Wp), (0, 0)))

    # Weights: OIHW -> (in, out) matmul layout, channel-padded, bf16.
    w1m = _pad2(w1.reshape(Cmid, Cin).T, Cp_in, Cp_mid).astype(jnp.bfloat16)
    w2t = jnp.transpose(w2, (2, 3, 1, 0))                 # (kh, kw, in, out)
    w2m = jnp.pad(w2t, ((0, 0), (0, 0), (0, Cp_mid - Cmid),
                        (0, Cp_mid - Cmid)))
    w2m = w2m.reshape(3, 3 * Cp_mid, Cp_mid).astype(jnp.bfloat16)
    w3m = _pad2(w3.reshape(Cout, Cmid).T, Cp_mid, Cp_out).astype(jnp.bfloat16)
    wdm = None
    if wd is not None:
        wdm = _pad2(wd.reshape(Cout, Cin).T, Cp_in, Cp_out).astype(jnp.bfloat16)

    kernel = functools.partial(_bottleneck_kernel, stride=stride, Wp=Wp,
                               Wo_pad=Wo_pad, TRo=TRo, band=band,
                               h1_rows=h1_rows)

    def run(single_buffer_weights):
        def wspec(shape):
            idx = lambda n, t, _s=shape: (0,) * len(_s)
            if single_buffer_weights:
                # constant weights: no double buffering needed.
                return pl.BlockSpec(shape, idx, pipeline_mode=pl.Buffered(1))
            return pl.BlockSpec(shape, idx)

        in_specs = [
            pl.BlockSpec((1, x_rows, Cp_in), lambda n, t: (n, 0, 0)),
            wspec((Cp_in, Cp_mid)),
            wspec((3, 3 * Cp_mid, Cp_mid)),
            wspec((Cp_mid, Cp_out)),
        ]
        args = [x_flat, w1m, w2m, w3m]
        scratch = [pltpu.VMEM((h1_rows, Cp_mid),
                              jnp.bfloat16 if stride == 1 else jnp.float32)]
        if wd is not None:
            in_specs.append(wspec((Cp_in, Cp_out)))
            args.append(wdm)
            scratch.append(pltpu.VMEM((h1_rows, Cp_in), jnp.float32))

        return pl.pallas_call(
            kernel,
            out_shape=jax.ShapeDtypeStruct(
                (N, n_bands * TRo * Wo_pad, Cp_out), jnp.float32),
            grid=(N, n_bands),
            in_specs=in_specs,
            out_specs=pl.BlockSpec((1, TRo * Wo_pad, Cp_out),
                                   lambda n, t: (n, t, 0)),
            scratch_shapes=scratch,
            compiler_params=pltpu.CompilerParams(
                dimension_semantics=("parallel", "parallel"),
                vmem_limit_bytes=_vmem_limit_bytes()),
        )(*args)

    try:
        out_flat = run(True)
    except Exception:
        # pl.Buffered(1) not supported on this jax version -> default buffering.
        out_flat = run(False)

    # Strip band-overhang rows and padded channels; back to NCHW.
    out = out_flat.reshape(N, n_bands * TRo, Wo_pad, Cp_out)[:, :Ho, :Wo, :Cout]
    return jnp.transpose(out, (0, 3, 1, 2))


# ---------------------------------------------------------------------------
# Pure-JAX (lax.conv) reference, mirrors the PyTorch module exactly.
# ---------------------------------------------------------------------------
def reference_forward(x, w1, w2, w3, wd):
    dn = ("NCHW", "OIHW", "NCHW")
    hp = jax.lax.Precision.HIGHEST
    conv = lambda a, w, s, p: jax.lax.conv_general_dilated(
        a, w, (s, s), p, dimension_numbers=dn, precision=hp)
    stride = 2 if wd is not None else 1
    out = conv(x, w1, 1, "VALID")
    out = conv(jnp.maximum(out, 0.0), w2, stride, [(1, 1), (1, 1)])
    out = conv(jnp.maximum(out, 0.0), w3, 1, "VALID")
    residual = conv(x, wd, stride, "VALID") if wd is not None else x
    return jnp.maximum(out + residual, 0.0)


if __name__ == "__main__":
    key = jax.random.PRNGKey(0)
    keys = jax.random.split(key, 9)

    # Case 1: BottlenNeck(input_channel=4, mid_channel=8):
    #   input_channel != mid_channel*4 -> Cout=32, stride=2, downsample conv.
    N, Cin, H, W = 2, 4, 16, 16
    Cmid = 8
    Cout = 4 * Cmid
    x = jax.random.normal(keys[0], (N, Cin, H, W), dtype=jnp.float32)
    w1 = 0.1 * jax.random.normal(keys[1], (Cmid, Cin, 1, 1), dtype=jnp.float32)
    w2 = 0.1 * jax.random.normal(keys[2], (Cmid, Cmid, 3, 3), dtype=jnp.float32)
    w3 = 0.1 * jax.random.normal(keys[3], (Cout, Cmid, 1, 1), dtype=jnp.float32)
    wd = 0.1 * jax.random.normal(keys[4], (Cout, Cin, 1, 1), dtype=jnp.float32)

    out = jax.block_until_ready(bottleneck_forward(x, w1, w2, w3, wd))
    ref = jax.block_until_ready(reference_forward(x, w1, w2, w3, wd))
    assert out.shape == (N, Cout, H // 2, W // 2), out.shape
    assert jnp.allclose(out, ref, atol=3e-2, rtol=3e-2), float(
        jnp.max(jnp.abs(out - ref)))

    # Case 2: BottlenNeck(input_channel=32, mid_channel=8):
    #   input_channel == mid_channel*4 -> stride 1, identity residual.
    N2, Cmid2 = 2, 8
    Cin2 = Cout2 = 4 * Cmid2
    H2 = W2 = 8
    x2 = jax.random.normal(keys[5], (N2, Cin2, H2, W2), dtype=jnp.float32)
    v1 = 0.1 * jax.random.normal(keys[6], (Cmid2, Cin2, 1, 1), dtype=jnp.float32)
    v2 = 0.1 * jax.random.normal(keys[7], (Cmid2, Cmid2, 3, 3), dtype=jnp.float32)
    v3 = 0.1 * jax.random.normal(keys[8], (Cout2, Cmid2, 1, 1), dtype=jnp.float32)

    out2 = jax.block_until_ready(bottleneck_forward(x2, v1, v2, v3, None))
    ref2 = jax.block_until_ready(reference_forward(x2, v1, v2, v3, None))
    assert out2.shape == (N2, Cout2, H2, W2), out2.shape
    assert jnp.allclose(out2, ref2, atol=3e-2, rtol=3e-2), float(
        jnp.max(jnp.abs(out2 - ref2)))

    print("KERNEL_OK")
</pallas_src>

<mosaic_0001>
module attributes {stable_mosaic.version = 11 : i64} {
  func.func @_bottleneck_kernel(%arg0: i32, %arg1: i32, %arg2: memref<1x448x128xf32, #tpu.memory_space<vmem>>, %arg3: memref<128x128xbf16, #tpu.memory_space<vmem>>, %arg4: memref<3x384x128xbf16, #tpu.memory_space<vmem>>, %arg5: memref<128x128xbf16, #tpu.memory_space<vmem>>, %arg6: memref<128x128xbf16, #tpu.memory_space<vmem>>, %arg7: memref<1x32x128xf32, #tpu.memory_space<vmem>>, %arg8: memref<256x128xf32, #tpu.memory_space<vmem>>, %arg9: memref<256x128xf32, #tpu.memory_space<vmem>>) attributes {dimension_semantics = [#tpu.dimension_semantics<parallel>, #tpu.dimension_semantics<parallel>], iteration_bounds = array<i64: 2, 2>, scalar_prefetch = 0 : i64, scratch_operands = 2 : i64, tpu.core_type = #tpu.core_type<tc>, window_params = [{transform_indices = @transform_0, window_bounds = array<i64: 1, 448, 128>}, {pipeline_mode = #tpu.pipeline_mode<synchronous>, transform_indices = @transform_1, window_bounds = array<i64: 128, 128>}, {pipeline_mode = #tpu.pipeline_mode<synchronous>, transform_indices = @transform_2, window_bounds = array<i64: 3, 384, 128>}, {pipeline_mode = #tpu.pipeline_mode<synchronous>, transform_indices = @transform_3, window_bounds = array<i64: 128, 128>}, {pipeline_mode = #tpu.pipeline_mode<synchronous>, transform_indices = @transform_4, window_bounds = array<i64: 128, 128>}, {transform_indices = @transform_5, window_bounds = array<i64: 1, 32, 128>}]} {
    %c192_i32 = arith.constant 192 : i32
    %0 = arith.muli %arg1, %c192_i32 : i32
    %1 = tpu.assume_multiple %0, 8 : i32
    %c0 = arith.constant 0 : index
    %2 = arith.index_cast %1 : i32 to index
    %c0_0 = arith.constant 0 : index
    %3 = vector.load %arg2[%c0, %2, %c0_0] : memref<1x448x128xf32, #tpu.memory_space<vmem>>, vector<1x256x128xf32>
    %4 = vector.shape_cast %3 : vector<1x256x128xf32> to vector<256x128xf32>
    %c0_1 = arith.constant 0 : index
    %c0_2 = arith.constant 0 : index
    %5 = vector.load %arg9[%c0_1, %c0_2] : memref<256x128xf32, #tpu.memory_space<vmem>>, vector<256x128xf32>
    tpu.vector_store %arg9[%c0_1, %c0_2], %4 {strides = array<i32>} : memref<256x128xf32, #tpu.memory_space<vmem>>, vector<256x128xf32>,
    %c0_3 = arith.constant 0 : index
    %c0_4 = arith.constant 0 : index
    %6 = vector.load %arg9[%c0_3, %c0_4] : memref<256x128xf32, #tpu.memory_space<vmem>>, vector<256x128xf32>
    %7 = arith.truncf %6 : vector<256x128xf32> to vector<256x128xbf16>
    %c0_5 = arith.constant 0 : index
    %c0_6 = arith.constant 0 : index
    %8 = vector.load %arg3[%c0_5, %c0_6] : memref<128x128xbf16, #tpu.memory_space<vmem>>, vector<128x128xbf16>
    %cst = arith.constant dense<0.000000e+00> : vector<256x128xf32>
    %9 = tpu.matmul %7, %8, %cst {dimension_numbers = #tpu.dot_dimension_numbers<[1], [0], [0], [1], [0, 0, 1, 1], [], []>} : vector<256x128xbf16>, vector<128x128xbf16>, vector<256x128xf32> -> vector<256x128xf32>
    %cst_7 = arith.constant 0.000000e+00 : f32
    %10 = vector.broadcast %cst_7 : f32 to vector<256x128xf32>
    %11 = arith.maximumf %9, %10 : vector<256x128xf32>
    %c0_8 = arith.constant 0 : index
    %c0_9 = arith.constant 0 : index
    %12 = vector.load %arg8[%c0_8, %c0_9] : memref<256x128xf32, #tpu.memory_space<vmem>>, vector<256x128xf32>
    tpu.vector_store %arg8[%c0_8, %c0_9], %11 {strides = array<i32>} : memref<256x128xf32, #tpu.memory_space<vmem>>, vector<256x128xf32>,
    %c0_10 = arith.constant 0 : index
    %c0_11 = arith.constant 0 : index
    %13 = tpu.strided_load %arg8[%c0_10, %c0_11] {strides = array<i32: 2, 1>} : memref<256x128xf32, #tpu.memory_space<vmem>>, vector<96x128xf32>
    %14 = arith.truncf %13 : vector<96x128xf32> to vector<96x128xbf16>
    %c1 = arith.constant 1 : index
    %c0_12 = arith.constant 0 : index
    %15 = tpu.strided_load %arg8[%c1, %c0_12] {strides = array<i32: 2, 1>} : memref<256x128xf32, #tpu.memory_space<vmem>>, vector<96x128xf32>
    %16 = arith.truncf %15 : vector<96x128xf32> to vector<96x128xbf16>
    %c2 = arith.constant 2 : index
    %c0_13 = arith.constant 0 : index
    %17 = tpu.strided_load %arg8[%c2, %c0_13] {strides = array<i32: 2, 1>} : memref<256x128xf32, #tpu.memory_space<vmem>>, vector<96x128xf32>
    %18 = arith.truncf %17 : vector<96x128xf32> to vector<96x128xbf16>
    %19 = tpu.concatenate %14, %16, %18 in 1 : vector<96x128xbf16>, vector<96x128xbf16>, vector<96x128xbf16> -> vector<96x384xbf16>
    %c0_14 = arith.constant 0 : index
    %c0_15 = arith.constant 0 : index
    %c0_16 = arith.constant 0 : index
    %20 = vector.load %arg4[%c0_14, %c0_15, %c0_16] : memref<3x384x128xbf16, #tpu.memory_space<vmem>>, vector<1x384x128xbf16>
    %21 = vector.shape_cast %20 : vector<1x384x128xbf16> to vector<384x128xbf16>
    %cst_17 = arith.constant dense<0.000000e+00> : vector<96x128xf32>
    %22 = tpu.matmul %19, %21, %cst_17 {dimension_numbers = #tpu.dot_dimension_numbers<[1], [0], [0], [1], [0, 0, 1, 1], [], []>} : vector<96x384xbf16>, vector<384x128xbf16>, vector<96x128xf32> -> vector<96x128xf32>
    %c24 = arith.constant 24 : index
    %c0_18 = arith.constant 0 : index
    %23 = tpu.strided_load %arg8[%c24, %c0_18] {strides = array<i32: 2, 1>} : memref<256x128xf32, #tpu.memory_space<vmem>>, vector<96x128xf32>
    %24 = arith.truncf %23 : vector<96x128xf32> to vector<96x128xbf16>
    %c25 = arith.constant 25 : index
    %c0_19 = arith.constant 0 : index
    %25 = tpu.strided_load %arg8[%c25, %c0_19] {strides = array<i32: 2, 1>} : memref<256x128xf32, #tpu.memory_space<vmem>>, vector<96x128xf32>
    %26 = arith.truncf %25 : vector<96x128xf32> to vector<96x128xbf16>
    %c26 = arith.constant 26 : index
    %c0_20 = arith.constant 0 : index
    %27 = tpu.strided_load %arg8[%c26, %c0_20] {strides = array<i32: 2, 1>} : memref<256x128xf32, #tpu.memory_space<vmem>>, vector<96x128xf32>
    %28 = arith.truncf %27 : vector<96x128xf32> to vector<96x128xbf16>
    %29 = tpu.concatenate %24, %26, %28 in 1 : vector<96x128xbf16>, vector<96x128xbf16>, vector<96x128xbf16> -> vector<96x384xbf16>
    %c1_21 = arith.constant 1 : index
    %c0_22 = arith.constant 0 : index
    %c0_23 = arith.constant 0 : index
    %30 = vector.load %arg4[%c1_21, %c0_22, %c0_23] : memref<3x384x128xbf16, #tpu.memory_space<vmem>>, vector<1x384x128xbf16>
    %31 = vector.shape_cast %30 : vector<1x384x128xbf16> to vector<384x128xbf16>
    %cst_24 = arith.constant dense<0.000000e+00> : vector<96x128xf32>
    %32 = tpu.matmul %29, %31, %cst_24 {dimension_numbers = #tpu.dot_dimension_numbers<[1], [0], [0], [1], [0, 0, 1, 1], [], []>} : vector<96x384xbf16>, vector<384x128xbf16>, vector<96x128xf32> -> vector<96x128xf32>
    %33 = arith.addf %22, %32 : vector<96x128xf32>
    %c48 = arith.constant 48 : index
    %c0_25 = arith.constant 0 : index
    %34 = tpu.strided_load %arg8[%c48, %c0_25] {strides = array<i32: 2, 1>} : memref<256x128xf32, #tpu.memory_space<vmem>>, vector<96x128xf32>
    %35 = arith.truncf %34 : vector<96x128xf32> to vector<96x128xbf16>
    %c49 = arith.constant 49 : index
    %c0_26 = arith.constant 0 : index
    %36 = tpu.strided_load %arg8[%c49, %c0_26] {strides = array<i32: 2, 1>} : memref<256x128xf32, #tpu.memory_space<vmem>>, vector<96x128xf32>
    %37 = arith.truncf %36 : vector<96x128xf32> to vector<96x128xbf16>
    %c50 = arith.constant 50 : index
    %c0_27 = arith.constant 0 : index
    %38 = tpu.strided_load %arg8[%c50, %c0_27] {strides = array<i32: 2, 1>} : memref<256x128xf32, #tpu.memory_space<vmem>>, vector<96x128xf32>
    %39 = arith.truncf %38 : vector<96x128xf32> to vector<96x128xbf16>
    %40 = tpu.concatenate %35, %37, %39 in 1 : vector<96x128xbf16>, vector<96x128xbf16>, vector<96x128xbf16> -> vector<96x384xbf16>
    %c2_28 = arith.constant 2 : index
    %c0_29 = arith.constant 0 : index
    %c0_30 = arith.constant 0 : index
    %41 = vector.load %arg4[%c2_28, %c0_29, %c0_30] : memref<3x384x128xbf16, #tpu.memory_space<vmem>>, vector<1x384x128xbf16>
    %42 = vector.shape_cast %41 : vector<1x384x128xbf16> to vector<384x128xbf16>
    %cst_31 = arith.constant dense<0.000000e+00> : vector<96x128xf32>
    %43 = tpu.matmul %40, %42, %cst_31 {dimension_numbers = #tpu.dot_dimension_numbers<[1], [0], [0], [1], [0, 0, 1, 1], [], []>} : vector<96x384xbf16>, vector<384x128xbf16>, vector<96x128xf32> -> vector<96x128xf32>
    %44 = arith.addf %33, %43 : vector<96x128xf32>
    %cst_32 = arith.constant 0.000000e+00 : f32
    %45 = vector.broadcast %cst_32 : f32 to vector<96x128xf32>
    %46 = arith.maximumf %44, %45 : vector<96x128xf32>
    %47 = vector.shape_cast %46 : vector<96x128xf32> to vector<4x24x128xf32>
    %48 = vector.extract_strided_slice %47 {offsets = [0, 0, 0], sizes = [4, 8, 128], strides = [1, 1, 1]} : vector<4x24x128xf32> to vector<4x8x128xf32>
    %49 = vector.shape_cast %48 : vector<4x8x128xf32> to vector<32x128xf32>
    %50 = arith.truncf %49 : vector<32x128xf32> to vector<32x128xbf16>
    %c0_33 = arith.constant 0 : index
    %c0_34 = arith.constant 0 : index
    %51 = vector.load %arg5[%c0_33, %c0_34] : memref<128x128xbf16, #tpu.memory_space<vmem>>, vector<128x128xbf16>
    %cst_35 = arith.constant dense<0.000000e+00> : vector<32x128xf32>
    %52 = tpu.matmul %50, %51, %cst_35 {dimension_numbers = #tpu.dot_dimension_numbers<[1], [0], [0], [1], [0, 0, 1, 1], [], []>} : vector<32x128xbf16>, vector<128x128xbf16>, vector<32x128xf32> -> vector<32x128xf32>
    %c25_36 = arith.constant 25 : index
    %c0_37 = arith.constant 0 : index
    %53 = tpu.strided_load %arg9[%c25_36, %c0_37] {strides = array<i32: 2, 1>} : memref<256x128xf32, #tpu.memory_space<vmem>>, vector<96x128xf32>
    %54 = vector.shape_cast %53 : vector<96x128xf32> to vector<4x24x128xf32>
    %55 = vector.extract_strided_slice %54 {offsets = [0, 0, 0], sizes = [4, 8, 128], strides = [1, 1, 1]} : vector<4x24x128xf32> to vector<4x8x128xf32>
    %56 = vector.shape_cast %55 : vector<4x8x128xf32> to vector<32x128xf32>
    %57 = arith.truncf %56 : vector<32x128xf32> to vector<32x128xbf16>
    %c0_38 = arith.constant 0 : index
    %c0_39 = arith.constant 0 : index
    %58 = vector.load %arg6[%c0_38, %c0_39] : memref<128x128xbf16, #tpu.memory_space<vmem>>, vector<128x128xbf16>
    %cst_40 = arith.constant dense<0.000000e+00> : vector<32x128xf32>
    %59 = tpu.matmul %57, %58, %cst_40 {dimension_numbers = #tpu.dot_dimension_numbers<[1], [0], [0], [1], [0, 0, 1, 1], [], []>} : vector<32x128xbf16>, vector<128x128xbf16>, vector<32x128xf32> -> vector<32x128xf32>
    %60 = arith.addf %52, %59 : vector<32x128xf32>
    %cst_41 = arith.constant 0.000000e+00 : f32
    %61 = vector.broadcast %cst_41 : f32 to vector<32x128xf32>
    %62 = arith.maximumf %60, %61 : vector<32x128xf32>
    %c0_42 = arith.constant 0 : index
    %c0_43 = arith.constant 0 : index
    %c0_44 = arith.constant 0 : index
    %63 = vector.load %arg7[%c0_42, %c0_43, %c0_44] : memref<1x32x128xf32, #tpu.memory_space<vmem>>, vector<1x32x128xf32>
    %64 = vector.shape_cast %63 : vector<1x32x128xf32> to vector<32x128xf32>
    %65 = vector.shape_cast %62 : vector<32x128xf32> to vector<1x32x128xf32>
    tpu.vector_store %arg7[%c0_42, %c0_43, %c0_44], %65 {strides = array<i32>} : memref<1x32x128xf32, #tpu.memory_space<vmem>>, vector<1x32x128xf32>,
    return
  }
  func.func @transform_0(%arg0: i32, %arg1: i32) -> (i32, i32, i32) {
    %c0_i32 = arith.constant 0 : i32
    %c0_i32_0 = arith.constant 0 : i32
    %c0_i32_1 = arith.constant 0 : i32
    return %arg0, %c0_i32, %c0_i32_0 : i32, i32, i32
  }
  func.func @transform_1(%arg0: i32, %arg1: i32) -> (i32, i32) {
    %c0_i32 = arith.constant 0 : i32
    %c0_i32_0 = arith.constant 0 : i32
    %c0_i32_1 = arith.constant 0 : i32
    return %c0_i32, %c0_i32_0 : i32, i32
  }
  func.func @transform_2(%arg0: i32, %arg1: i32) -> (i32, i32, i32) {
    %c0_i32 = arith.constant 0 : i32
    %c0_i32_0 = arith.constant 0 : i32
    %c0_i32_1 = arith.constant 0 : i32
    %c0_i32_2 = arith.constant 0 : i32
    return %c0_i32, %c0_i32_0, %c0_i32_1 : i32, i32, i32
  }
  func.func @transform_3(%arg0: i32, %arg1: i32) -> (i32, i32) {
    %c0_i32 = arith.constant 0 : i32
    %c0_i32_0 = arith.constant 0 : i32
    %c0_i32_1 = arith.constant 0 : i32
    return %c0_i32, %c0_i32_0 : i32, i32
  }
  func.func @transform_4(%arg0: i32, %arg1: i32) -> (i32, i32) {
    %c0_i32 = arith.constant 0 : i32
    %c0_i32_0 = arith.constant 0 : i32
    %c0_i32_1 = arith.constant 0 : i32
    return %c0_i32, %c0_i32_0 : i32, i32
  }
  func.func @transform_5(%arg0: i32, %arg1: i32) -> (i32, i32, i32) {
    %c0_i32 = arith.constant 0 : i32
    %c0_i32_0 = arith.constant 0 : i32
    return %arg0, %arg1, %c0_i32 : i32, i32, i32
  }
}

module attributes {stable_mosaic.version = 11 : i64} {
  func.func @_bottleneck_kernel(%arg0: i32, %arg1: i32, %arg2: memref<1x448x128xf32, #tpu.memory_space<vmem>>, %arg3: memref<128x128xbf16, #tpu.memory_space<vmem>>, %arg4: memref<3x384x128xbf16, #tpu.memory_space<vmem>>, %arg5: memref<128x128xbf16, #tpu.memory_space<vmem>>, %arg6: memref<128x128xbf16, #tpu.memory_space<vmem>>, %arg7: memref<1x32x128xf32, #tpu.memory_space<vmem>>, %arg8: memref<256x128xf32, #tpu.memory_space<vmem>>, %arg9: memref<256x128xf32, #tpu.memory_space<vmem>>) attributes {dimension_semantics = [#tpu.dimension_semantics<parallel>, #tpu.dimension_semantics<parallel>], iteration_bounds = array<i64: 2, 2>, scalar_prefetch = 0 : i64, scratch_operands = 2 : i64, tpu.core_type = #tpu.core_type<tc>, window_params = [{transform_indices = @transform_0, window_bounds = array<i64: 1, 448, 128>}, {pipeline_mode = #tpu.pipeline_mode<synchronous>, transform_indices = @transform_1, window_bounds = array<i64: 128, 128>}, {pipeline_mode = #tpu.pipeline_mode<synchronous>, transform_indices = @transform_2, window_bounds = array<i64: 3, 384, 128>}, {pipeline_mode = #tpu.pipeline_mode<synchronous>, transform_indices = @transform_3, window_bounds = array<i64: 128, 128>}, {pipeline_mode = #tpu.pipeline_mode<synchronous>, transform_indices = @transform_4, window_bounds = array<i64: 128, 128>}, {transform_indices = @transform_5, window_bounds = array<i64: 1, 32, 128>}]} {
    %c192_i32 = arith.constant 192 : i32
    %0 = arith.muli %arg1, %c192_i32 : i32
    %1 = tpu.assume_multiple %0, 8 : i32
    %c0 = arith.constant 0 : index
    %2 = arith.index_cast %1 : i32 to index
    %c0_0 = arith.constant 0 : index
    %3 = vector.load %arg2[%c0, %2, %c0_0] : memref<1x448x128xf32, #tpu.memory_space<vmem>>, vector<1x256x128xf32>
    %4 = vector.shape_cast %3 : vector<1x256x128xf32> to vector<256x128xf32>
    %c0_1 = arith.constant 0 : index
    %c0_2 = arith.constant 0 : index
    %5 = vector.load %arg9[%c0_1, %c0_2] : memref<256x128xf32, #tpu.memory_space<vmem>>, vector<256x128xf32>
    tpu.vector_store %arg9[%c0_1, %c0_2], %4 {strides = array<i32>} : memref<256x128xf32, #tpu.memory_space<vmem>>, vector<256x128xf32>,
    %c0_3 = arith.constant 0 : index
    %c0_4 = arith.constant 0 : index
    %6 = vector.load %arg9[%c0_3, %c0_4] : memref<256x128xf32, #tpu.memory_space<vmem>>, vector<256x128xf32>
    %7 = arith.truncf %6 : vector<256x128xf32> to vector<256x128xbf16>
    %c0_5 = arith.constant 0 : index
    %c0_6 = arith.constant 0 : index
    %8 = vector.load %arg3[%c0_5, %c0_6] : memref<128x128xbf16, #tpu.memory_space<vmem>>, vector<128x128xbf16>
    %cst = arith.constant dense<0.000000e+00> : vector<256x128xf32>
    %9 = tpu.matmul %7, %8, %cst {dimension_numbers = #tpu.dot_dimension_numbers<[1], [0], [0], [1], [0, 0, 1, 1], [], []>} : vector<256x128xbf16>, vector<128x128xbf16>, vector<256x128xf32> -> vector<256x128xf32>
    %cst_7 = arith.constant 0.000000e+00 : f32
    %10 = vector.broadcast %cst_7 : f32 to vector<256x128xf32>
    %11 = arith.maximumf %9, %10 : vector<256x128xf32>
    %c0_8 = arith.constant 0 : index
    %c0_9 = arith.constant 0 : index
    %12 = vector.load %arg8[%c0_8, %c0_9] : memref<256x128xf32, #tpu.memory_space<vmem>>, vector<256x128xf32>
    tpu.vector_store %arg8[%c0_8, %c0_9], %11 {strides = array<i32>} : memref<256x128xf32, #tpu.memory_space<vmem>>, vector<256x128xf32>,
    %c0_10 = arith.constant 0 : index
    %c0_11 = arith.constant 0 : index
    %13 = tpu.strided_load %arg8[%c0_10, %c0_11] {strides = array<i32: 2, 1>} : memref<256x128xf32, #tpu.memory_space<vmem>>, vector<96x128xf32>
    %14 = arith.truncf %13 : vector<96x128xf32> to vector<96x128xbf16>
    %c1 = arith.constant 1 : index
    %c0_12 = arith.constant 0 : index
    %15 = tpu.strided_load %arg8[%c1, %c0_12] {strides = array<i32: 2, 1>} : memref<256x128xf32, #tpu.memory_space<vmem>>, vector<96x128xf32>
    %16 = arith.truncf %15 : vector<96x128xf32> to vector<96x128xbf16>
    %c2 = arith.constant 2 : index
    %c0_13 = arith.constant 0 : index
    %17 = tpu.strided_load %arg8[%c2, %c0_13] {strides = array<i32: 2, 1>} : memref<256x128xf32, #tpu.memory_space<vmem>>, vector<96x128xf32>
    %18 = arith.truncf %17 : vector<96x128xf32> to vector<96x128xbf16>
    %19 = tpu.concatenate %14, %16, %18 in 1 : vector<96x128xbf16>, vector<96x128xbf16>, vector<96x128xbf16> -> vector<96x384xbf16>
    %c0_14 = arith.constant 0 : index
    %c0_15 = arith.constant 0 : index
    %c0_16 = arith.constant 0 : index
    %20 = vector.load %arg4[%c0_14, %c0_15, %c0_16] : memref<3x384x128xbf16, #tpu.memory_space<vmem>>, vector<1x384x128xbf16>
    %21 = vector.shape_cast %20 : vector<1x384x128xbf16> to vector<384x128xbf16>
    %cst_17 = arith.constant dense<0.000000e+00> : vector<96x128xf32>
    %22 = tpu.matmul %19, %21, %cst_17 {dimension_numbers = #tpu.dot_dimension_numbers<[1], [0], [0], [1], [0, 0, 1, 1], [], []>} : vector<96x384xbf16>, vector<384x128xbf16>, vector<96x128xf32> -> vector<96x128xf32>
    %c24 = arith.constant 24 : index
    %c0_18 = arith.constant 0 : index
    %23 = tpu.strided_load %arg8[%c24, %c0_18] {strides = array<i32: 2, 1>} : memref<256x128xf32, #tpu.memory_space<vmem>>, vector<96x128xf32>
    %24 = arith.truncf %23 : vector<96x128xf32> to vector<96x128xbf16>
    %c25 = arith.constant 25 : index
    %c0_19 = arith.constant 0 : index
    %25 = tpu.strided_load %arg8[%c25, %c0_19] {strides = array<i32: 2, 1>} : memref<256x128xf32, #tpu.memory_space<vmem>>, vector<96x128xf32>
    %26 = arith.truncf %25 : vector<96x128xf32> to vector<96x128xbf16>
    %c26 = arith.constant 26 : index
    %c0_20 = arith.constant 0 : index
    %27 = tpu.strided_load %arg8[%c26, %c0_20] {strides = array<i32: 2, 1>} : memref<256x128xf32, #tpu.memory_space<vmem>>, vector<96x128xf32>
    %28 = arith.truncf %27 : vector<96x128xf32> to vector<96x128xbf16>
    %29 = tpu.concatenate %24, %26, %28 in 1 : vector<96x128xbf16>, vector<96x128xbf16>, vector<96x128xbf16> -> vector<96x384xbf16>
    %c1_21 = arith.constant 1 : index
    %c0_22 = arith.constant 0 : index
    %c0_23 = arith.constant 0 : index
    %30 = vector.load %arg4[%c1_21, %c0_22, %c0_23] : memref<3x384x128xbf16, #tpu.memory_space<vmem>>, vector<1x384x128xbf16>
    %31 = vector.shape_cast %30 : vector<1x384x128xbf16> to vector<384x128xbf16>
    %cst_24 = arith.constant dense<0.000000e+00> : vector<96x128xf32>
    %32 = tpu.matmul %29, %31, %cst_24 {dimension_numbers = #tpu.dot_dimension_numbers<[1], [0], [0], [1], [0, 0, 1, 1], [], []>} : vector<96x384xbf16>, vector<384x128xbf16>, vector<96x128xf32> -> vector<96x128xf32>
    %33 = arith.addf %22, %32 : vector<96x128xf32>
    %c48 = arith.constant 48 : index
    %c0_25 = arith.constant 0 : index
    %34 = tpu.strided_load %arg8[%c48, %c0_25] {strides = array<i32: 2, 1>} : memref<256x128xf32, #tpu.memory_space<vmem>>, vector<96x128xf32>
    %35 = arith.truncf %34 : vector<96x128xf32> to vector<96x128xbf16>
    %c49 = arith.constant 49 : index
    %c0_26 = arith.constant 0 : index
    %36 = tpu.strided_load %arg8[%c49, %c0_26] {strides = array<i32: 2, 1>} : memref<256x128xf32, #tpu.memory_space<vmem>>, vector<96x128xf32>
    %37 = arith.truncf %36 : vector<96x128xf32> to vector<96x128xbf16>
    %c50 = arith.constant 50 : index
    %c0_27 = arith.constant 0 : index
    %38 = tpu.strided_load %arg8[%c50, %c0_27] {strides = array<i32: 2, 1>} : memref<256x128xf32, #tpu.memory_space<vmem>>, vector<96x128xf32>
    %39 = arith.truncf %38 : vector<96x128xf32> to vector<96x128xbf16>
    %40 = tpu.concatenate %35, %37, %39 in 1 : vector<96x128xbf16>, vector<96x128xbf16>, vector<96x128xbf16> -> vector<96x384xbf16>
    %c2_28 = arith.constant 2 : index
    %c0_29 = arith.constant 0 : index
    %c0_30 = arith.constant 0 : index
    %41 = vector.load %arg4[%c2_28, %c0_29, %c0_30] : memref<3x384x128xbf16, #tpu.memory_space<vmem>>, vector<1x384x128xbf16>
    %42 = vector.shape_cast %41 : vector<1x384x128xbf16> to vector<384x128xbf16>
    %cst_31 = arith.constant dense<0.000000e+00> : vector<96x128xf32>
    %43 = tpu.matmul %40, %42, %cst_31 {dimension_numbers = #tpu.dot_dimension_numbers<[1], [0], [0], [1], [0, 0, 1, 1], [], []>} : vector<96x384xbf16>, vector<384x128xbf16>, vector<96x128xf32> -> vector<96x128xf32>
    %44 = arith.addf %33, %43 : vector<96x128xf32>
    %cst_32 = arith.constant 0.000000e+00 : f32
    %45 = vector.broadcast %cst_32 : f32 to vector<96x128xf32>
    %46 = arith.maximumf %44, %45 : vector<96x128xf32>
    %47 = vector.shape_cast %46 : vector<96x128xf32> to vector<4x24x128xf32>
    %48 = vector.extract_strided_slice %47 {offsets = [0, 0, 0], sizes = [4, 8, 128], strides = [1, 1, 1]} : vector<4x24x128xf32> to vector<4x8x128xf32>
    %49 = vector.shape_cast %48 : vector<4x8x128xf32> to vector<32x128xf32>
    %50 = arith.truncf %49 : vector<32x128xf32> to vector<32x128xbf16>
    %c0_33 = arith.constant 0 : index
    %c0_34 = arith.constant 0 : index
    %51 = vector.load %arg5[%c0_33, %c0_34] : memref<128x128xbf16, #tpu.memory_space<vmem>>, vector<128x128xbf16>
    %cst_35 = arith.constant dense<0.000000e+00> : vector<32x128xf32>
    %52 = tpu.matmul %50, %51, %cst_35 {dimension_numbers = #tpu.dot_dimension_numbers<[1], [0], [0], [1], [0, 0, 1, 1], [], []>} : vector<32x128xbf16>, vector<128x128xbf16>, vector<32x128xf32> -> vector<32x128xf32>
    %c25_36 = arith.constant 25 : index
    %c0_37 = arith.constant 0 : index
    %53 = tpu.strided_load %arg9[%c25_36, %c0_37] {strides = array<i32: 2, 1>} : memref<256x128xf32, #tpu.memory_space<vmem>>, vector<96x128xf32>
    %54 = vector.shape_cast %53 : vector<96x128xf32> to vector<4x24x128xf32>
    %55 = vector.extract_strided_slice %54 {offsets = [0, 0, 0], sizes = [4, 8, 128], strides = [1, 1, 1]} : vector<4x24x128xf32> to vector<4x8x128xf32>
    %56 = vector.shape_cast %55 : vector<4x8x128xf32> to vector<32x128xf32>
    %57 = arith.truncf %56 : vector<32x128xf32> to vector<32x128xbf16>
    %c0_38 = arith.constant 0 : index
    %c0_39 = arith.constant 0 : index
    %58 = vector.load %arg6[%c0_38, %c0_39] : memref<128x128xbf16, #tpu.memory_space<vmem>>, vector<128x128xbf16>
    %cst_40 = arith.constant dense<0.000000e+00> : vector<32x128xf32>
    %59 = tpu.matmul %57, %58, %cst_40 {dimension_numbers = #tpu.dot_dimension_numbers<[1], [0], [0], [1], [0, 0, 1, 1], [], []>} : vector<32x128xbf16>, vector<128x128xbf16>, vector<32x128xf32> -> vector<32x128xf32>
    %60 = arith.addf %52, %59 : vector<32x128xf32>
    %cst_41 = arith.constant 0.000000e+00 : f32
    %61 = vector.broadcast %cst_41 : f32 to vector<32x128xf32>
    %62 = arith.maximumf %60, %61 : vector<32x128xf32>
    %c0_42 = arith.constant 0 : index
    %c0_43 = arith.constant 0 : index
    %c0_44 = arith.constant 0 : index
    %63 = vector.load %arg7[%c0_42, %c0_43, %c0_44] : memref<1x32x128xf32, #tpu.memory_space<vmem>>, vector<1x32x128xf32>
    %64 = vector.shape_cast %63 : vector<1x32x128xf32> to vector<32x128xf32>
    %65 = vector.shape_cast %62 : vector<32x128xf32> to vector<1x32x128xf32>
    tpu.vector_store %arg7[%c0_42, %c0_43, %c0_44], %65 {strides = array<i32>} : memref<1x32x128xf32, #tpu.memory_space<vmem>>, vector<1x32x128xf32>,
    return
  }
  func.func @transform_0(%arg0: i32, %arg1: i32) -> (i32, i32, i32) {
    %c0_i32 = arith.constant 0 : i32
    %c0_i32_0 = arith.constant 0 : i32
    %c0_i32_1 = arith.constant 0 : i32
    return %arg0, %c0_i32, %c0_i32_0 : i32, i32, i32
  }
  func.func @transform_1(%arg0: i32, %arg1: i32) -> (i32, i32) {
    %c0_i32 = arith.constant 0 : i32
    %c0_i32_0 = arith.constant 0 : i32
    %c0_i32_1 = arith.constant 0 : i32
    return %c0_i32, %c0_i32_0 : i32, i32
  }
  func.func @transform_2(%arg0: i32, %arg1: i32) -> (i32, i32, i32) {
    %c0_i32 = arith.constant 0 : i32
    %c0_i32_0 = arith.constant 0 : i32
    %c0_i32_1 = arith.constant 0 : i32
    %c0_i32_2 = arith.constant 0 : i32
    return %c0_i32, %c0_i32_0, %c0_i32_1 : i32, i32, i32
  }
  func.func @transform_3(%arg0: i32, %arg1: i32) -> (i32, i32) {
    %c0_i32 = arith.constant 0 : i32
    %c0_i32_0 = arith.constant 0 : i32
    %c0_i32_1 = arith.constant 0 : i32
    return %c0_i32, %c0_i32_0 : i32, i32
  }
  func.func @transform_4(%arg0: i32, %arg1: i32) -> (i32, i32) {
    %c0_i32 = arith.constant 0 : i32
    %c0_i32_0 = arith.constant 0 : i32
    %c0_i32_1 = arith.constant 0 : i32
    return %c0_i32, %c0_i32_0 : i32, i32
  }
  func.func @transform_5(%arg0: i32, %arg1: i32) -> (i32, i32, i32) {
    %c0_i32 = arith.constant 0 : i32
    %c0_i32_0 = arith.constant 0 : i32
    return %arg0, %arg1, %c0_i32 : i32, i32, i32
  }
}

</mosaic_0001>

<llo_original>
// kernel: tpu_custom_call.1
$region0: #{tpu_custom_call.1}
  #allocation0 [shape = 'u32[]', space=smem, size = 0x4, offset = 0x4, fixed_abs, tag = 'smem constant byte address 0x4 - core index']
  #allocation1 [shape = 'u32[144,128]{1,0:T(1,128)}', space=vmem, size = 0x12000, scoped, tag = 'internal scratch']
  #allocation2 [shape = 'f32[256,128]{1,0:T(8,128)}', space=vmem, size = 0x20000, scoped, tag = 'scratch operand']
  #allocation3 [shape = 'f32[256,128]{1,0:T(8,128)}', space=vmem, size = 0x20000, scoped, tag = 'scratch operand']
  %s0 = inlined_call_operand.hbm [shape: f32[2,448,128], index: 0, kind: input, shape index: {}]
  %s1 = inlined_call_operand.hbm [shape: bf16[128,128], index: 1, kind: input, shape index: {}]
  %s2 = inlined_call_operand.hbm [shape: bf16[3,384,128], index: 2, kind: input, shape index: {}]
  %s3 = inlined_call_operand.hbm [shape: bf16[128,128], index: 3, kind: input, shape index: {}]
  %s4 = inlined_call_operand.hbm [shape: bf16[128,128], index: 4, kind: input, shape index: {}]
  %s5 = inlined_call_operand.hbm [shape: f32[2,64,128], index: 5, kind: output, shape index: {}]
  %s6 = sld [smem:[#allocation0]]
  $region73: #{tpu_custom_call.1} parent=0
    _
  %s8 = ssub.s32 1, %s6
  %s9 = scalar_select 0, %s8, %s6
  $region1: #{tpu_custom_call.1} parent=0
    #allocation4 [shape = 'u8[458752]{0}', space=vmem, size = 0x70000, scoped, tag = 'input window, operand 0']
    #allocation5 [shape = 's32[2]{0}', space=sflag, size = 0x8, scoped, tag = 'scoped memory for tpu_custom_call.1']
    #allocation6 [shape = 's32[2]{0}', space=sflag, size = 0x8, scoped, tag = 'scoped memory for tpu_custom_call.1']
    #allocation7 [shape = 'u8[32768]{0}', space=vmem, size = 0x8000, scoped, tag = 'input window, operand 1, single buffered']
    #allocation8 [shape = 's32[1]{0}', space=sflag, size = 0x4, scoped, tag = 'scoped memory for tpu_custom_call.1']
    #allocation9 [shape = 'u8[294912]{0}', space=vmem, size = 0x48000, scoped, tag = 'input window, operand 2, single buffered']
    #allocation10 [shape = 'u8[32768]{0}', space=vmem, size = 0x8000, scoped, tag = 'input window, operand 3, single buffered']
    #allocation11 [shape = 's32[1]{0}', space=sflag, size = 0x4, scoped, tag = 'scoped memory for tpu_custom_call.1']
    #allocation12 [shape = 'u8[32768]{0}', space=vmem, size = 0x8000, scoped, tag = 'input window, operand 4, single buffered']
    #allocation13 [shape = 'u8[32768]{0}', space=vmem, size = 0x8000, scoped, tag = 'output window, operand 0']
    %10 = vsyncpa [#allocation5], 0
    %s11 = scalar_lea.sflag [#allocation5], 1
    %12 = vsyncpa %s11, 0
    %13 = vsyncpa [#allocation8], 0
    %14 = vsyncpa [#allocation11], 0
    %15 = vsyncpa [#allocation6], 0
    %s16 = scalar_lea.sflag [#allocation6], 1
    %17 = vsyncpa %s16, 0
    loop: start=0, step=1, limit=6
    $region2: #{tpu_custom_call.1} parent=1 // loop_pre_header
      _
    $region3: #{tpu_custom_call.1} parent=1 // loop_header
      %s19 = sphi 0, %s23
      %p20 = scmp.ge.s32.totalorder %s19, 6
      %s26 = sphi 0, %s38
      %s27 = sphi 0, %s34
      %s28 = sphi 0, %s26
      %s29 = sphi 0, %s27
      %s30 = sphi 0, %s28
      %s31 = sphi 0, %s29
      %s41 = sphi 0, %s43
      %s44 = sphi 0, %s41
      %s45 = sphi 0, %s44
      %s61 = sphi 0, %s45
      %s65 = sphi 0, %s65
      %s67 = sphi 0, %s65
      %s68 = sphi 0, %s67
      %s82 = sphi 0, %s68
      %s86 = sphi 0, %s86
      %s88 = sphi 0, %s86
      %s89 = sphi 0, %s88
      %s103 = sphi 0, %s89
      %s107 = sphi 0, %s107
      %s109 = sphi 0, %s107
      %s110 = sphi 0, %s109
      %s124 = sphi 0, %s110
      %s128 = sphi 0, %s128
      %s130 = sphi 0, %s128
      %s131 = sphi 0, %s130
      %s145 = sphi 0, %s131
      %s153 = sphi 0, %s155
      %s156 = sphi 0, %s153
      %s157 = sphi 0, %s156
      %s173 = sphi 0, %s157
    $region4: #{tpu_custom_call.1} parent=1 // loop_header_branch
      %22 = sbr.rel (%p20) target = $region8
    $region5: #{tpu_custom_call.1} parent=1 // loop_body
      %s24 = ssub.s32 %s19, 1
      %s25 = ssub.s32 %s19, 2
      %s32 = sadd.s32 1, %s27
      %p33 = scmp.ge.s32.totalorder %s32, 2
      %s34 = scalar_select %p33, 0, %s32
      %s35 = sadd.s32 1, %s26
      %s36 = scalar_select %p33, %s35, %s26
      %p37 = scmp.ge.s32.totalorder %s36, 2
      %s38 = scalar_select %p37, 0, %s36
      %s39 = ssub.s32 %s26, %s38
      %p40 = scmp.eq.s32.totalorder %s39, 0
      %s42 = sadd.s32 %s41, 1
      %s43 = scalar_select %p40, %s41, %s42
      %p46 = pneg %p40
      %p47 = scmp.eq.s32.totalorder %s19, 3
      %p48 = por %p46, %p47
      %p49 = scmp.ne.s32.totalorder %s41, %s44
      %p50 = scmp.eq.s32.totalorder %s19, 0
      %p51 = por %p49, %p50
      %p52 = scmp.ne.s32.totalorder %s41, %s44
      %p53 = scmp.eq.s32.totalorder %s24, 3
      %p54 = por %p52, %p53
      %p55 = scmp.ne.s32.totalorder %s44, %s45
      %p56 = scmp.eq.s32.totalorder %s24, 0
      %p57 = por %p55, %p56
      %p58 = scmp.ne.s32.totalorder %s44, %s45
      %p59 = scmp.eq.s32.totalorder %s25, 3
      %p60 = por %p58, %p59
      %p62 = scmp.ne.s32.totalorder %s45, %s61
      %p63 = scmp.eq.s32.totalorder %s25, 0
      %p64 = por %p62, %p63
      %s66 = sadd.s32 %s65, 1
      %p69 = scmp.eq.s32.totalorder %s19, 3
      %p70 = scmp.ne.s32.totalorder %s65, %s67
      %p71 = scmp.eq.s32.totalorder %s19, 0
      %p72 = por %p70, %p71
      %p73 = scmp.ne.s32.totalorder %s65, %s67
      %p74 = scmp.eq.s32.totalorder %s24, 3
      %p75 = por %p73, %p74
      %p76 = scmp.ne.s32.totalorder %s67, %s68
      %p77 = scmp.eq.s32.totalorder %s24, 0
      %p78 = por %p76, %p77
      %p79 = scmp.ne.s32.totalorder %s67, %s68
      %p80 = scmp.eq.s32.totalorder %s25, 3
      %p81 = por %p79, %p80
      %p83 = scmp.ne.s32.totalorder %s68, %s82
      %p84 = scmp.eq.s32.totalorder %s25, 0
      %p85 = por %p83, %p84
      %s87 = sadd.s32 %s86, 1
      %p90 = scmp.eq.s32.totalorder %s19, 3
      %p91 = scmp.ne.s32.totalorder %s86, %s88
      %p92 = scmp.eq.s32.totalorder %s19, 0
      %p93 = por %p91, %p92
      %p94 = scmp.ne.s32.totalorder %s86, %s88
      %p95 = scmp.eq.s32.totalorder %s24, 3
      %p96 = por %p94, %p95
      %p97 = scmp.ne.s32.totalorder %s88, %s89
      %p98 = scmp.eq.s32.totalorder %s24, 0
      %p99 = por %p97, %p98
      %p100 = scmp.ne.s32.totalorder %s88, %s89
      %p101 = scmp.eq.s32.totalorder %s25, 3
      %p102 = por %p100, %p101
      %p104 = scmp.ne.s32.totalorder %s89, %s103
      %p105 = scmp.eq.s32.totalorder %s25, 0
      %p106 = por %p104, %p105
      %s108 = sadd.s32 %s107, 1
      %p111 = scmp.eq.s32.totalorder %s19, 3
      %p112 = scmp.ne.s32.totalorder %s107, %s109
      %p113 = scmp.eq.s32.totalorder %s19, 0
      %p114 = por %p112, %p113
      %p115 = scmp.ne.s32.totalorder %s107, %s109
      %p116 = scmp.eq.s32.totalorder %s24, 3
      %p117 = por %p115, %p116
      %p118 = scmp.ne.s32.totalorder %s109, %s110
      %p119 = scmp.eq.s32.totalorder %s24, 0
      %p120 = por %p118, %p119
      %p121 = scmp.ne.s32.totalorder %s109, %s110
      %p122 = scmp.eq.s32.totalorder %s25, 3
      %p123 = por %p121, %p122
      %p125 = scmp.ne.s32.totalorder %s110, %s124
      %p126 = scmp.eq.s32.totalorder %s25, 0
      %p127 = por %p125, %p126
      %s129 = sadd.s32 %s128, 1
      %p132 = scmp.eq.s32.totalorder %s19, 3
      %p133 = scmp.ne.s32.totalorder %s128, %s130
      %p134 = scmp.eq.s32.totalorder %s19, 0
      %p135 = por %p133, %p134
      %p136 = scmp.ne.s32.totalorder %s128, %s130
      %p137 = scmp.eq.s32.totalorder %s24, 3
      %p138 = por %p136, %p137
      %p139 = scmp.ne.s32.totalorder %s130, %s131
      %p140 = scmp.eq.s32.totalorder %s24, 0
      %p141 = por %p139, %p140
      %p142 = scmp.ne.s32.totalorder %s130, %s131
      %p143 = scmp.eq.s32.totalorder %s25, 3
      %p144 = por %p142, %p143
      %p146 = scmp.ne.s32.totalorder %s131, %s145
      %p147 = scmp.eq.s32.totalorder %s25, 0
      %p148 = por %p146, %p147
      %s149 = ssub.s32 %s26, %s38
      %s150 = ssub.s32 %s27, %s34
      %s151 = sor.u32 %s149, %s150
      %p152 = scmp.eq.s32.totalorder %s151, 0
      %s154 = sadd.s32 %s153, 1
      %s155 = scalar_select %p152, %s153, %s154
      %p158 = pneg %p152
      %p159 = scmp.eq.s32.totalorder %s19, 3
      %p160 = por %p158, %p159
      %p161 = scmp.ne.s32.totalorder %s153, %s156
      %p162 = scmp.eq.s32.totalorder %s19, 0
      %p163 = por %p161, %p162
      %p164 = scmp.ne.s32.totalorder %s153, %s156
      %p165 = scmp.eq.s32.totalorder %s24, 3
      %p166 = por %p164, %p165
      %p167 = scmp.ne.s32.totalorder %s156, %s157
      %p168 = scmp.eq.s32.totalorder %s24, 0
      %p169 = por %p167, %p168
      %p170 = scmp.ne.s32.totalorder %s156, %s157
      %p171 = scmp.eq.s32.totalorder %s25, 3
      %p172 = por %p170, %p171
      %p174 = scmp.ne.s32.totalorder %s157, %s173
      %p175 = scmp.eq.s32.totalorder %s25, 0
      %p176 = por %p174, %p175
      %p177 = scmp.le.s32.totalorder 1, %s19
      %p178 = scmp.lt.s32.totalorder %s19, 5
      %p179 = pnand %p177, %p178
      %p180 = pneg %p179
      // Predicated region
      $region9: #{tpu_custom_call.1} parent=5 // pred_check
        _
      $region10: #{tpu_custom_call.1} parent=5 // pred_check_branch
        %182 = sbr.rel (%p179) target = $region12
      $region11: #{tpu_custom_call.1} parent=5 // pred_region
        %s183 = ssub.s32 %s19, 1
        // Predicated region
        $region13: #{tpu_custom_call.1} parent=11 // pred_check
          %p184 = pneg %p78
        $region14: #{tpu_custom_call.1} parent=11 // pred_check_branch
          %186 = sbr.rel (%p184) target = $region16
        $region15: #{tpu_custom_call.1} parent=11 // pred_region
          %s188 = ssub.s32 1024, 1024
          %189 = vsyncadd [#allocation8], %s188
          %s190 = sshll.u32 [#allocation7], 4
          %s191 = int_to_ptr.vmem [resolvable:$true] %s190
          %196 = dma.hbm_to_vmem [thread:$0]  %s1, 1024, %s191, [#allocation8], 64, 64, 4
        $region16: #{tpu_custom_call.1} parent=11 // pred_fallthru
          _
        // Predicated region
        $region17: #{tpu_custom_call.1} parent=11 // pred_check
          %p197 = pneg %p99
        $region18: #{tpu_custom_call.1} parent=11 // pred_check_branch
          %199 = sbr.rel (%p197) target = $region20
        $region19: #{tpu_custom_call.1} parent=11 // pred_region
          %s201 = ssub.s32 9216, 9216
          %202 = vsyncadd [#allocation8], %s201
          %s203 = sshll.u32 [#allocation9], 4
          %s204 = int_to_ptr.vmem [resolvable:$true] %s203
          %209 = dma.hbm_to_vmem [thread:$0]  %s2, 9216, %s204, [#allocation8], 64, 64, 4
        $region20: #{tpu_custom_call.1} parent=11 // pred_fallthru
          _
        // Predicated region
        $region21: #{tpu_custom_call.1} parent=11 // pred_check
          %p210 = pneg %p120
        $region22: #{tpu_custom_call.1} parent=11 // pred_check_branch
          %212 = sbr.rel (%p210) target = $region24
        $region23: #{tpu_custom_call.1} parent=11 // pred_region
          %s214 = ssub.s32 1024, 1024
          %215 = vsyncadd [#allocation11], %s214
          %s216 = sshll.u32 [#allocation10], 4
          %s217 = int_to_ptr.vmem [resolvable:$true] %s216
          %222 = dma.hbm_to_vmem [thread:$0]  %s3, 1024, %s217, [#allocation11], 64, 64, 4
        $region24: #{tpu_custom_call.1} parent=11 // pred_fallthru
          _
        // Predicated region
        $region25: #{tpu_custom_call.1} parent=11 // pred_check
          %p223 = pneg %p141
        $region26: #{tpu_custom_call.1} parent=11 // pred_check_branch
          %225 = sbr.rel (%p223) target = $region28
        $region27: #{tpu_custom_call.1} parent=11 // pred_region
          %s227 = ssub.s32 1024, 1024
          %228 = vsyncadd [#allocation11], %s227
          %s229 = sshll.u32 [#allocation12], 4
          %s230 = int_to_ptr.vmem [resolvable:$true] %s229
          %235 = dma.hbm_to_vmem [thread:$0]  %s4, 1024, %s230, [#allocation11], 64, 64, 4
        $region28: #{tpu_custom_call.1} parent=11 // pred_fallthru
          _
      $region12: #{tpu_custom_call.1} parent=5 // pred_fallthru
        _
      %p236 = scmp.lt.s32.totalorder %s19, 4
      // Predicated region
      $region29: #{tpu_custom_call.1} parent=5 // pred_check
        %p237 = pneg %p236
      $region30: #{tpu_custom_call.1} parent=5 // pred_check_branch
        %239 = sbr.rel (%p237) target = $region32
      $region31: #{tpu_custom_call.1} parent=5 // pred_region
        // Predicated region
        $region33: #{tpu_custom_call.1} parent=31 // pred_check
          %p240 = pneg %p51
        $region34: #{tpu_custom_call.1} parent=31 // pred_check_branch
          %242 = sbr.rel (%p240) target = $region36
        $region35: #{tpu_custom_call.1} parent=31 // pred_region
          %s243 = sand.u32 %s41, 1
          %s244 = scalar_lea.sflag [#allocation5], %s243
          %s245 = sand.u32 %s41, 1
          %s246 = smul.addr %s245, 448
          %s247 = scalar_lea.vmem [#allocation4], %s246
          %s249 = ssub.s32 7168, 7168
          %250 = vsyncadd %s244, %s249
          %s251 = smul.addr %s26, 56
          %s252 = smul.addr %s251, 128
          %s253 = scalar_lea.hbm %s0, %s252
          %s254 = sshll.u32 %s247, 4
          %s255 = int_to_ptr.vmem [resolvable:$true] %s254
          %260 = dma.hbm_to_vmem [thread:$0]  %s253, 7168, %s255, %s244, 128, 128, 8
        $region36: #{tpu_custom_call.1} parent=31 // pred_fallthru
          _
      $region32: #{tpu_custom_call.1} parent=5 // pred_fallthru
        _
      %p261 = scmp.le.s32.totalorder 1, %s19
      %p262 = scmp.lt.s32.totalorder %s19, 5
      %p263 = pnand %p261, %p262
      %p264 = pneg %p263
      // Predicated region
      $region37: #{tpu_custom_call.1} parent=5 // pred_check
        _
      $region38: #{tpu_custom_call.1} parent=5 // pred_check_branch
        %266 = sbr.rel (%p263) target = $region40
      $region39: #{tpu_custom_call.1} parent=5 // pred_region
        %s267 = ssub.s32 %s19, 1
        %s268 = sand.u32 %s44, 1
        %s269 = scalar_lea.sflag [#allocation5], %s268
        %s270 = sand.u32 %s44, 1
        %s271 = smul.addr %s270, 448
        %s272 = scalar_lea.vmem [#allocation4], %s271
        // Predicated region
        $region41: #{tpu_custom_call.1} parent=39 // pred_check
          %p273 = pneg %p57
        $region42: #{tpu_custom_call.1} parent=39 // pred_check_branch
          %275 = sbr.rel (%p273) target = $region44
        $region43: #{tpu_custom_call.1} parent=39 // pred_region
          %276 = dma.done %s269, 7168
        $region44: #{tpu_custom_call.1} parent=39 // pred_fallthru
          _
        // Predicated region
        $region45: #{tpu_custom_call.1} parent=39 // pred_check
          %p277 = pneg %p78
        $region46: #{tpu_custom_call.1} parent=39 // pred_check_branch
          %279 = sbr.rel (%p277) target = $region48
        $region47: #{tpu_custom_call.1} parent=39 // pred_region
          %280 = dma.done [#allocation8], 1024
        $region48: #{tpu_custom_call.1} parent=39 // pred_fallthru
          _
        // Predicated region
        $region49: #{tpu_custom_call.1} parent=39 // pred_check
          %p281 = pneg %p99
        $region50: #{tpu_custom_call.1} parent=39 // pred_check_branch
          %283 = sbr.rel (%p281) target = $region52
        $region51: #{tpu_custom_call.1} parent=39 // pred_region
          %284 = dma.done [#allocation8], 9216
        $region52: #{tpu_custom_call.1} parent=39 // pred_fallthru
          _
        // Predicated region
        $region53: #{tpu_custom_call.1} parent=39 // pred_check
          %p285 = pneg %p120
        $region54: #{tpu_custom_call.1} parent=39 // pred_check_branch
          %287 = sbr.rel (%p285) target = $region56
        $region55: #{tpu_custom_call.1} parent=39 // pred_region
          %288 = dma.done [#allocation11], 1024
        $region56: #{tpu_custom_call.1} parent=39 // pred_fallthru
          _
        // Predicated region
        $region57: #{tpu_custom_call.1} parent=39 // pred_check
          %p289 = pneg %p141
        $region58: #{tpu_custom_call.1} parent=39 // pred_check_branch
          %291 = sbr.rel (%p289) target = $region60
        $region59: #{tpu_custom_call.1} parent=39 // pred_region
          %292 = dma.done [#allocation11], 1024
        $region60: #{tpu_custom_call.1} parent=39 // pred_fallthru
          _
        %s293 = sand.u32 %s44, 1
        %s294 = scalar_lea.sflag [#allocation5], %s293
        %s295 = sand.u32 %s44, 1
        %s296 = smul.addr %s295, 448
        %s297 = scalar_lea.vmem [#allocation4], %s296
        %p298 = pneg %p57
        %p299 = pneg %p54
        %p300 = pneg %p78
        %p301 = pneg %p75
        %p302 = pneg %p99
        %p303 = pneg %p96
        %p304 = pneg %p120
        %p305 = pneg %p117
        %p306 = pneg %p141
        %p307 = pneg %p138
        %p308 = pneg %p169
        %p309 = pneg %p166
        %s310 = sand.u32 %s156, 1
        %s311 = scalar_lea.sflag [#allocation6], %s310
        %s312 = sand.u32 %s156, 1
        %s313 = smul.addr %s312, 32
        %s314 = scalar_lea.vmem [#allocation13], %s313
        %s315 = smul.u32 4, %s29
        %s317 = smul.u32 %s29, 192
        %s318 = scalar_lea.vmem %s272, %s317 [#allocation4]
        %v319 = vld [vmem:[%s318] sm:$0xff]
        %v320 = vld [vmem:[%s318 + $0x8] sm:$0xff]
        %v321 = vld [vmem:[%s318 + $0x10] sm:$0xff]
        %v322 = vld [vmem:[%s318 + $0x18] sm:$0xff]
        %v323 = vld [vmem:[%s318 + $0x20] sm:$0xff]
        %v324 = vld [vmem:[%s318 + $0x28] sm:$0xff]
        %v325 = vld [vmem:[%s318 + $0x30] sm:$0xff]
        %v326 = vld [vmem:[%s318 + $0x38] sm:$0xff]
        %v327 = vld [vmem:[%s318 + $0x40] sm:$0xff]
        %v328 = vld [vmem:[%s318 + $0x48] sm:$0xff]
        %v329 = vld [vmem:[%s318 + $0x50] sm:$0xff]
        %v330 = vld [vmem:[%s318 + $0x58] sm:$0xff]
        %v331 = vld [vmem:[%s318 + $0x60] sm:$0xff]
        %v332 = vld [vmem:[%s318 + $0x68] sm:$0xff]
        %v333 = vld [vmem:[%s318 + $0x70] sm:$0xff]
        %v334 = vld [vmem:[%s318 + $0x78] sm:$0xff]
        %v335 = vld [vmem:[%s318 + $0x80] sm:$0xff]
        %v336 = vld [vmem:[%s318 + $0x88] sm:$0xff]
        %v337 = vld [vmem:[%s318 + $0x90] sm:$0xff]
        %v338 = vld [vmem:[%s318 + $0x98] sm:$0xff]
        %v339 = vld [vmem:[%s318 + $0xa0] sm:$0xff]
        %v340 = vld [vmem:[%s318 + $0xa8] sm:$0xff]
        %v341 = vld [vmem:[%s318 + $0xb0] sm:$0xff]
        %v342 = vld [vmem:[%s318 + $0xb8] sm:$0xff]
        %v343 = vld [vmem:[%s318 + $0xc0] sm:$0xff]
        %v344 = vld [vmem:[%s318 + $0xc8] sm:$0xff]
        %v345 = vld [vmem:[%s318 + $0xd0] sm:$0xff]
        %v346 = vld [vmem:[%s318 + $0xd8] sm:$0xff]
        %v347 = vld [vmem:[%s318 + $0xe0] sm:$0xff]
        %v348 = vld [vmem:[%s318 + $0xe8] sm:$0xff]
        %v349 = vld [vmem:[%s318 + $0xf0] sm:$0xff]
        %v350 = vld [vmem:[%s318 + $0xf8] sm:$0xff]
        %351 = vst [vmem:[#allocation3] sm:$0xff] %v319
        %352 = vst [vmem:[#allocation3 + $0x8] sm:$0xff] %v320
        %353 = vst [vmem:[#allocation3 + $0x10] sm:$0xff] %v321
        %354 = vst [vmem:[#allocation3 + $0x18] sm:$0xff] %v322
        %355 = vst [vmem:[#allocation3 + $0x20] sm:$0xff] %v323
        %356 = vst [vmem:[#allocation3 + $0x28] sm:$0xff] %v324
        %357 = vst [vmem:[#allocation3 + $0x30] sm:$0xff] %v325
        %358 = vst [vmem:[#allocation3 + $0x38] sm:$0xff] %v326
        %359 = vst [vmem:[#allocation3 + $0x40] sm:$0xff] %v327
        %360 = vst [vmem:[#allocation3 + $0x48] sm:$0xff] %v328
        %361 = vst [vmem:[#allocation3 + $0x50] sm:$0xff] %v329
        %362 = vst [vmem:[#allocation3 + $0x58] sm:$0xff] %v330
        %363 = vst [vmem:[#allocation3 + $0x60] sm:$0xff] %v331
        %364 = vst [vmem:[#allocation3 + $0x68] sm:$0xff] %v332
        %365 = vst [vmem:[#allocation3 + $0x70] sm:$0xff] %v333
        %366 = vst [vmem:[#allocation3 + $0x78] sm:$0xff] %v334
        %367 = vst [vmem:[#allocation3 + $0x80] sm:$0xff] %v335
        %368 = vst [vmem:[#allocation3 + $0x88] sm:$0xff] %v336
        %369 = vst [vmem:[#allocation3 + $0x90] sm:$0xff] %v337
        %370 = vst [vmem:[#allocation3 + $0x98] sm:$0xff] %v338
        %371 = vst [vmem:[#allocation3 + $0xa0] sm:$0xff] %v339
        %372 = vst [vmem:[#allocation3 + $0xa8] sm:$0xff] %v340
        %373 = vst [vmem:[#allocation3 + $0xb0] sm:$0xff] %v341
        %374 = vst [vmem:[#allocation3 + $0xb8] sm:$0xff] %v342
        %375 = vst [vmem:[#allocation3 + $0xc0] sm:$0xff] %v343
        %376 = vst [vmem:[#allocation3 + $0xc8] sm:$0xff] %v344
        %377 = vst [vmem:[#allocation3 + $0xd0] sm:$0xff] %v345
        %378 = vst [vmem:[#allocation3 + $0xd8] sm:$0xff] %v346
        %379 = vst [vmem:[#allocation3 + $0xe0] sm:$0xff] %v347
        %380 = vst [vmem:[#allocation3 + $0xe8] sm:$0xff] %v348
        %381 = vst [vmem:[#allocation3 + $0xf0] sm:$0xff] %v349
        %382 = vst [vmem:[#allocation3 + $0xf8] sm:$0xff] %v350
        %v383 = vld [vmem:[#allocation3] sm:$0xff]
        %v384 = vld [vmem:[#allocation3 + $0x8] sm:$0xff]
        %v385 = vld [vmem:[#allocation3 + $0x10] sm:$0xff]
        %v386 = vld [vmem:[#allocation3 + $0x18] sm:$0xff]
        %v387 = vld [vmem:[#allocation3 + $0x20] sm:$0xff]
        %v388 = vld [vmem:[#allocation3 + $0x28] sm:$0xff]
        %v389 = vld [vmem:[#allocation3 + $0x30] sm:$0xff]
        %v390 = vld [vmem:[#allocation3 + $0x38] sm:$0xff]
        %v391 = vld [vmem:[#allocation3 + $0x40] sm:$0xff]
        %v392 = vld [vmem:[#allocation3 + $0x48] sm:$0xff]
        %v393 = vld [vmem:[#allocation3 + $0x50] sm:$0xff]
        %v394 = vld [vmem:[#allocation3 + $0x58] sm:$0xff]
        %v395 = vld [vmem:[#allocation3 + $0x60] sm:$0xff]
        %v396 = vld [vmem:[#allocation3 + $0x68] sm:$0xff]
        %v397 = vld [vmem:[#allocation3 + $0x70] sm:$0xff]
        %v398 = vld [vmem:[#allocation3 + $0x78] sm:$0xff]
        %v399 = vld [vmem:[#allocation3 + $0x80] sm:$0xff]
        %v400 = vld [vmem:[#allocation3 + $0x88] sm:$0xff]
        %v401 = vld [vmem:[#allocation3 + $0x90] sm:$0xff]
        %v402 = vld [vmem:[#allocation3 + $0x98] sm:$0xff]
        %v403 = vld [vmem:[#allocation3 + $0xa0] sm:$0xff]
        %v404 = vld [vmem:[#allocation3 + $0xa8] sm:$0xff]
        %v405 = vld [vmem:[#allocation3 + $0xb0] sm:$0xff]
        %v406 = vld [vmem:[#allocation3 + $0xb8] sm:$0xff]
        %v407 = vld [vmem:[#allocation3 + $0xc0] sm:$0xff]
        %v408 = vld [vmem:[#allocation3 + $0xc8] sm:$0xff]
        %v409 = vld [vmem:[#allocation3 + $0xd0] sm:$0xff]
        %v410 = vld [vmem:[#allocation3 + $0xd8] sm:$0xff]
        %v411 = vld [vmem:[#allocation3 + $0xe0] sm:$0xff]
        %v412 = vld [vmem:[#allocation3 + $0xe8] sm:$0xff]
        %v413 = vld [vmem:[#allocation3 + $0xf0] sm:$0xff]
        %v414 = vld [vmem:[#allocation3 + $0xf8] sm:$0xff]
        %v415 = vpack.c.bf16 %v384, %v383
        %v416 = vpack.c.bf16 %v386, %v385
        %v417 = vpack.c.bf16 %v388, %v387
        %v418 = vpack.c.bf16 %v390, %v389
        %v419 = vpack.c.bf16 %v392, %v391
        %v420 = vpack.c.bf16 %v394, %v393
        %v421 = vpack.c.bf16 %v396, %v395
        %v422 = vpack.c.bf16 %v398, %v397
        %v423 = vpack.c.bf16 %v400, %v399
        %v424 = vpack.c.bf16 %v402, %v401
        %v425 = vpack.c.bf16 %v404, %v403
        %v426 = vpack.c.bf16 %v406, %v405
        %v427 = vpack.c.bf16 %v408, %v407
        %v428 = vpack.c.bf16 %v410, %v409
        %v429 = vpack.c.bf16 %v412, %v411
        %v430 = vpack.c.bf16 %v414, %v413
        %v431 = vld [vmem:[#allocation7] sm:$0xf]
        %v432 = vld [vmem:[#allocation7 + $0x4] sm:$0xf]
        %v433 = vld [vmem:[#allocation7 + $0x8] sm:$0xf]
        %v434 = vld [vmem:[#allocation7 + $0xc] sm:$0xf]
        %v435 = vld [vmem:[#allocation7 + $0x10] sm:$0xf]
        %v436 = vld [vmem:[#allocation7 + $0x14] sm:$0xf]
        %v437 = vld [vmem:[#allocation7 + $0x18] sm:$0xf]
        %v438 = vld [vmem:[#allocation7 + $0x1c] sm:$0xf]
        %v439 = vld [vmem:[#allocation7 + $0x20] sm:$0xf]
        %v440 = vld [vmem:[#allocation7 + $0x24] sm:$0xf]
        %v441 = vld [vmem:[#allocation7 + $0x28] sm:$0xf]
        %v442 = vld [vmem:[#allocation7 + $0x2c] sm:$0xf]
        %v443 = vld [vmem:[#allocation7 + $0x30] sm:$0xf]
        %v444 = vld [vmem:[#allocation7 + $0x34] sm:$0xf]
        %v445 = vld [vmem:[#allocation7 + $0x38] sm:$0xf]
        %v446 = vld [vmem:[#allocation7 + $0x3c] sm:$0xf]
        %v463 = vunpack.c.l.b16 %v431
        %v464 = vunpack.c.l.b16 %v432
        %v465 = vunpack.c.l.b16 %v433
        %v466 = vunpack.c.l.b16 %v434
        %v467 = vunpack.c.l.b16 %v435
        %v468 = vunpack.c.l.b16 %v436
        %v469 = vunpack.c.l.b16 %v437
        %v470 = vunpack.c.l.b16 %v438
        %v471 = vunpack.c.l.b16 %v439
        %v472 = vunpack.c.l.b16 %v440
        %v473 = vunpack.c.l.b16 %v441
        %v474 = vunpack.c.l.b16 %v442
        %v475 = vunpack.c.l.b16 %v443
        %v476 = vunpack.c.l.b16 %v444
        %v477 = vunpack.c.l.b16 %v445
        %v478 = vunpack.c.l.b16 %v446
        %v479 = vpack.c.b16 %v464, %v463
        %v480 = vpack.c.b16 %v466, %v465
        %v481 = vpack.c.b16 %v468, %v467
        %v482 = vpack.c.b16 %v470, %v469
        %v483 = vpack.c.b16 %v472, %v471
        %v484 = vpack.c.b16 %v474, %v473
        %v485 = vpack.c.b16 %v476, %v475
        %v486 = vpack.c.b16 %v478, %v477
        %495 = vmatprep.subr.bf16.mxu0 0
        %496 = vmatpush1.bf16.msra.mxu0 %v479
        %497 = vmatprep.subr.bf16.mxu0 0
        %498 = vmatpush1.bf16.msra.mxu0 %v480
        %499 = vmatprep.subr.bf16.mxu0 0
        %500 = vmatpush1.bf16.msra.mxu0 %v481
        %501 = vmatprep.subr.bf16.mxu0 0
        %502 = vmatpush1.bf16.msra.mxu0 %v482
        %503 = vmatprep.subr.bf16.mxu0 0
        %504 = vmatpush1.bf16.msra.mxu0 %v483
        %505 = vmatprep.subr.bf16.mxu0 0
        %506 = vmatpush1.bf16.msra.mxu0 %v484
        %507 = vmatprep.subr.bf16.mxu0 0
        %508 = vmatpush1.bf16.msra.mxu0 %v485
        %509 = vmatprep.subr.bf16.mxu0 0
        %510 = vmatpush1.bf16.msra.mxu0 %v486
        %511 = vmatprep.subr.bf16.mxu0 0
        %512 = vmatpush1.bf16.msra.mxu0 0
        %513 = vmatprep.subr.bf16.mxu0 0
        %514 = vmatpush1.bf16.msra.mxu0 0
        %515 = vmatprep.subr.bf16.mxu0 0
        %516 = vmatpush1.bf16.msra.mxu0 0
        %517 = vmatprep.subr.bf16.mxu0 0
        %518 = vmatpush1.bf16.msra.mxu0 0
        %519 = vmatprep.subr.bf16.mxu0 0
        %520 = vmatpush1.bf16.msra.mxu0 0
        %521 = vmatprep.subr.bf16.mxu0 0
        %522 = vmatpush1.bf16.msra.mxu0 0
        %523 = vmatprep.subr.bf16.mxu0 0
        %524 = vmatpush1.bf16.msra.mxu0 0
        %525 = vmatprep.subr.bf16.mxu0 0
        %526 = vmatpush1.bf16.msra.mxu0 0
        %527 = vmatprep.mubr.bf16.mxu0 0
        %528 = vmatmul.mubr.bf16.gmra.mrb[0].mxu0 %v415
        %v529 = vpop.f32.mrb[0].mxu0
        %v530 = vadd.f32 0.0, %v529
        %v531 = vpop.f32.mrb[0].mxu0
        %v532 = vpop.f32.mrb[0].mxu0
        %v533 = vadd.f32 0.0, %v532
        %v534 = vpop.f32.mrb[0].mxu0
        %535 = vmatprep.mubr.bf16.mxu0 0
        %536 = vmatmul.mubr.bf16.gmra.mrb[0].mxu0 %v416
        %v537 = vpop.f32.mrb[0].mxu0
        %v538 = vadd.f32 0.0, %v537
        %v539 = vpop.f32.mrb[0].mxu0
        %v540 = vpop.f32.mrb[0].mxu0
        %v541 = vadd.f32 0.0, %v540
        %v542 = vpop.f32.mrb[0].mxu0
        %543 = vmatprep.mubr.bf16.mxu0 0
        %544 = vmatmul.mubr.bf16.gmra.mrb[0].mxu0 %v417
        %v545 = vpop.f32.mrb[0].mxu0
        %v546 = vadd.f32 0.0, %v545
        %v547 = vpop.f32.mrb[0].mxu0
        %v548 = vpop.f32.mrb[0].mxu0
        %v549 = vadd.f32 0.0, %v548
        %v550 = vpop.f32.mrb[0].mxu0
        %551 = vmatprep.mubr.bf16.mxu0 0
        %552 = vmatmul.mubr.bf16.gmra.mrb[0].mxu0 %v418
        %v553 = vpop.f32.mrb[0].mxu0
        %v554 = vadd.f32 0.0, %v553
        %v555 = vpop.f32.mrb[0].mxu0
        %v556 = vpop.f32.mrb[0].mxu0
        %v557 = vadd.f32 0.0, %v556
        %v558 = vpop.f32.mrb[0].mxu0
        %559 = vmatprep.mubr.bf16.mxu0 0
        %560 = vmatmul.mubr.bf16.gmra.mrb[0].mxu0 %v419
        %v561 = vpop.f32.mrb[0].mxu0
        %v562 = vadd.f32 0.0, %v561
        %v563 = vpop.f32.mrb[0].mxu0
        %v564 = vpop.f32.mrb[0].mxu0
        %v565 = vadd.f32 0.0, %v564
        %v566 = vpop.f32.mrb[0].mxu0
        %567 = vmatprep.mubr.bf16.mxu0 0
        %568 = vmatmul.mubr.bf16.gmra.mrb[0].mxu0 %v420
        %v569 = vpop.f32.mrb[0].mxu0
        %v570 = vadd.f32 0.0, %v569
        %v571 = vpop.f32.mrb[0].mxu0
        %v572 = vpop.f32.mrb[0].mxu0
        %v573 = vadd.f32 0.0, %v572
        %v574 = vpop.f32.mrb[0].mxu0
        %575 = vmatprep.mubr.bf16.mxu0 0
        %576 = vmatmul.mubr.bf16.gmra.mrb[0].mxu0 %v421
        %v577 = vpop.f32.mrb[0].mxu0
        %v578 = vadd.f32 0.0, %v577
        %v579 = vpop.f32.mrb[0].mxu0
        %v580 = vpop.f32.mrb[0].mxu0
        %v581 = vadd.f32 0.0, %v580
        %v582 = vpop.f32.mrb[0].mxu0
        %583 = vmatprep.mubr.bf16.mxu0 0
        %584 = vmatmul.mubr.bf16.gmra.mrb[0].mxu0 %v422
        %v585 = vpop.f32.mrb[0].mxu0
        %v586 = vadd.f32 0.0, %v585
        %v587 = vpop.f32.mrb[0].mxu0
        %v588 = vpop.f32.mrb[0].mxu0
        %v589 = vadd.f32 0.0, %v588
        %v590 = vpop.f32.mrb[0].mxu0
        %591 = vmatprep.mubr.bf16.mxu0 0
        %592 = vmatmul.mubr.bf16.gmra.mrb[0].mxu0 %v423
        %v593 = vpop.f32.mrb[0].mxu0
        %v594 = vadd.f32 0.0, %v593
        %v595 = vpop.f32.mrb[0].mxu0
        %v596 = vpop.f32.mrb[0].mxu0
        %v597 = vadd.f32 0.0, %v596
        %v598 = vpop.f32.mrb[0].mxu0
        %599 = vmatprep.mubr.bf16.mxu0 0
        %600 = vmatmul.mubr.bf16.gmra.mrb[0].mxu0 %v424
        %v601 = vpop.f32.mrb[0].mxu0
        %v602 = vadd.f32 0.0, %v601
        %v603 = vpop.f32.mrb[0].mxu0
        %v604 = vpop.f32.mrb[0].mxu0
        %v605 = vadd.f32 0.0, %v604
        %v606 = vpop.f32.mrb[0].mxu0
        %607 = vmatprep.mubr.bf16.mxu0 0
        %608 = vmatmul.mubr.bf16.gmra.mrb[0].mxu0 %v425
        %v609 = vpop.f32.mrb[0].mxu0
        %v610 = vadd.f32 0.0, %v609
        %v611 = vpop.f32.mrb[0].mxu0
        %v612 = vpop.f32.mrb[0].mxu0
        %v613 = vadd.f32 0.0, %v612
        %v614 = vpop.f32.mrb[0].mxu0
        %615 = vmatprep.mubr.bf16.mxu0 0
        %616 = vmatmul.mubr.bf16.gmra.mrb[0].mxu0 %v426
        %v617 = vpop.f32.mrb[0].mxu0
        %v618 = vadd.f32 0.0, %v617
        %v619 = vpop.f32.mrb[0].mxu0
        %v620 = vpop.f32.mrb[0].mxu0
        %v621 = vadd.f32 0.0, %v620
        %v622 = vpop.f32.mrb[0].mxu0
        %623 = vmatprep.mubr.bf16.mxu0 0
        %624 = vmatmul.mubr.bf16.gmra.mrb[0].mxu0 %v427
        %v625 = vpop.f32.mrb[0].mxu0
        %v626 = vadd.f32 0.0, %v625
        %v627 = vpop.f32.mrb[0].mxu0
        %v628 = vpop.f32.mrb[0].mxu0
        %v629 = vadd.f32 0.0, %v628
        %v630 = vpop.f32.mrb[0].mxu0
        %631 = vmatprep.mubr.bf16.mxu0 0
        %632 = vmatmul.mubr.bf16.gmra.mrb[0].mxu0 %v428
        %v633 = vpop.f32.mrb[0].mxu0
        %v634 = vadd.f32 0.0, %v633
        %v635 = vpop.f32.mrb[0].mxu0
        %v636 = vpop.f32.mrb[0].mxu0
        %v637 = vadd.f32 0.0, %v636
        %v638 = vpop.f32.mrb[0].mxu0
        %639 = vmatprep.mubr.bf16.mxu0 0
        %640 = vmatmul.mubr.bf16.gmra.mrb[0].mxu0 %v429
        %v641 = vpop.f32.mrb[0].mxu0
        %v642 = vadd.f32 0.0, %v641
        %v643 = vpop.f32.mrb[0].mxu0
        %v644 = vpop.f32.mrb[0].mxu0
        %v645 = vadd.f32 0.0, %v644
        %v646 = vpop.f32.mrb[0].mxu0
        %647 = vmatprep.mubr.bf16.mxu0 0
        %648 = vmatmul.mubr.bf16.gmra.mrb[0].mxu0 %v430
        %v649 = vpop.f32.mrb[0].mxu0
        %v650 = vadd.f32 0.0, %v649
        %v651 = vpop.f32.mrb[0].mxu0
        %v652 = vpop.f32.mrb[0].mxu0
        %v653 = vadd.f32 0.0, %v652
        %v654 = vpop.f32.mrb[0].mxu0
        %655 = vdwg.mxu0
        %v656 = vmax.f32 %v530, 0.0
        %v657 = vmax.f32 %v533, 0.0
        %v658 = vmax.f32 %v538, 0.0
        %v659 = vmax.f32 %v541, 0.0
        %v660 = vmax.f32 %v546, 0.0
        %v661 = vmax.f32 %v549, 0.0
        %v662 = vmax.f32 %v554, 0.0
        %v663 = vmax.f32 %v557, 0.0
        %v664 = vmax.f32 %v562, 0.0
        %v665 = vmax.f32 %v565, 0.0
        %v666 = vmax.f32 %v570, 0.0
        %v667 = vmax.f32 %v573, 0.0
        %v668 = vmax.f32 %v578, 0.0
        %v669 = vmax.f32 %v581, 0.0
        %v670 = vmax.f32 %v586, 0.0
        %v671 = vmax.f32 %v589, 0.0
        %v672 = vmax.f32 %v594, 0.0
        %v673 = vmax.f32 %v597, 0.0
        %v674 = vmax.f32 %v602, 0.0
        %v675 = vmax.f32 %v605, 0.0
        %v676 = vmax.f32 %v610, 0.0
        %v677 = vmax.f32 %v613, 0.0
        %v678 = vmax.f32 %v618, 0.0
        %v679 = vmax.f32 %v621, 0.0
        %v680 = vmax.f32 %v626, 0.0
        %v681 = vmax.f32 %v629, 0.0
        %v682 = vmax.f32 %v634, 0.0
        %v683 = vmax.f32 %v637, 0.0
        %v684 = vmax.f32 %v642, 0.0
        %v685 = vmax.f32 %v645, 0.0
        %v686 = vmax.f32 %v650, 0.0
        %v687 = vmax.f32 %v653, 0.0
        %688 = vst [vmem:[#allocation2] sm:$0xff] %v656
        %689 = vst [vmem:[#allocation2 + $0x8] sm:$0xff] %v657
        %690 = vst [vmem:[#allocation2 + $0x10] sm:$0xff] %v658
        %691 = vst [vmem:[#allocation2 + $0x18] sm:$0xff] %v659
        %692 = vst [vmem:[#allocation2 + $0x20] sm:$0xff] %v660
        %693 = vst [vmem:[#allocation2 + $0x28] sm:$0xff] %v661
        %694 = vst [vmem:[#allocation2 + $0x30] sm:$0xff] %v662
        %695 = vst [vmem:[#allocation2 + $0x38] sm:$0xff] %v663
        %696 = vst [vmem:[#allocation2 + $0x40] sm:$0xff] %v664
        %697 = vst [vmem:[#allocation2 + $0x48] sm:$0xff] %v665
        %698 = vst [vmem:[#allocation2 + $0x50] sm:$0xff] %v666
        %699 = vst [vmem:[#allocation2 + $0x58] sm:$0xff] %v667
        %700 = vst [vmem:[#allocation2 + $0x60] sm:$0xff] %v668
        %701 = vst [vmem:[#allocation2 + $0x68] sm:$0xff] %v669
        %702 = vst [vmem:[#allocation2 + $0x70] sm:$0xff] %v670
        %703 = vst [vmem:[#allocation2 + $0x78] sm:$0xff] %v671
        %704 = vst [vmem:[#allocation2 + $0x80] sm:$0xff] %v672
        %705 = vst [vmem:[#allocation2 + $0x88] sm:$0xff] %v673
        %706 = vst [vmem:[#allocation2 + $0x90] sm:$0xff] %v674
        %707 = vst [vmem:[#allocation2 + $0x98] sm:$0xff] %v675
        %708 = vst [vmem:[#allocation2 + $0xa0] sm:$0xff] %v676
        %709 = vst [vmem:[#allocation2 + $0xa8] sm:$0xff] %v677
        %710 = vst [vmem:[#allocation2 + $0xb0] sm:$0xff] %v678
        %711 = vst [vmem:[#allocation2 + $0xb8] sm:$0xff] %v679
        %712 = vst [vmem:[#allocation2 + $0xc0] sm:$0xff] %v680
        %713 = vst [vmem:[#allocation2 + $0xc8] sm:$0xff] %v681
        %714 = vst [vmem:[#allocation2 + $0xd0] sm:$0xff] %v682
        %715 = vst [vmem:[#allocation2 + $0xd8] sm:$0xff] %v683
        %716 = vst [vmem:[#allocation2 + $0xe0] sm:$0xff] %v684
        %717 = vst [vmem:[#allocation2 + $0xe8] sm:$0xff] %v685
        %718 = vst [vmem:[#allocation2 + $0xf0] sm:$0xff] %v686
        %719 = vst [vmem:[#allocation2 + $0xf8] sm:$0xff] %v687
        %v720 = vld [vmem:[#allocation2] ss:$2 sm:$0xff]
        %s721 = scalar_lea.vmem [#allocation2], 16
        %v722 = vld [vmem:[%s721] ss:$2 sm:$0xff]
        %s723 = scalar_lea.vmem [#allocation2], 32
        %v724 = vld [vmem:[%s723] ss:$2 sm:$0xff]
        %s725 = scalar_lea.vmem [#allocation2], 48
        %v726 = vld [vmem:[%s725] ss:$2 sm:$0xff]
        %s727 = scalar_lea.vmem [#allocation2], 64
        %v728 = vld [vmem:[%s727] ss:$2 sm:$0xff]
        %s729 = scalar_lea.vmem [#allocation2], 80
        %v730 = vld [vmem:[%s729] ss:$2 sm:$0xff]
        %s731 = scalar_lea.vmem [#allocation2], 96
        %v732 = vld [vmem:[%s731] ss:$2 sm:$0xff]
        %s733 = scalar_lea.vmem [#allocation2], 112
        %v734 = vld [vmem:[%s733] ss:$2 sm:$0xff]
        %s735 = scalar_lea.vmem [#allocation2], 128
        %v736 = vld [vmem:[%s735] ss:$2 sm:$0xff]
        %s737 = scalar_lea.vmem [#allocation2], 144
        %v738 = vld [vmem:[%s737] ss:$2 sm:$0xff]
        %s739 = scalar_lea.vmem [#allocation2], 160
        %v740 = vld [vmem:[%s739] ss:$2 sm:$0xff]
        %s741 = scalar_lea.vmem [#allocation2], 176
        %v742 = vld [vmem:[%s741] ss:$2 sm:$0xff]
        %v743 = vpack.c.bf16 %v722, %v720
        %v744 = vpack.c.bf16 %v726, %v724
        %v745 = vpack.c.bf16 %v730, %v728
        %v746 = vpack.c.bf16 %v734, %v732
        %v747 = vpack.c.bf16 %v738, %v736
        %v748 = vpack.c.bf16 %v742, %v740
        %s749 = scalar_lea.vmem [#allocation2], 1
        %v750 = vld [vmem:[%s749] ss:$2 sm:$0xff]
        %s751 = scalar_lea.vmem [#allocation2], 17
        %v752 = vld [vmem:[%s751] ss:$2 sm:$0xff]
        %s753 = scalar_lea.vmem [#allocation2], 33
        %v754 = vld [vmem:[%s753] ss:$2 sm:$0xff]
        %s755 = scalar_lea.vmem [#allocation2], 49
        %v756 = vld [vmem:[%s755] ss:$2 sm:$0xff]
        %s757 = scalar_lea.vmem [#allocation2], 65
        %v758 = vld [vmem:[%s757] ss:$2 sm:$0xff]
        %s759 = scalar_lea.vmem [#allocation2], 81
        %v760 = vld [vmem:[%s759] ss:$2 sm:$0xff]
        %s761 = scalar_lea.vmem [#allocation2], 97
        %v762 = vld [vmem:[%s761] ss:$2 sm:$0xff]
        %s763 = scalar_lea.vmem [#allocation2], 113
        %v764 = vld [vmem:[%s763] ss:$2 sm:$0xff]
        %s765 = scalar_lea.vmem [#allocation2], 129
        %v766 = vld [vmem:[%s765] ss:$2 sm:$0xff]
        %s767 = scalar_lea.vmem [#allocation2], 145
        %v768 = vld [vmem:[%s767] ss:$2 sm:$0xff]
        %s769 = scalar_lea.vmem [#allocation2], 161
        %v770 = vld [vmem:[%s769] ss:$2 sm:$0xff]
        %s771 = scalar_lea.vmem [#allocation2], 177
        %v772 = vld [vmem:[%s771] ss:$2 sm:$0xff]
        %v773 = vpack.c.bf16 %v752, %v750
        %v774 = vpack.c.bf16 %v756, %v754
        %v775 = vpack.c.bf16 %v760, %v758
        %v776 = vpack.c.bf16 %v764, %v762
        %v777 = vpack.c.bf16 %v768, %v766
        %v778 = vpack.c.bf16 %v772, %v770
        %s779 = scalar_lea.vmem [#allocation2], 2
        %v780 = vld [vmem:[%s779] ss:$2 sm:$0xff]
        %s781 = scalar_lea.vmem [#allocation2], 18
        %v782 = vld [vmem:[%s781] ss:$2 sm:$0xff]
        %s783 = scalar_lea.vmem [#allocation2], 34
        %v784 = vld [vmem:[%s783] ss:$2 sm:$0xff]
        %s785 = scalar_lea.vmem [#allocation2], 50
        %v786 = vld [vmem:[%s785] ss:$2 sm:$0xff]
        %s787 = scalar_lea.vmem [#allocation2], 66
        %v788 = vld [vmem:[%s787] ss:$2 sm:$0xff]
        %s789 = scalar_lea.vmem [#allocation2], 82
        %v790 = vld [vmem:[%s789] ss:$2 sm:$0xff]
        %s791 = scalar_lea.vmem [#allocation2], 98
        %v792 = vld [vmem:[%s791] ss:$2 sm:$0xff]
        %s793 = scalar_lea.vmem [#allocation2], 114
        %v794 = vld [vmem:[%s793] ss:$2 sm:$0xff]
        %s795 = scalar_lea.vmem [#allocation2], 130
        %v796 = vld [vmem:[%s795] ss:$2 sm:$0xff]
        %s797 = scalar_lea.vmem [#allocation2], 146
        %v798 = vld [vmem:[%s797] ss:$2 sm:$0xff]
        %s799 = scalar_lea.vmem [#allocation2], 162
        %v800 = vld [vmem:[%s799] ss:$2 sm:$0xff]
        %s801 = scalar_lea.vmem [#allocation2], 178
        %v802 = vld [vmem:[%s801] ss:$2 sm:$0xff]
        %v803 = vpack.c.bf16 %v782, %v780
        %v804 = vpack.c.bf16 %v786, %v784
        %v805 = vpack.c.bf16 %v790, %v788
        %v806 = vpack.c.bf16 %v794, %v792
        %v807 = vpack.c.bf16 %v798, %v796
        %v808 = vpack.c.bf16 %v802, %v800
        %v809 = vld [vmem:[#allocation9] sm:$0xf]
        %v810 = vld [vmem:[#allocation9 + $0x4] sm:$0xf]
        %v811 = vld [vmem:[#allocation9 + $0x8] sm:$0xf]
        %v812 = vld [vmem:[#allocation9 + $0xc] sm:$0xf]
        %v813 = vld [vmem:[#allocation9 + $0x10] sm:$0xf]
        %v814 = vld [vmem:[#allocation9 + $0x14] sm:$0xf]
        %v815 = vld [vmem:[#allocation9 + $0x18] sm:$0xf]
        %v816 = vld [vmem:[#allocation9 + $0x1c] sm:$0xf]
        %v817 = vld [vmem:[#allocation9 + $0x20] sm:$0xf]
        %v818 = vld [vmem:[#allocation9 + $0x24] sm:$0xf]
        %v819 = vld [vmem:[#allocation9 + $0x28] sm:$0xf]
        %v820 = vld [vmem:[#allocation9 + $0x2c] sm:$0xf]
        %v821 = vld [vmem:[#allocation9 + $0x30] sm:$0xf]
        %v822 = vld [vmem:[#allocation9 + $0x34] sm:$0xf]
        %v823 = vld [vmem:[#allocation9 + $0x38] sm:$0xf]
        %v824 = vld [vmem:[#allocation9 + $0x3c] sm:$0xf]
        %v825 = vld [vmem:[#allocation9 + $0x40] sm:$0xf]
        %v826 = vld [vmem:[#allocation9 + $0x44] sm:$0xf]
        %v827 = vld [vmem:[#allocation9 + $0x48] sm:$0xf]
        %v828 = vld [vmem:[#allocation9 + $0x4c] sm:$0xf]
        %v829 = vld [vmem:[#allocation9 + $0x50] sm:$0xf]
        %v830 = vld [vmem:[#allocation9 + $0x54] sm:$0xf]
        %v831 = vld [vmem:[#allocation9 + $0x58] sm:$0xf]
        %v832 = vld [vmem:[#allocation9 + $0x5c] sm:$0xf]
        %v833 = vld [vmem:[#allocation9 + $0x60] sm:$0xf]
        %v834 = vld [vmem:[#allocation9 + $0x64] sm:$0xf]
        %v835 = vld [vmem:[#allocation9 + $0x68] sm:$0xf]
        %v836 = vld [vmem:[#allocation9 + $0x6c] sm:$0xf]
        %v837 = vld [vmem:[#allocation9 + $0x70] sm:$0xf]
        %v838 = vld [vmem:[#allocation9 + $0x74] sm:$0xf]
        %v839 = vld [vmem:[#allocation9 + $0x78] sm:$0xf]
        %v840 = vld [vmem:[#allocation9 + $0x7c] sm:$0xf]
        %v841 = vld [vmem:[#allocation9 + $0x80] sm:$0xf]
        %v842 = vld [vmem:[#allocation9 + $0x84] sm:$0xf]
        %v843 = vld [vmem:[#allocation9 + $0x88] sm:$0xf]
        %v844 = vld [vmem:[#allocation9 + $0x8c] sm:$0xf]
        %v845 = vld [vmem:[#allocation9 + $0x90] sm:$0xf]
        %v846 = vld [vmem:[#allocation9 + $0x94] sm:$0xf]
        %v847 = vld [vmem:[#allocation9 + $0x98] sm:$0xf]
        %v848 = vld [vmem:[#allocation9 + $0x9c] sm:$0xf]
        %v849 = vld [vmem:[#allocation9 + $0xa0] sm:$0xf]
        %v850 = vld [vmem:[#allocation9 + $0xa4] sm:$0xf]
        %v851 = vld [vmem:[#allocation9 + $0xa8] sm:$0xf]
        %v852 = vld [vmem:[#allocation9 + $0xac] sm:$0xf]
        %v853 = vld [vmem:[#allocation9 + $0xb0] sm:$0xf]
        %v854 = vld [vmem:[#allocation9 + $0xb4] sm:$0xf]
        %v855 = vld [vmem:[#allocation9 + $0xb8] sm:$0xf]
        %v856 = vld [vmem:[#allocation9 + $0xbc] sm:$0xf]
        %s857 = scalar_lea.vmem [#allocation2], 24
        %v858 = vld [vmem:[%s857] ss:$2 sm:$0xff]
        %s859 = scalar_lea.vmem [#allocation2], 40
        %v860 = vld [vmem:[%s859] ss:$2 sm:$0xff]
        %s861 = scalar_lea.vmem [#allocation2], 56
        %v862 = vld [vmem:[%s861] ss:$2 sm:$0xff]
        %s863 = scalar_lea.vmem [#allocation2], 72
        %v864 = vld [vmem:[%s863] ss:$2 sm:$0xff]
        %s865 = scalar_lea.vmem [#allocation2], 88
        %v866 = vld [vmem:[%s865] ss:$2 sm:$0xff]
        %s867 = scalar_lea.vmem [#allocation2], 104
        %v868 = vld [vmem:[%s867] ss:$2 sm:$0xff]
        %s869 = scalar_lea.vmem [#allocation2], 120
        %v870 = vld [vmem:[%s869] ss:$2 sm:$0xff]
        %s871 = scalar_lea.vmem [#allocation2], 136
        %v872 = vld [vmem:[%s871] ss:$2 sm:$0xff]
        %s873 = scalar_lea.vmem [#allocation2], 152
        %v874 = vld [vmem:[%s873] ss:$2 sm:$0xff]
        %s875 = scalar_lea.vmem [#allocation2], 168
        %v876 = vld [vmem:[%s875] ss:$2 sm:$0xff]
        %s877 = scalar_lea.vmem [#allocation2], 184
        %v878 = vld [vmem:[%s877] ss:$2 sm:$0xff]
        %s879 = scalar_lea.vmem [#allocation2], 200
        %v880 = vld [vmem:[%s879] ss:$2 sm:$0xff]
        %v881 = vpack.c.bf16 %v860, %v858
        %v882 = vpack.c.bf16 %v864, %v862
        %v883 = vpack.c.bf16 %v868, %v866
        %v884 = vpack.c.bf16 %v872, %v870
        %v885 = vpack.c.bf16 %v876, %v874
        %v886 = vpack.c.bf16 %v880, %v878
        %s887 = scalar_lea.vmem [#allocation2], 25
        %v888 = vld [vmem:[%s887] ss:$2 sm:$0xff]
        %s889 = scalar_lea.vmem [#allocation2], 41
        %v890 = vld [vmem:[%s889] ss:$2 sm:$0xff]
        %s891 = scalar_lea.vmem [#allocation2], 57
        %v892 = vld [vmem:[%s891] ss:$2 sm:$0xff]
        %s893 = scalar_lea.vmem [#allocation2], 73
        %v894 = vld [vmem:[%s893] ss:$2 sm:$0xff]
        %s895 = scalar_lea.vmem [#allocation2], 89
        %v896 = vld [vmem:[%s895] ss:$2 sm:$0xff]
        %s897 = scalar_lea.vmem [#allocation2], 105
        %v898 = vld [vmem:[%s897] ss:$2 sm:$0xff]
        %s899 = scalar_lea.vmem [#allocation2], 121
        %v900 = vld [vmem:[%s899] ss:$2 sm:$0xff]
        %s901 = scalar_lea.vmem [#allocation2], 137
        %v902 = vld [vmem:[%s901] ss:$2 sm:$0xff]
        %s903 = scalar_lea.vmem [#allocation2], 153
        %v904 = vld [vmem:[%s903] ss:$2 sm:$0xff]
        %s905 = scalar_lea.vmem [#allocation2], 169
        %v906 = vld [vmem:[%s905] ss:$2 sm:$0xff]
        %s907 = scalar_lea.vmem [#allocation2], 185
        %v908 = vld [vmem:[%s907] ss:$2 sm:$0xff]
        %s909 = scalar_lea.vmem [#allocation2], 201
        %v910 = vld [vmem:[%s909] ss:$2 sm:$0xff]
        %v911 = vpack.c.bf16 %v890, %v888
        %v912 = vpack.c.bf16 %v894, %v892
        %v913 = vpack.c.bf16 %v898, %v896
        %v914 = vpack.c.bf16 %v902, %v900
        %v915 = vpack.c.bf16 %v906, %v904
        %v916 = vpack.c.bf16 %v910, %v908
        %s917 = scalar_lea.vmem [#allocation2], 26
        %v918 = vld [vmem:[%s917] ss:$2 sm:$0xff]
        %s919 = scalar_lea.vmem [#allocation2], 42
        %v920 = vld [vmem:[%s919] ss:$2 sm:$0xff]
        %s921 = scalar_lea.vmem [#allocation2], 58
        %v922 = vld [vmem:[%s921] ss:$2 sm:$0xff]
        %s923 = scalar_lea.vmem [#allocation2], 74
        %v924 = vld [vmem:[%s923] ss:$2 sm:$0xff]
        %s925 = scalar_lea.vmem [#allocation2], 90
        %v926 = vld [vmem:[%s925] ss:$2 sm:$0xff]
        %s927 = scalar_lea.vmem [#allocation2], 106
        %v928 = vld [vmem:[%s927] ss:$2 sm:$0xff]
        %s929 = scalar_lea.vmem [#allocation2], 122
        %v930 = vld [vmem:[%s929] ss:$2 sm:$0xff]
        %s931 = scalar_lea.vmem [#allocation2], 138
        %v932 = vld [vmem:[%s931] ss:$2 sm:$0xff]
        %s933 = scalar_lea.vmem [#allocation2], 154
        %v934 = vld [vmem:[%s933] ss:$2 sm:$0xff]
        %s935 = scalar_lea.vmem [#allocation2], 170
        %v936 = vld [vmem:[%s935] ss:$2 sm:$0xff]
        %s937 = scalar_lea.vmem [#allocation2], 186
        %v938 = vld [vmem:[%s937] ss:$2 sm:$0xff]
        %s939 = scalar_lea.vmem [#allocation2], 202
        %v940 = vld [vmem:[%s939] ss:$2 sm:$0xff]
        %v941 = vpack.c.bf16 %v920, %v918
        %v942 = vpack.c.bf16 %v924, %v922
        %v943 = vpack.c.bf16 %v928, %v926
        %v944 = vpack.c.bf16 %v932, %v930
        %v945 = vpack.c.bf16 %v936, %v934
        %v946 = vpack.c.bf16 %v940, %v938
        %s947 = scalar_lea.vmem [#allocation9], 192
        %v948 = vld [vmem:[%s947] sm:$0xf]
        %v949 = vld [vmem:[%s947 + $0x4] sm:$0xf]
        %v950 = vld [vmem:[%s947 + $0x8] sm:$0xf]
        %v951 = vld [vmem:[%s947 + $0xc] sm:$0xf]
        %v952 = vld [vmem:[%s947 + $0x10] sm:$0xf]
        %v953 = vld [vmem:[%s947 + $0x14] sm:$0xf]
        %v954 = vld [vmem:[%s947 + $0x18] sm:$0xf]
        %v955 = vld [vmem:[%s947 + $0x1c] sm:$0xf]
        %v956 = vld [vmem:[%s947 + $0x20] sm:$0xf]
        %v957 = vld [vmem:[%s947 + $0x24] sm:$0xf]
        %v958 = vld [vmem:[%s947 + $0x28] sm:$0xf]
        %v959 = vld [vmem:[%s947 + $0x2c] sm:$0xf]
        %v960 = vld [vmem:[%s947 + $0x30] sm:$0xf]
        %v961 = vld [vmem:[%s947 + $0x34] sm:$0xf]
        %v962 = vld [vmem:[%s947 + $0x38] sm:$0xf]
        %v963 = vld [vmem:[%s947 + $0x3c] sm:$0xf]
        %v964 = vld [vmem:[%s947 + $0x40] sm:$0xf]
        %v965 = vld [vmem:[%s947 + $0x44] sm:$0xf]
        %v966 = vld [vmem:[%s947 + $0x48] sm:$0xf]
        %v967 = vld [vmem:[%s947 + $0x4c] sm:$0xf]
        %v968 = vld [vmem:[%s947 + $0x50] sm:$0xf]
        %v969 = vld [vmem:[%s947 + $0x54] sm:$0xf]
        %v970 = vld [vmem:[%s947 + $0x58] sm:$0xf]
        %v971 = vld [vmem:[%s947 + $0x5c] sm:$0xf]
        %v972 = vld [vmem:[%s947 + $0x60] sm:$0xf]
        %v973 = vld [vmem:[%s947 + $0x64] sm:$0xf]
        %v974 = vld [vmem:[%s947 + $0x68] sm:$0xf]
        %v975 = vld [vmem:[%s947 + $0x6c] sm:$0xf]
        %v976 = vld [vmem:[%s947 + $0x70] sm:$0xf]
        %v977 = vld [vmem:[%s947 + $0x74] sm:$0xf]
        %v978 = vld [vmem:[%s947 + $0x78] sm:$0xf]
        %v979 = vld [vmem:[%s947 + $0x7c] sm:$0xf]
        %v980 = vld [vmem:[%s947 + $0x80] sm:$0xf]
        %v981 = vld [vmem:[%s947 + $0x84] sm:$0xf]
        %v982 = vld [vmem:[%s947 + $0x88] sm:$0xf]
        %v983 = vld [vmem:[%s947 + $0x8c] sm:$0xf]
        %v984 = vld [vmem:[%s947 + $0x90] sm:$0xf]
        %v985 = vld [vmem:[%s947 + $0x94] sm:$0xf]
        %v986 = vld [vmem:[%s947 + $0x98] sm:$0xf]
        %v987 = vld [vmem:[%s947 + $0x9c] sm:$0xf]
        %v988 = vld [vmem:[%s947 + $0xa0] sm:$0xf]
        %v989 = vld [vmem:[%s947 + $0xa4] sm:$0xf]
        %v990 = vld [vmem:[%s947 + $0xa8] sm:$0xf]
        %v991 = vld [vmem:[%s947 + $0xac] sm:$0xf]
        %v992 = vld [vmem:[%s947 + $0xb0] sm:$0xf]
        %v993 = vld [vmem:[%s947 + $0xb4] sm:$0xf]
        %v994 = vld [vmem:[%s947 + $0xb8] sm:$0xf]
        %v995 = vld [vmem:[%s947 + $0xbc] sm:$0xf]
        %v1044 = vunpack.c.l.b16 %v948
        %v1045 = vunpack.c.l.b16 %v949
        %v1046 = vunpack.c.l.b16 %v950
        %v1047 = vunpack.c.l.b16 %v951
        %v1048 = vunpack.c.l.b16 %v952
        %v1049 = vunpack.c.l.b16 %v953
        %v1050 = vunpack.c.l.b16 %v954
        %v1051 = vunpack.c.l.b16 %v955
        %v1052 = vunpack.c.l.b16 %v956
        %v1053 = vunpack.c.l.b16 %v957
        %v1054 = vunpack.c.l.b16 %v958
        %v1055 = vunpack.c.l.b16 %v959
        %v1056 = vunpack.c.l.b16 %v960
        %v1057 = vunpack.c.l.b16 %v961
        %v1058 = vunpack.c.l.b16 %v962
        %v1059 = vunpack.c.l.b16 %v963
        %v1060 = vunpack.c.l.b16 %v964
        %v1061 = vunpack.c.l.b16 %v965
        %v1062 = vunpack.c.l.b16 %v966
        %v1063 = vunpack.c.l.b16 %v967
        %v1064 = vunpack.c.l.b16 %v968
        %v1065 = vunpack.c.l.b16 %v969
        %v1066 = vunpack.c.l.b16 %v970
        %v1067 = vunpack.c.l.b16 %v971
        %v1068 = vunpack.c.l.b16 %v972
        %v1069 = vunpack.c.l.b16 %v973
        %v1070 = vunpack.c.l.b16 %v974
        %v1071 = vunpack.c.l.b16 %v975
        %v1072 = vunpack.c.l.b16 %v976
        %v1073 = vunpack.c.l.b16 %v977
        %v1074 = vunpack.c.l.b16 %v978
        %v1075 = vunpack.c.l.b16 %v979
        %v1076 = vunpack.c.l.b16 %v980
        %v1077 = vunpack.c.l.b16 %v981
        %v1078 = vunpack.c.l.b16 %v982
        %v1079 = vunpack.c.l.b16 %v983
        %v1080 = vunpack.c.l.b16 %v984
        %v1081 = vunpack.c.l.b16 %v985
        %v1082 = vunpack.c.l.b16 %v986
        %v1083 = vunpack.c.l.b16 %v987
        %v1084 = vunpack.c.l.b16 %v988
        %v1085 = vunpack.c.l.b16 %v989
        %v1086 = vunpack.c.l.b16 %v990
        %v1087 = vunpack.c.l.b16 %v991
        %v1088 = vunpack.c.l.b16 %v992
        %v1089 = vunpack.c.l.b16 %v993
        %v1090 = vunpack.c.l.b16 %v994
        %v1091 = vunpack.c.l.b16 %v995
        %v1092 = vpack.c.b16 %v1045, %v1044
        %v1093 = vpack.c.b16 %v1047, %v1046
        %v1094 = vpack.c.b16 %v1049, %v1048
        %v1095 = vpack.c.b16 %v1051, %v1050
        %v1096 = vpack.c.b16 %v1053, %v1052
        %v1097 = vpack.c.b16 %v1055, %v1054
        %v1098 = vpack.c.b16 %v1057, %v1056
        %v1099 = vpack.c.b16 %v1059, %v1058
        %v1100 = vpack.c.b16 %v1061, %v1060
        %v1101 = vpack.c.b16 %v1063, %v1062
        %v1102 = vpack.c.b16 %v1065, %v1064
        %v1103 = vpack.c.b16 %v1067, %v1066
        %v1104 = vpack.c.b16 %v1069, %v1068
        %v1105 = vpack.c.b16 %v1071, %v1070
        %v1106 = vpack.c.b16 %v1073, %v1072
        %v1107 = vpack.c.b16 %v1075, %v1074
        %v1108 = vpack.c.b16 %v1077, %v1076
        %v1109 = vpack.c.b16 %v1079, %v1078
        %v1110 = vpack.c.b16 %v1081, %v1080
        %v1111 = vpack.c.b16 %v1083, %v1082
        %v1112 = vpack.c.b16 %v1085, %v1084
        %v1113 = vpack.c.b16 %v1087, %v1086
        %v1114 = vpack.c.b16 %v1089, %v1088
        %v1115 = vpack.c.b16 %v1091, %v1090
        %1140 = vmatprep.subr.bf16.mxu0 0
        %1141 = vmatpush1.bf16.msra.mxu0 %v1092
        %1142 = vmatprep.subr.bf16.mxu0 0
        %1143 = vmatpush1.bf16.msra.mxu0 %v1093
        %1144 = vmatprep.subr.bf16.mxu0 0
        %1145 = vmatpush1.bf16.msra.mxu0 %v1094
        %1146 = vmatprep.subr.bf16.mxu0 0
        %1147 = vmatpush1.bf16.msra.mxu0 %v1095
        %1148 = vmatprep.subr.bf16.mxu0 0
        %1149 = vmatpush1.bf16.msra.mxu0 %v1096
        %1150 = vmatprep.subr.bf16.mxu0 0
        %1151 = vmatpush1.bf16.msra.mxu0 %v1097
        %1152 = vmatprep.subr.bf16.mxu0 0
        %1153 = vmatpush1.bf16.msra.mxu0 %v1098
        %1154 = vmatprep.subr.bf16.mxu0 0
        %1155 = vmatpush1.bf16.msra.mxu0 %v1099
        %1156 = vmatprep.subr.bf16.mxu0 0
        %1157 = vmatpush1.bf16.msra.mxu0 %v1100
        %1158 = vmatprep.subr.bf16.mxu0 0
        %1159 = vmatpush1.bf16.msra.mxu0 %v1101
        %1160 = vmatprep.subr.bf16.mxu0 0
        %1161 = vmatpush1.bf16.msra.mxu0 %v1102
        %1162 = vmatprep.subr.bf16.mxu0 0
        %1163 = vmatpush1.bf16.msra.mxu0 %v1103
        %1164 = vmatprep.subr.bf16.mxu0 0
        %1165 = vmatpush1.bf16.msra.mxu0 %v1104
        %1166 = vmatprep.subr.bf16.mxu0 0
        %1167 = vmatpush1.bf16.msra.mxu0 %v1105
        %1168 = vmatprep.subr.bf16.mxu0 0
        %1169 = vmatpush1.bf16.msra.mxu0 %v1106
        %1170 = vmatprep.subr.bf16.mxu0 0
        %1171 = vmatpush1.bf16.msra.mxu0 %v1107
        %1172 = vmatprep.mubr.bf16.mxu0 %v911
        %1173 = vmatmul.mubr.bf16.gmra.mrb[0].mxu0 %v881
        %v1174 = vpop.f32.mrb[0].mxu0
        %v1175 = vadd.f32 0.0, %v1174
        %v1176 = vpop.f32.mrb[0].mxu0
        %v1177 = vpop.f32.mrb[0].mxu0
        %v1178 = vpop.f32.mrb[0].mxu0
        %1179 = vmatprep.mubr.bf16.mxu0 %v912
        %1180 = vmatmul.mubr.bf16.gmra.mrb[0].mxu0 %v882
        %v1181 = vpop.f32.mrb[0].mxu0
        %v1182 = vpop.f32.mrb[0].mxu0
        %v1183 = vpop.f32.mrb[0].mxu0
        %v1184 = vadd.f32 0.0, %v1183
        %v1185 = vpop.f32.mrb[0].mxu0
        %1186 = vmatprep.mubr.bf16.mxu0 %v913
        %1187 = vmatmul.mubr.bf16.gmra.mrb[0].mxu0 %v883
        %v1188 = vpop.f32.mrb[0].mxu0
        %v1189 = vpop.f32.mrb[0].mxu0
        %v1190 = vpop.f32.mrb[0].mxu0
        %v1191 = vpop.f32.mrb[0].mxu0
        %1192 = vmatprep.mubr.bf16.mxu0 %v914
        %1193 = vmatmul.mubr.bf16.gmra.mrb[0].mxu0 %v884
        %v1194 = vpop.f32.mrb[0].mxu0
        %v1195 = vadd.f32 0.0, %v1194
        %v1196 = vpop.f32.mrb[0].mxu0
        %v1197 = vpop.f32.mrb[0].mxu0
        %v1198 = vpop.f32.mrb[0].mxu0
        %1199 = vmatprep.mubr.bf16.mxu0 %v915
        %1200 = vmatmul.mubr.bf16.gmra.mrb[0].mxu0 %v885
        %v1201 = vpop.f32.mrb[0].mxu0
        %v1202 = vpop.f32.mrb[0].mxu0
        %v1203 = vpop.f32.mrb[0].mxu0
        %v1204 = vadd.f32 0.0, %v1203
        %v1205 = vpop.f32.mrb[0].mxu0
        %1206 = vmatprep.mubr.bf16.mxu0 %v916
        %1207 = vmatmul.mubr.bf16.gmra.mrb[0].mxu0 %v886
        %v1208 = vpop.f32.mrb[0].mxu0
        %v1209 = vpop.f32.mrb[0].mxu0
        %v1210 = vpop.f32.mrb[0].mxu0
        %v1211 = vpop.f32.mrb[0].mxu0
        %1212 = vdwg.mxu0
        %1213 = vmatprep.subr.bf16.mxu0 0
        %1214 = vmatpush1.bf16.msra.mxu0 %v1108
        %1215 = vmatprep.subr.bf16.mxu0 0
        %1216 = vmatpush1.bf16.msra.mxu0 %v1109
        %1217 = vmatprep.subr.bf16.mxu0 0
        %1218 = vmatpush1.bf16.msra.mxu0 %v1110
        %1219 = vmatprep.subr.bf16.mxu0 0
        %1220 = vmatpush1.bf16.msra.mxu0 %v1111
        %1221 = vmatprep.subr.bf16.mxu0 0
        %1222 = vmatpush1.bf16.msra.mxu0 %v1112
        %1223 = vmatprep.subr.bf16.mxu0 0
        %1224 = vmatpush1.bf16.msra.mxu0 %v1113
        %1225 = vmatprep.subr.bf16.mxu0 0
        %1226 = vmatpush1.bf16.msra.mxu0 %v1114
        %1227 = vmatprep.subr.bf16.mxu0 0
        %1228 = vmatpush1.bf16.msra.mxu0 %v1115
        %1229 = vmatprep.subr.bf16.mxu0 0
        %1230 = vmatpush1.bf16.msra.mxu0 0
        %1231 = vmatprep.subr.bf16.mxu0 0
        %1232 = vmatpush1.bf16.msra.mxu0 0
        %1233 = vmatprep.subr.bf16.mxu0 0
        %1234 = vmatpush1.bf16.msra.mxu0 0
        %1235 = vmatprep.subr.bf16.mxu0 0
        %1236 = vmatpush1.bf16.msra.mxu0 0
        %1237 = vmatprep.subr.bf16.mxu0 0
        %1238 = vmatpush1.bf16.msra.mxu0 0
        %1239 = vmatprep.subr.bf16.mxu0 0
        %1240 = vmatpush1.bf16.msra.mxu0 0
        %1241 = vmatprep.subr.bf16.mxu0 0
        %1242 = vmatpush1.bf16.msra.mxu0 0
        %1243 = vmatprep.subr.bf16.mxu0 0
        %1244 = vmatpush1.bf16.msra.mxu0 0
        %1245 = vmatprep.mubr.bf16.mxu0 0
        %1246 = vmatmul.mubr.bf16.gmra.mrb[0].mxu0 %v941
        %v1247 = vpop.f32.mrb[0].mxu0
        %v1248 = vadd.f32 %v1175, %v1247
        %v1249 = vpop.f32.mrb[0].mxu0
        %v1250 = vpop.f32.mrb[0].mxu0
        %v1251 = vpop.f32.mrb[0].mxu0
        %1252 = vmatprep.mubr.bf16.mxu0 0
        %1253 = vmatmul.mubr.bf16.gmra.mrb[0].mxu0 %v942
        %v1254 = vpop.f32.mrb[0].mxu0
        %v1255 = vpop.f32.mrb[0].mxu0
        %v1256 = vpop.f32.mrb[0].mxu0
        %v1257 = vadd.f32 %v1184, %v1256
        %v1258 = vpop.f32.mrb[0].mxu0
        %1259 = vmatprep.mubr.bf16.mxu0 0
        %1260 = vmatmul.mubr.bf16.gmra.mrb[0].mxu0 %v943
        %v1261 = vpop.f32.mrb[0].mxu0
        %v1262 = vpop.f32.mrb[0].mxu0
        %v1263 = vpop.f32.mrb[0].mxu0
        %v1264 = vpop.f32.mrb[0].mxu0
        %1265 = vmatprep.mubr.bf16.mxu0 0
        %1266 = vmatmul.mubr.bf16.gmra.mrb[0].mxu0 %v944
        %v1267 = vpop.f32.mrb[0].mxu0
        %v1268 = vadd.f32 %v1195, %v1267
        %v1269 = vpop.f32.mrb[0].mxu0
        %v1270 = vpop.f32.mrb[0].mxu0
        %v1271 = vpop.f32.mrb[0].mxu0
        %1272 = vmatprep.mubr.bf16.mxu0 0
        %1273 = vmatmul.mubr.bf16.gmra.mrb[0].mxu0 %v945
        %v1274 = vpop.f32.mrb[0].mxu0
        %v1275 = vpop.f32.mrb[0].mxu0
        %v1276 = vpop.f32.mrb[0].mxu0
        %v1277 = vadd.f32 %v1204, %v1276
        %v1278 = vpop.f32.mrb[0].mxu0
        %1279 = vmatprep.mubr.bf16.mxu0 0
        %1280 = vmatmul.mubr.bf16.gmra.mrb[0].mxu0 %v946
        %v1281 = vpop.f32.mrb[0].mxu0
        %v1282 = vpop.f32.mrb[0].mxu0
        %v1283 = vpop.f32.mrb[0].mxu0
        %v1284 = vpop.f32.mrb[0].mxu0
        %1285 = vdwg.mxu0
        %v1334 = vunpack.c.l.b16 %v809
        %v1335 = vunpack.c.l.b16 %v810
        %v1336 = vunpack.c.l.b16 %v811
        %v1337 = vunpack.c.l.b16 %v812
        %v1338 = vunpack.c.l.b16 %v813
        %v1339 = vunpack.c.l.b16 %v814
        %v1340 = vunpack.c.l.b16 %v815
        %v1341 = vunpack.c.l.b16 %v816
        %v1342 = vunpack.c.l.b16 %v817
        %v1343 = vunpack.c.l.b16 %v818
        %v1344 = vunpack.c.l.b16 %v819
        %v1345 = vunpack.c.l.b16 %v820
        %v1346 = vunpack.c.l.b16 %v821
        %v1347 = vunpack.c.l.b16 %v822
        %v1348 = vunpack.c.l.b16 %v823
        %v1349 = vunpack.c.l.b16 %v824
        %v1350 = vunpack.c.l.b16 %v825
        %v1351 = vunpack.c.l.b16 %v826
        %v1352 = vunpack.c.l.b16 %v827
        %v1353 = vunpack.c.l.b16 %v828
        %v1354 = vunpack.c.l.b16 %v829
        %v1355 = vunpack.c.l.b16 %v830
        %v1356 = vunpack.c.l.b16 %v831
        %v1357 = vunpack.c.l.b16 %v832
        %v1358 = vunpack.c.l.b16 %v833
        %v1359 = vunpack.c.l.b16 %v834
        %v1360 = vunpack.c.l.b16 %v835
        %v1361 = vunpack.c.l.b16 %v836
        %v1362 = vunpack.c.l.b16 %v837
        %v1363 = vunpack.c.l.b16 %v838
        %v1364 = vunpack.c.l.b16 %v839
        %v1365 = vunpack.c.l.b16 %v840
        %v1366 = vunpack.c.l.b16 %v841
        %v1367 = vunpack.c.l.b16 %v842
        %v1368 = vunpack.c.l.b16 %v843
        %v1369 = vunpack.c.l.b16 %v844
        %v1370 = vunpack.c.l.b16 %v845
        %v1371 = vunpack.c.l.b16 %v846
        %v1372 = vunpack.c.l.b16 %v847
        %v1373 = vunpack.c.l.b16 %v848
        %v1374 = vunpack.c.l.b16 %v849
        %v1375 = vunpack.c.l.b16 %v850
        %v1376 = vunpack.c.l.b16 %v851
        %v1377 = vunpack.c.l.b16 %v852
        %v1378 = vunpack.c.l.b16 %v853
        %v1379 = vunpack.c.l.b16 %v854
        %v1380 = vunpack.c.l.b16 %v855
        %v1381 = vunpack.c.l.b16 %v856
        %v1382 = vpack.c.b16 %v1335, %v1334
        %v1383 = vpack.c.b16 %v1337, %v1336
        %v1384 = vpack.c.b16 %v1339, %v1338
        %v1385 = vpack.c.b16 %v1341, %v1340
        %v1386 = vpack.c.b16 %v1343, %v1342
        %v1387 = vpack.c.b16 %v1345, %v1344
        %v1388 = vpack.c.b16 %v1347, %v1346
        %v1389 = vpack.c.b16 %v1349, %v1348
        %v1390 = vpack.c.b16 %v1351, %v1350
        %v1391 = vpack.c.b16 %v1353, %v1352
        %v1392 = vpack.c.b16 %v1355, %v1354
        %v1393 = vpack.c.b16 %v1357, %v1356
        %v1394 = vpack.c.b16 %v1359, %v1358
        %v1395 = vpack.c.b16 %v1361, %v1360
        %v1396 = vpack.c.b16 %v1363, %v1362
        %v1397 = vpack.c.b16 %v1365, %v1364
        %v1398 = vpack.c.b16 %v1367, %v1366
        %v1399 = vpack.c.b16 %v1369, %v1368
        %v1400 = vpack.c.b16 %v1371, %v1370
        %v1401 = vpack.c.b16 %v1373, %v1372
        %v1402 = vpack.c.b16 %v1375, %v1374
        %v1403 = vpack.c.b16 %v1377, %v1376
        %v1404 = vpack.c.b16 %v1379, %v1378
        %v1405 = vpack.c.b16 %v1381, %v1380
        %1430 = vmatprep.subr.bf16.mxu0 0
        %1431 = vmatpush1.bf16.msra.mxu0 %v1382
        %1432 = vmatprep.subr.bf16.mxu0 0
        %1433 = vmatpush1.bf16.msra.mxu0 %v1383
        %1434 = vmatprep.subr.bf16.mxu0 0
        %1435 = vmatpush1.bf16.msra.mxu0 %v1384
        %1436 = vmatprep.subr.bf16.mxu0 0
        %1437 = vmatpush1.bf16.msra.mxu0 %v1385
        %1438 = vmatprep.subr.bf16.mxu0 0
        %1439 = vmatpush1.bf16.msra.mxu0 %v1386
        %1440 = vmatprep.subr.bf16.mxu0 0
        %1441 = vmatpush1.bf16.msra.mxu0 %v1387
        %1442 = vmatprep.subr.bf16.mxu0 0
        %1443 = vmatpush1.bf16.msra.mxu0 %v1388
        %1444 = vmatprep.subr.bf16.mxu0 0
        %1445 = vmatpush1.bf16.msra.mxu0 %v1389
        %1446 = vmatprep.subr.bf16.mxu0 0
        %1447 = vmatpush1.bf16.msra.mxu0 %v1390
        %1448 = vmatprep.subr.bf16.mxu0 0
        %1449 = vmatpush1.bf16.msra.mxu0 %v1391
        %1450 = vmatprep.subr.bf16.mxu0 0
        %1451 = vmatpush1.bf16.msra.mxu0 %v1392
        %1452 = vmatprep.subr.bf16.mxu0 0
        %1453 = vmatpush1.bf16.msra.mxu0 %v1393
        %1454 = vmatprep.subr.bf16.mxu0 0
        %1455 = vmatpush1.bf16.msra.mxu0 %v1394
        %1456 = vmatprep.subr.bf16.mxu0 0
        %1457 = vmatpush1.bf16.msra.mxu0 %v1395
        %1458 = vmatprep.subr.bf16.mxu0 0
        %1459 = vmatpush1.bf16.msra.mxu0 %v1396
        %1460 = vmatprep.subr.bf16.mxu0 0
        %1461 = vmatpush1.bf16.msra.mxu0 %v1397
        %1462 = vmatprep.mubr.bf16.mxu0 %v773
        %1463 = vmatmul.mubr.bf16.gmra.mrb[0].mxu0 %v743
        %v1464 = vpop.f32.mrb[0].mxu0
        %v1465 = vadd.f32 %v1248, %v1464
        %v1466 = vpop.f32.mrb[0].mxu0
        %v1467 = vpop.f32.mrb[0].mxu0
        %v1468 = vpop.f32.mrb[0].mxu0
        %1469 = vmatprep.mubr.bf16.mxu0 %v774
        %1470 = vmatmul.mubr.bf16.gmra.mrb[0].mxu0 %v744
        %v1471 = vpop.f32.mrb[0].mxu0
        %v1472 = vpop.f32.mrb[0].mxu0
        %v1473 = vpop.f32.mrb[0].mxu0
        %v1474 = vadd.f32 %v1257, %v1473
        %v1475 = vpop.f32.mrb[0].mxu0
        %1476 = vmatprep.mubr.bf16.mxu0 %v775
        %1477 = vmatmul.mubr.bf16.gmra.mrb[0].mxu0 %v745
        %v1478 = vpop.f32.mrb[0].mxu0
        %v1479 = vpop.f32.mrb[0].mxu0
        %v1480 = vpop.f32.mrb[0].mxu0
        %v1481 = vpop.f32.mrb[0].mxu0
        %1482 = vmatprep.mubr.bf16.mxu0 %v776
        %1483 = vmatmul.mubr.bf16.gmra.mrb[0].mxu0 %v746
        %v1484 = vpop.f32.mrb[0].mxu0
        %v1485 = vadd.f32 %v1268, %v1484
        %v1486 = vpop.f32.mrb[0].mxu0
        %v1487 = vpop.f32.mrb[0].mxu0
        %v1488 = vpop.f32.mrb[0].mxu0
        %1489 = vmatprep.mubr.bf16.mxu0 %v777
        %1490 = vmatmul.mubr.bf16.gmra.mrb[0].mxu0 %v747
        %v1491 = vpop.f32.mrb[0].mxu0
        %v1492 = vpop.f32.mrb[0].mxu0
        %v1493 = vpop.f32.mrb[0].mxu0
        %v1494 = vadd.f32 %v1277, %v1493
        %v1495 = vpop.f32.mrb[0].mxu0
        %1496 = vmatprep.mubr.bf16.mxu0 %v778
        %1497 = vmatmul.mubr.bf16.gmra.mrb[0].mxu0 %v748
        %v1498 = vpop.f32.mrb[0].mxu0
        %v1499 = vpop.f32.mrb[0].mxu0
        %v1500 = vpop.f32.mrb[0].mxu0
        %v1501 = vpop.f32.mrb[0].mxu0
        %1502 = vdwg.mxu0
        %1503 = vmatprep.subr.bf16.mxu0 0
        %1504 = vmatpush1.bf16.msra.mxu0 %v1398
        %1505 = vmatprep.subr.bf16.mxu0 0
        %1506 = vmatpush1.bf16.msra.mxu0 %v1399
        %1507 = vmatprep.subr.bf16.mxu0 0
        %1508 = vmatpush1.bf16.msra.mxu0 %v1400
        %1509 = vmatprep.subr.bf16.mxu0 0
        %1510 = vmatpush1.bf16.msra.mxu0 %v1401
        %1511 = vmatprep.subr.bf16.mxu0 0
        %1512 = vmatpush1.bf16.msra.mxu0 %v1402
        %1513 = vmatprep.subr.bf16.mxu0 0
        %1514 = vmatpush1.bf16.msra.mxu0 %v1403
        %1515 = vmatprep.subr.bf16.mxu0 0
        %1516 = vmatpush1.bf16.msra.mxu0 %v1404
        %1517 = vmatprep.subr.bf16.mxu0 0
        %1518 = vmatpush1.bf16.msra.mxu0 %v1405
        %1519 = vmatprep.subr.bf16.mxu0 0
        %1520 = vmatpush1.bf16.msra.mxu0 0
        %1521 = vmatprep.subr.bf16.mxu0 0
        %1522 = vmatpush1.bf16.msra.mxu0 0
        %1523 = vmatprep.subr.bf16.mxu0 0
        %1524 = vmatpush1.bf16.msra.mxu0 0
        %1525 = vmatprep.subr.bf16.mxu0 0
        %1526 = vmatpush1.bf16.msra.mxu0 0
        %1527 = vmatprep.subr.bf16.mxu0 0
        %1528 = vmatpush1.bf16.msra.mxu0 0
        %1529 = vmatprep.subr.bf16.mxu0 0
        %1530 = vmatpush1.bf16.msra.mxu0 0
        %1531 = vmatprep.subr.bf16.mxu0 0
        %1532 = vmatpush1.bf16.msra.mxu0 0
        %1533 = vmatprep.subr.bf16.mxu0 0
        %1534 = vmatpush1.bf16.msra.mxu0 0
        %1535 = vmatprep.mubr.bf16.mxu0 0
        %1536 = vmatmul.mubr.bf16.gmra.mrb[0].mxu0 %v803
        %v1537 = vpop.f32.mrb[0].mxu0
        %v1538 = vadd.f32 %v1465, %v1537
        %v1539 = vpop.f32.mrb[0].mxu0
        %v1540 = vpop.f32.mrb[0].mxu0
        %v1541 = vpop.f32.mrb[0].mxu0
        %1542 = vmatprep.mubr.bf16.mxu0 0
        %1543 = vmatmul.mubr.bf16.gmra.mrb[0].mxu0 %v804
        %v1544 = vpop.f32.mrb[0].mxu0
        %v1545 = vpop.f32.mrb[0].mxu0
        %v1546 = vpop.f32.mrb[0].mxu0
        %v1547 = vadd.f32 %v1474, %v1546
        %v1548 = vpop.f32.mrb[0].mxu0
        %1549 = vmatprep.mubr.bf16.mxu0 0
        %1550 = vmatmul.mubr.bf16.gmra.mrb[0].mxu0 %v805
        %v1551 = vpop.f32.mrb[0].mxu0
        %v1552 = vpop.f32.mrb[0].mxu0
        %v1553 = vpop.f32.mrb[0].mxu0
        %v1554 = vpop.f32.mrb[0].mxu0
        %1555 = vmatprep.mubr.bf16.mxu0 0
        %1556 = vmatmul.mubr.bf16.gmra.mrb[0].mxu0 %v806
        %v1557 = vpop.f32.mrb[0].mxu0
        %v1558 = vadd.f32 %v1485, %v1557
        %v1559 = vpop.f32.mrb[0].mxu0
        %v1560 = vpop.f32.mrb[0].mxu0
        %v1561 = vpop.f32.mrb[0].mxu0
        %1562 = vmatprep.mubr.bf16.mxu0 0
        %1563 = vmatmul.mubr.bf16.gmra.mrb[0].mxu0 %v807
        %v1564 = vpop.f32.mrb[0].mxu0
        %v1565 = vpop.f32.mrb[0].mxu0
        %v1566 = vpop.f32.mrb[0].mxu0
        %v1567 = vadd.f32 %v1494, %v1566
        %v1568 = vpop.f32.mrb[0].mxu0
        %1569 = vmatprep.mubr.bf16.mxu0 0
        %1570 = vmatmul.mubr.bf16.gmra.mrb[0].mxu0 %v808
        %v1571 = vpop.f32.mrb[0].mxu0
        %v1572 = vpop.f32.mrb[0].mxu0
        %v1573 = vpop.f32.mrb[0].mxu0
        %v1574 = vpop.f32.mrb[0].mxu0
        %1575 = vdwg.mxu0
        %v1576 = vld [vmem:[%s725] ss:$2 sm:$0xff]
        %v1577 = vld [vmem:[%s727] ss:$2 sm:$0xff]
        %v1578 = vld [vmem:[%s729] ss:$2 sm:$0xff]
        %v1579 = vld [vmem:[%s731] ss:$2 sm:$0xff]
        %v1580 = vld [vmem:[%s733] ss:$2 sm:$0xff]
        %v1581 = vld [vmem:[%s735] ss:$2 sm:$0xff]
        %v1582 = vld [vmem:[%s737] ss:$2 sm:$0xff]
        %v1583 = vld [vmem:[%s739] ss:$2 sm:$0xff]
        %v1584 = vld [vmem:[%s741] ss:$2 sm:$0xff]
        %s1585 = scalar_lea.vmem [#allocation2], 192
        %v1586 = vld [vmem:[%s1585] ss:$2 sm:$0xff]
        %s1587 = scalar_lea.vmem [#allocation2], 208
        %v1588 = vld [vmem:[%s1587] ss:$2 sm:$0xff]
        %s1589 = scalar_lea.vmem [#allocation2], 224
        %v1590 = vld [vmem:[%s1589] ss:$2 sm:$0xff]
        %v1591 = vpack.c.bf16 %v1577, %v1576
        %v1592 = vpack.c.bf16 %v1579, %v1578
        %v1593 = vpack.c.bf16 %v1581, %v1580
        %v1594 = vpack.c.bf16 %v1583, %v1582
        %v1595 = vpack.c.bf16 %v1586, %v1584
        %v1596 = vpack.c.bf16 %v1590, %v1588
        %v1597 = vld [vmem:[%s755] ss:$2 sm:$0xff]
        %v1598 = vld [vmem:[%s757] ss:$2 sm:$0xff]
        %v1599 = vld [vmem:[%s759] ss:$2 sm:$0xff]
        %v1600 = vld [vmem:[%s761] ss:$2 sm:$0xff]
        %v1601 = vld [vmem:[%s763] ss:$2 sm:$0xff]
        %v1602 = vld [vmem:[%s765] ss:$2 sm:$0xff]
        %v1603 = vld [vmem:[%s767] ss:$2 sm:$0xff]
        %v1604 = vld [vmem:[%s769] ss:$2 sm:$0xff]
        %v1605 = vld [vmem:[%s771] ss:$2 sm:$0xff]
        %s1606 = scalar_lea.vmem [#allocation2], 193
        %v1607 = vld [vmem:[%s1606] ss:$2 sm:$0xff]
        %s1608 = scalar_lea.vmem [#allocation2], 209
        %v1609 = vld [vmem:[%s1608] ss:$2 sm:$0xff]
        %s1610 = scalar_lea.vmem [#allocation2], 225
        %v1611 = vld [vmem:[%s1610] ss:$2 sm:$0xff]
        %v1612 = vpack.c.bf16 %v1598, %v1597
        %v1613 = vpack.c.bf16 %v1600, %v1599
        %v1614 = vpack.c.bf16 %v1602, %v1601
        %v1615 = vpack.c.bf16 %v1604, %v1603
        %v1616 = vpack.c.bf16 %v1607, %v1605
        %v1617 = vpack.c.bf16 %v1611, %v1609
        %v1618 = vld [vmem:[%s785] ss:$2 sm:$0xff]
        %v1619 = vld [vmem:[%s787] ss:$2 sm:$0xff]
        %v1620 = vld [vmem:[%s789] ss:$2 sm:$0xff]
        %v1621 = vld [vmem:[%s791] ss:$2 sm:$0xff]
        %v1622 = vld [vmem:[%s793] ss:$2 sm:$0xff]
        %v1623 = vld [vmem:[%s795] ss:$2 sm:$0xff]
        %v1624 = vld [vmem:[%s797] ss:$2 sm:$0xff]
        %v1625 = vld [vmem:[%s799] ss:$2 sm:$0xff]
        %v1626 = vld [vmem:[%s801] ss:$2 sm:$0xff]
        %s1627 = scalar_lea.vmem [#allocation2], 194
        %v1628 = vld [vmem:[%s1627] ss:$2 sm:$0xff]
        %s1629 = scalar_lea.vmem [#allocation2], 210
        %v1630 = vld [vmem:[%s1629] ss:$2 sm:$0xff]
        %s1631 = scalar_lea.vmem [#allocation2], 226
        %v1632 = vld [vmem:[%s1631] ss:$2 sm:$0xff]
        %v1633 = vpack.c.bf16 %v1619, %v1618
        %v1634 = vpack.c.bf16 %v1621, %v1620
        %v1635 = vpack.c.bf16 %v1623, %v1622
        %v1636 = vpack.c.bf16 %v1625, %v1624
        %v1637 = vpack.c.bf16 %v1628, %v1626
        %v1638 = vpack.c.bf16 %v1632, %v1630
        %s1639 = scalar_lea.vmem [#allocation9], 384
        %v1640 = vld [vmem:[%s1639] sm:$0xf]
        %v1641 = vld [vmem:[%s1639 + $0x4] sm:$0xf]
        %v1642 = vld [vmem:[%s1639 + $0x8] sm:$0xf]
        %v1643 = vld [vmem:[%s1639 + $0xc] sm:$0xf]
        %v1644 = vld [vmem:[%s1639 + $0x10] sm:$0xf]
        %v1645 = vld [vmem:[%s1639 + $0x14] sm:$0xf]
        %v1646 = vld [vmem:[%s1639 + $0x18] sm:$0xf]
        %v1647 = vld [vmem:[%s1639 + $0x1c] sm:$0xf]
        %v1648 = vld [vmem:[%s1639 + $0x20] sm:$0xf]
        %v1649 = vld [vmem:[%s1639 + $0x24] sm:$0xf]
        %v1650 = vld [vmem:[%s1639 + $0x28] sm:$0xf]
        %v1651 = vld [vmem:[%s1639 + $0x2c] sm:$0xf]
        %v1652 = vld [vmem:[%s1639 + $0x30] sm:$0xf]
        %v1653 = vld [vmem:[%s1639 + $0x34] sm:$0xf]
        %v1654 = vld [vmem:[%s1639 + $0x38] sm:$0xf]
        %v1655 = vld [vmem:[%s1639 + $0x3c] sm:$0xf]
        %v1656 = vld [vmem:[%s1639 + $0x40] sm:$0xf]
        %v1657 = vld [vmem:[%s1639 + $0x44] sm:$0xf]
        %v1658 = vld [vmem:[%s1639 + $0x48] sm:$0xf]
        %v1659 = vld [vmem:[%s1639 + $0x4c] sm:$0xf]
        %v1660 = vld [vmem:[%s1639 + $0x50] sm:$0xf]
        %v1661 = vld [vmem:[%s1639 + $0x54] sm:$0xf]
        %v1662 = vld [vmem:[%s1639 + $0x58] sm:$0xf]
        %v1663 = vld [vmem:[%s1639 + $0x5c] sm:$0xf]
        %v1664 = vld [vmem:[%s1639 + $0x60] sm:$0xf]
        %v1665 = vld [vmem:[%s1639 + $0x64] sm:$0xf]
        %v1666 = vld [vmem:[%s1639 + $0x68] sm:$0xf]
        %v1667 = vld [vmem:[%s1639 + $0x6c] sm:$0xf]
        %v1668 = vld [vmem:[%s1639 + $0x70] sm:$0xf]
        %v1669 = vld [vmem:[%s1639 + $0x74] sm:$0xf]
        %v1670 = vld [vmem:[%s1639 + $0x78] sm:$0xf]
        %v1671 = vld [vmem:[%s1639 + $0x7c] sm:$0xf]
        %v1672 = vld [vmem:[%s1639 + $0x80] sm:$0xf]
        %v1673 = vld [vmem:[%s1639 + $0x84] sm:$0xf]
        %v1674 = vld [vmem:[%s1639 + $0x88] sm:$0xf]
        %v1675 = vld [vmem:[%s1639 + $0x8c] sm:$0xf]
        %v1676 = vld [vmem:[%s1639 + $0x90] sm:$0xf]
        %v1677 = vld [vmem:[%s1639 + $0x94] sm:$0xf]
        %v1678 = vld [vmem:[%s1639 + $0x98] sm:$0xf]
        %v1679 = vld [vmem:[%s1639 + $0x9c] sm:$0xf]
        %v1680 = vld [vmem:[%s1639 + $0xa0] sm:$0xf]
        %v1681 = vld [vmem:[%s1639 + $0xa4] sm:$0xf]
        %v1682 = vld [vmem:[%s1639 + $0xa8] sm:$0xf]
        %v1683 = vld [vmem:[%s1639 + $0xac] sm:$0xf]
        %v1684 = vld [vmem:[%s1639 + $0xb0] sm:$0xf]
        %v1685 = vld [vmem:[%s1639 + $0xb4] sm:$0xf]
        %v1686 = vld [vmem:[%s1639 + $0xb8] sm:$0xf]
        %v1687 = vld [vmem:[%s1639 + $0xbc] sm:$0xf]
        %v1736 = vunpack.c.l.b16 %v1640
        %v1737 = vunpack.c.l.b16 %v1641
        %v1738 = vunpack.c.l.b16 %v1642
        %v1739 = vunpack.c.l.b16 %v1643
        %v1740 = vunpack.c.l.b16 %v1644
        %v1741 = vunpack.c.l.b16 %v1645
        %v1742 = vunpack.c.l.b16 %v1646
        %v1743 = vunpack.c.l.b16 %v1647
        %v1744 = vunpack.c.l.b16 %v1648
        %v1745 = vunpack.c.l.b16 %v1649
        %v1746 = vunpack.c.l.b16 %v1650
        %v1747 = vunpack.c.l.b16 %v1651
        %v1748 = vunpack.c.l.b16 %v1652
        %v1749 = vunpack.c.l.b16 %v1653
        %v1750 = vunpack.c.l.b16 %v1654
        %v1751 = vunpack.c.l.b16 %v1655
        %v1752 = vunpack.c.l.b16 %v1656
        %v1753 = vunpack.c.l.b16 %v1657
        %v1754 = vunpack.c.l.b16 %v1658
        %v1755 = vunpack.c.l.b16 %v1659
        %v1756 = vunpack.c.l.b16 %v1660
        %v1757 = vunpack.c.l.b16 %v1661
        %v1758 = vunpack.c.l.b16 %v1662
        %v1759 = vunpack.c.l.b16 %v1663
        %v1760 = vunpack.c.l.b16 %v1664
        %v1761 = vunpack.c.l.b16 %v1665
        %v1762 = vunpack.c.l.b16 %v1666
        %v1763 = vunpack.c.l.b16 %v1667
        %v1764 = vunpack.c.l.b16 %v1668
        %v1765 = vunpack.c.l.b16 %v1669
        %v1766 = vunpack.c.l.b16 %v1670
        %v1767 = vunpack.c.l.b16 %v1671
        %v1768 = vunpack.c.l.b16 %v1672
        %v1769 = vunpack.c.l.b16 %v1673
        %v1770 = vunpack.c.l.b16 %v1674
        %v1771 = vunpack.c.l.b16 %v1675
        %v1772 = vunpack.c.l.b16 %v1676
        %v1773 = vunpack.c.l.b16 %v1677
        %v1774 = vunpack.c.l.b16 %v1678
        %v1775 = vunpack.c.l.b16 %v1679
        %v1776 = vunpack.c.l.b16 %v1680
        %v1777 = vunpack.c.l.b16 %v1681
        %v1778 = vunpack.c.l.b16 %v1682
        %v1779 = vunpack.c.l.b16 %v1683
        %v1780 = vunpack.c.l.b16 %v1684
        %v1781 = vunpack.c.l.b16 %v1685
        %v1782 = vunpack.c.l.b16 %v1686
        %v1783 = vunpack.c.l.b16 %v1687
        %v1784 = vpack.c.b16 %v1737, %v1736
        %v1785 = vpack.c.b16 %v1739, %v1738
        %v1786 = vpack.c.b16 %v1741, %v1740
        %v1787 = vpack.c.b16 %v1743, %v1742
        %v1788 = vpack.c.b16 %v1745, %v1744
        %v1789 = vpack.c.b16 %v1747, %v1746
        %v1790 = vpack.c.b16 %v1749, %v1748
        %v1791 = vpack.c.b16 %v1751, %v1750
        %v1792 = vpack.c.b16 %v1753, %v1752
        %v1793 = vpack.c.b16 %v1755, %v1754
        %v1794 = vpack.c.b16 %v1757, %v1756
        %v1795 = vpack.c.b16 %v1759, %v1758
        %v1796 = vpack.c.b16 %v1761, %v1760
        %v1797 = vpack.c.b16 %v1763, %v1762
        %v1798 = vpack.c.b16 %v1765, %v1764
        %v1799 = vpack.c.b16 %v1767, %v1766
        %v1800 = vpack.c.b16 %v1769, %v1768
        %v1801 = vpack.c.b16 %v1771, %v1770
        %v1802 = vpack.c.b16 %v1773, %v1772
        %v1803 = vpack.c.b16 %v1775, %v1774
        %v1804 = vpack.c.b16 %v1777, %v1776
        %v1805 = vpack.c.b16 %v1779, %v1778
        %v1806 = vpack.c.b16 %v1781, %v1780
        %v1807 = vpack.c.b16 %v1783, %v1782
        %1832 = vmatprep.subr.bf16.mxu0 0
        %1833 = vmatpush1.bf16.msra.mxu0 %v1784
        %1834 = vmatprep.subr.bf16.mxu0 0
        %1835 = vmatpush1.bf16.msra.mxu0 %v1785
        %1836 = vmatprep.subr.bf16.mxu0 0
        %1837 = vmatpush1.bf16.msra.mxu0 %v1786
        %1838 = vmatprep.subr.bf16.mxu0 0
        %1839 = vmatpush1.bf16.msra.mxu0 %v1787
        %1840 = vmatprep.subr.bf16.mxu0 0
        %1841 = vmatpush1.bf16.msra.mxu0 %v1788
        %1842 = vmatprep.subr.bf16.mxu0 0
        %1843 = vmatpush1.bf16.msra.mxu0 %v1789
        %1844 = vmatprep.subr.bf16.mxu0 0
        %1845 = vmatpush1.bf16.msra.mxu0 %v1790
        %1846 = vmatprep.subr.bf16.mxu0 0
        %1847 = vmatpush1.bf16.msra.mxu0 %v1791
        %1848 = vmatprep.subr.bf16.mxu0 0
        %1849 = vmatpush1.bf16.msra.mxu0 %v1792
        %1850 = vmatprep.subr.bf16.mxu0 0
        %1851 = vmatpush1.bf16.msra.mxu0 %v1793
        %1852 = vmatprep.subr.bf16.mxu0 0
        %1853 = vmatpush1.bf16.msra.mxu0 %v1794
        %1854 = vmatprep.subr.bf16.mxu0 0
        %1855 = vmatpush1.bf16.msra.mxu0 %v1795
        %1856 = vmatprep.subr.bf16.mxu0 0
        %1857 = vmatpush1.bf16.msra.mxu0 %v1796
        %1858 = vmatprep.subr.bf16.mxu0 0
        %1859 = vmatpush1.bf16.msra.mxu0 %v1797
        %1860 = vmatprep.subr.bf16.mxu0 0
        %1861 = vmatpush1.bf16.msra.mxu0 %v1798
        %1862 = vmatprep.subr.bf16.mxu0 0
        %1863 = vmatpush1.bf16.msra.mxu0 %v1799
        %1864 = vmatprep.mubr.bf16.mxu0 %v1612
        %1865 = vmatmul.mubr.bf16.gmra.mrb[0].mxu0 %v1591
        %v1866 = vpop.f32.mrb[0].mxu0
        %v1867 = vadd.f32 0.0, %v1866
        %v1868 = vpop.f32.mrb[0].mxu0
        %v1869 = vpop.f32.mrb[0].mxu0
        %v1870 = vpop.f32.mrb[0].mxu0
        %1871 = vmatprep.mubr.bf16.mxu0 %v1613
        %1872 = vmatmul.mubr.bf16.gmra.mrb[0].mxu0 %v1592
        %v1873 = vpop.f32.mrb[0].mxu0
        %v1874 = vpop.f32.mrb[0].mxu0
        %v1875 = vpop.f32.mrb[0].mxu0
        %v1876 = vadd.f32 0.0, %v1875
        %v1877 = vpop.f32.mrb[0].mxu0
        %1878 = vmatprep.mubr.bf16.mxu0 %v1614
        %1879 = vmatmul.mubr.bf16.gmra.mrb[0].mxu0 %v1593
        %v1880 = vpop.f32.mrb[0].mxu0
        %v1881 = vpop.f32.mrb[0].mxu0
        %v1882 = vpop.f32.mrb[0].mxu0
        %v1883 = vpop.f32.mrb[0].mxu0
        %1884 = vmatprep.mubr.bf16.mxu0 %v1615
        %1885 = vmatmul.mubr.bf16.gmra.mrb[0].mxu0 %v1594
        %v1886 = vpop.f32.mrb[0].mxu0
        %v1887 = vadd.f32 0.0, %v1886
        %v1888 = vpop.f32.mrb[0].mxu0
        %v1889 = vpop.f32.mrb[0].mxu0
        %v1890 = vpop.f32.mrb[0].mxu0
        %1891 = vmatprep.mubr.bf16.mxu0 %v1616
        %1892 = vmatmul.mubr.bf16.gmra.mrb[0].mxu0 %v1595
        %v1893 = vpop.f32.mrb[0].mxu0
        %v1894 = vpop.f32.mrb[0].mxu0
        %v1895 = vpop.f32.mrb[0].mxu0
        %v1896 = vadd.f32 0.0, %v1895
        %v1897 = vpop.f32.mrb[0].mxu0
        %1898 = vmatprep.mubr.bf16.mxu0 %v1617
        %1899 = vmatmul.mubr.bf16.gmra.mrb[0].mxu0 %v1596
        %v1900 = vpop.f32.mrb[0].mxu0
        %v1901 = vpop.f32.mrb[0].mxu0
        %v1902 = vpop.f32.mrb[0].mxu0
        %v1903 = vpop.f32.mrb[0].mxu0
        %1904 = vdwg.mxu0
        %1905 = vmatprep.subr.bf16.mxu0 0
        %1906 = vmatpush1.bf16.msra.mxu0 %v1800
        %1907 = vmatprep.subr.bf16.mxu0 0
        %1908 = vmatpush1.bf16.msra.mxu0 %v1801
        %1909 = vmatprep.subr.bf16.mxu0 0
        %1910 = vmatpush1.bf16.msra.mxu0 %v1802
        %1911 = vmatprep.subr.bf16.mxu0 0
        %1912 = vmatpush1.bf16.msra.mxu0 %v1803
        %1913 = vmatprep.subr.bf16.mxu0 0
        %1914 = vmatpush1.bf16.msra.mxu0 %v1804
        %1915 = vmatprep.subr.bf16.mxu0 0
        %1916 = vmatpush1.bf16.msra.mxu0 %v1805
        %1917 = vmatprep.subr.bf16.mxu0 0
        %1918 = vmatpush1.bf16.msra.mxu0 %v1806
        %1919 = vmatprep.subr.bf16.mxu0 0
        %1920 = vmatpush1.bf16.msra.mxu0 %v1807
        %1921 = vmatprep.subr.bf16.mxu0 0
        %1922 = vmatpush1.bf16.msra.mxu0 0
        %1923 = vmatprep.subr.bf16.mxu0 0
        %1924 = vmatpush1.bf16.msra.mxu0 0
        %1925 = vmatprep.subr.bf16.mxu0 0
        %1926 = vmatpush1.bf16.msra.mxu0 0
        %1927 = vmatprep.subr.bf16.mxu0 0
        %1928 = vmatpush1.bf16.msra.mxu0 0
        %1929 = vmatprep.subr.bf16.mxu0 0
        %1930 = vmatpush1.bf16.msra.mxu0 0
        %1931 = vmatprep.subr.bf16.mxu0 0
        %1932 = vmatpush1.bf16.msra.mxu0 0
        %1933 = vmatprep.subr.bf16.mxu0 0
        %1934 = vmatpush1.bf16.msra.mxu0 0
        %1935 = vmatprep.subr.bf16.mxu0 0
        %1936 = vmatpush1.bf16.msra.mxu0 0
        %1937 = vmatprep.mubr.bf16.mxu0 0
        %1938 = vmatmul.mubr.bf16.gmra.mrb[0].mxu0 %v1633
        %v1939 = vpop.f32.mrb[0].mxu0
        %v1940 = vadd.f32 %v1867, %v1939
        %v1941 = vpop.f32.mrb[0].mxu0
        %v1942 = vpop.f32.mrb[0].mxu0
        %v1943 = vpop.f32.mrb[0].mxu0
        %1944 = vmatprep.mubr.bf16.mxu0 0
        %1945 = vmatmul.mubr.bf16.gmra.mrb[0].mxu0 %v1634
        %v1946 = vpop.f32.mrb[0].mxu0
        %v1947 = vpop.f32.mrb[0].mxu0
        %v1948 = vpop.f32.mrb[0].mxu0
        %v1949 = vadd.f32 %v1876, %v1948
        %v1950 = vpop.f32.mrb[0].mxu0
        %1951 = vmatprep.mubr.bf16.mxu0 0
        %1952 = vmatmul.mubr.bf16.gmra.mrb[0].mxu0 %v1635
        %v1953 = vpop.f32.mrb[0].mxu0
        %v1954 = vpop.f32.mrb[0].mxu0
        %v1955 = vpop.f32.mrb[0].mxu0
        %v1956 = vpop.f32.mrb[0].mxu0
        %1957 = vmatprep.mubr.bf16.mxu0 0
        %1958 = vmatmul.mubr.bf16.gmra.mrb[0].mxu0 %v1636
        %v1959 = vpop.f32.mrb[0].mxu0
        %v1960 = vadd.f32 %v1887, %v1959
        %v1961 = vpop.f32.mrb[0].mxu0
        %v1962 = vpop.f32.mrb[0].mxu0
        %v1963 = vpop.f32.mrb[0].mxu0
        %1964 = vmatprep.mubr.bf16.mxu0 0
        %1965 = vmatmul.mubr.bf16.gmra.mrb[0].mxu0 %v1637
        %v1966 = vpop.f32.mrb[0].mxu0
        %v1967 = vpop.f32.mrb[0].mxu0
        %v1968 = vpop.f32.mrb[0].mxu0
        %v1969 = vadd.f32 %v1896, %v1968
        %v1970 = vpop.f32.mrb[0].mxu0
        %1971 = vmatprep.mubr.bf16.mxu0 0
        %1972 = vmatmul.mubr.bf16.gmra.mrb[0].mxu0 %v1638
        %v1973 = vpop.f32.mrb[0].mxu0
        %v1974 = vpop.f32.mrb[0].mxu0
        %v1975 = vpop.f32.mrb[0].mxu0
        %v1976 = vpop.f32.mrb[0].mxu0
        %1977 = vdwg.mxu0
        %v1978 = vadd.f32 %v1538, %v1940
        %v1979 = vadd.f32 %v1547, %v1949
        %v1980 = vadd.f32 %v1558, %v1960
        %v1981 = vadd.f32 %v1567, %v1969
        %v1982 = vmax.f32 %v1978, 0.0
        %v1983 = vmax.f32 %v1979, 0.0
        %v1984 = vmax.f32 %v1980, 0.0
        %v1985 = vmax.f32 %v1981, 0.0
        %v1986 = vpack.c.bf16 %v1983, %v1982
        %v1987 = vpack.c.bf16 %v1985, %v1984
        %v1988 = vld [vmem:[#allocation10] sm:$0xf]
        %v1989 = vld [vmem:[#allocation10 + $0x4] sm:$0xf]
        %v1990 = vld [vmem:[#allocation10 + $0x8] sm:$0xf]
        %v1991 = vld [vmem:[#allocation10 + $0xc] sm:$0xf]
        %v1992 = vld [vmem:[#allocation10 + $0x10] sm:$0xf]
        %v1993 = vld [vmem:[#allocation10 + $0x14] sm:$0xf]
        %v1994 = vld [vmem:[#allocation10 + $0x18] sm:$0xf]
        %v1995 = vld [vmem:[#allocation10 + $0x1c] sm:$0xf]
        %v1996 = vld [vmem:[#allocation10 + $0x20] sm:$0xf]
        %v1997 = vld [vmem:[#allocation10 + $0x24] sm:$0xf]
        %v1998 = vld [vmem:[#allocation10 + $0x28] sm:$0xf]
        %v1999 = vld [vmem:[#allocation10 + $0x2c] sm:$0xf]
        %v2000 = vld [vmem:[#allocation10 + $0x30] sm:$0xf]
        %v2001 = vld [vmem:[#allocation10 + $0x34] sm:$0xf]
        %v2002 = vld [vmem:[#allocation10 + $0x38] sm:$0xf]
        %v2003 = vld [vmem:[#allocation10 + $0x3c] sm:$0xf]
        %s2004 = scalar_lea.vmem [#allocation3], 25
        %v2005 = vld [vmem:[%s2004] ss:$2 sm:$0xff]
        %s2006 = scalar_lea.vmem [#allocation3], 73
        %v2007 = vld [vmem:[%s2006] ss:$2 sm:$0xff]
        %s2008 = scalar_lea.vmem [#allocation3], 121
        %v2009 = vld [vmem:[%s2008] ss:$2 sm:$0xff]
        %s2010 = scalar_lea.vmem [#allocation3], 169
        %v2011 = vld [vmem:[%s2010] ss:$2 sm:$0xff]
        %v2012 = vpack.c.bf16 %v2007, %v2005
        %v2013 = vpack.c.bf16 %v2011, %v2009
        %v2014 = vld [vmem:[#allocation12] sm:$0xf]
        %v2015 = vld [vmem:[#allocation12 + $0x4] sm:$0xf]
        %v2016 = vld [vmem:[#allocation12 + $0x8] sm:$0xf]
        %v2017 = vld [vmem:[#allocation12 + $0xc] sm:$0xf]
        %v2018 = vld [vmem:[#allocation12 + $0x10] sm:$0xf]
        %v2019 = vld [vmem:[#allocation12 + $0x14] sm:$0xf]
        %v2020 = vld [vmem:[#allocation12 + $0x18] sm:$0xf]
        %v2021 = vld [vmem:[#allocation12 + $0x1c] sm:$0xf]
        %v2022 = vld [vmem:[#allocation12 + $0x20] sm:$0xf]
        %v2023 = vld [vmem:[#allocation12 + $0x24] sm:$0xf]
        %v2024 = vld [vmem:[#allocation12 + $0x28] sm:$0xf]
        %v2025 = vld [vmem:[#allocation12 + $0x2c] sm:$0xf]
        %v2026 = vld [vmem:[#allocation12 + $0x30] sm:$0xf]
        %v2027 = vld [vmem:[#allocation12 + $0x34] sm:$0xf]
        %v2028 = vld [vmem:[#allocation12 + $0x38] sm:$0xf]
        %v2029 = vld [vmem:[#allocation12 + $0x3c] sm:$0xf]
        %v2046 = vunpack.c.l.b16 %v2014
        %v2047 = vunpack.c.l.b16 %v2015
        %v2048 = vunpack.c.l.b16 %v2016
        %v2049 = vunpack.c.l.b16 %v2017
        %v2050 = vunpack.c.l.b16 %v2018
        %v2051 = vunpack.c.l.b16 %v2019
        %v2052 = vunpack.c.l.b16 %v2020
        %v2053 = vunpack.c.l.b16 %v2021
        %v2054 = vunpack.c.l.b16 %v2022
        %v2055 = vunpack.c.l.b16 %v2023
        %v2056 = vunpack.c.l.b16 %v2024
        %v2057 = vunpack.c.l.b16 %v2025
        %v2058 = vunpack.c.l.b16 %v2026
        %v2059 = vunpack.c.l.b16 %v2027
        %v2060 = vunpack.c.l.b16 %v2028
        %v2061 = vunpack.c.l.b16 %v2029
        %v2062 = vpack.c.b16 %v2047, %v2046
        %v2063 = vpack.c.b16 %v2049, %v2048
        %v2064 = vpack.c.b16 %v2051, %v2050
        %v2065 = vpack.c.b16 %v2053, %v2052
        %v2066 = vpack.c.b16 %v2055, %v2054
        %v2067 = vpack.c.b16 %v2057, %v2056
        %v2068 = vpack.c.b16 %v2059, %v2058
        %v2069 = vpack.c.b16 %v2061, %v2060
        %2078 = vmatprep.subr.bf16.mxu0 0
        %2079 = vmatpush1.bf16.msra.mxu0 %v2062
        %2080 = vmatprep.subr.bf16.mxu0 0
        %2081 = vmatpush1.bf16.msra.mxu0 %v2063
        %2082 = vmatprep.subr.bf16.mxu0 0
        %2083 = vmatpush1.bf16.msra.mxu0 %v2064
        %2084 = vmatprep.subr.bf16.mxu0 0
        %2085 = vmatpush1.bf16.msra.mxu0 %v2065
        %2086 = vmatprep.subr.bf16.mxu0 0
        %2087 = vmatpush1.bf16.msra.mxu0 %v2066
        %2088 = vmatprep.subr.bf16.mxu0 0
        %2089 = vmatpush1.bf16.msra.mxu0 %v2067
        %2090 = vmatprep.subr.bf16.mxu0 0
        %2091 = vmatpush1.bf16.msra.mxu0 %v2068
        %2092 = vmatprep.subr.bf16.mxu0 0
        %2093 = vmatpush1.bf16.msra.mxu0 %v2069
        %2094 = vmatprep.subr.bf16.mxu0 0
        %2095 = vmatpush1.bf16.msra.mxu0 0
        %2096 = vmatprep.subr.bf16.mxu0 0
        %2097 = vmatpush1.bf16.msra.mxu0 0
        %2098 = vmatprep.subr.bf16.mxu0 0
        %2099 = vmatpush1.bf16.msra.mxu0 0
        %2100 = vmatprep.subr.bf16.mxu0 0
        %2101 = vmatpush1.bf16.msra.mxu0 0
        %2102 = vmatprep.subr.bf16.mxu0 0
        %2103 = vmatpush1.bf16.msra.mxu0 0
        %2104 = vmatprep.subr.bf16.mxu0 0
        %2105 = vmatpush1.bf16.msra.mxu0 0
        %2106 = vmatprep.subr.bf16.mxu0 0
        %2107 = vmatpush1.bf16.msra.mxu0 0
        %2108 = vmatprep.subr.bf16.mxu0 0
        %2109 = vmatpush1.bf16.msra.mxu0 0
        %2110 = vmatprep.mubr.bf16.mxu0 0
        %2111 = vmatmul.mubr.bf16.gmra.mrb[0].mxu0 %v2012
        %v2112 = vpop.f32.mrb[0].mxu0
        %v2113 = vadd.f32 0.0, %v2112
        %v2114 = vpop.f32.mrb[0].mxu0
        %v2115 = vpop.f32.mrb[0].mxu0
        %v2116 = vadd.f32 0.0, %v2115
        %v2117 = vpop.f32.mrb[0].mxu0
        %2118 = vmatprep.mubr.bf16.mxu0 0
        %2119 = vmatmul.mubr.bf16.gmra.mrb[0].mxu0 %v2013
        %v2120 = vpop.f32.mrb[0].mxu0
        %v2121 = vadd.f32 0.0, %v2120
        %v2122 = vpop.f32.mrb[0].mxu0
        %v2123 = vpop.f32.mrb[0].mxu0
        %v2124 = vadd.f32 0.0, %v2123
        %v2125 = vpop.f32.mrb[0].mxu0
        %2126 = vdwg.mxu0
        %v2143 = vunpack.c.l.b16 %v1988
        %v2144 = vunpack.c.l.b16 %v1989
        %v2145 = vunpack.c.l.b16 %v1990
        %v2146 = vunpack.c.l.b16 %v1991
        %v2147 = vunpack.c.l.b16 %v1992
        %v2148 = vunpack.c.l.b16 %v1993
        %v2149 = vunpack.c.l.b16 %v1994
        %v2150 = vunpack.c.l.b16 %v1995
        %v2151 = vunpack.c.l.b16 %v1996
        %v2152 = vunpack.c.l.b16 %v1997
        %v2153 = vunpack.c.l.b16 %v1998
        %v2154 = vunpack.c.l.b16 %v1999
        %v2155 = vunpack.c.l.b16 %v2000
        %v2156 = vunpack.c.l.b16 %v2001
        %v2157 = vunpack.c.l.b16 %v2002
        %v2158 = vunpack.c.l.b16 %v2003
        %v2159 = vpack.c.b16 %v2144, %v2143
        %v2160 = vpack.c.b16 %v2146, %v2145
        %v2161 = vpack.c.b16 %v2148, %v2147
        %v2162 = vpack.c.b16 %v2150, %v2149
        %v2163 = vpack.c.b16 %v2152, %v2151
        %v2164 = vpack.c.b16 %v2154, %v2153
        %v2165 = vpack.c.b16 %v2156, %v2155
        %v2166 = vpack.c.b16 %v2158, %v2157
        %2175 = vmatprep.subr.bf16.mxu0 0
        %2176 = vmatpush1.bf16.msra.mxu0 %v2159
        %2177 = vmatprep.subr.bf16.mxu0 0
        %2178 = vmatpush1.bf16.msra.mxu0 %v2160
        %2179 = vmatprep.subr.bf16.mxu0 0
        %2180 = vmatpush1.bf16.msra.mxu0 %v2161
        %2181 = vmatprep.subr.bf16.mxu0 0
        %2182 = vmatpush1.bf16.msra.mxu0 %v2162
        %2183 = vmatprep.subr.bf16.mxu0 0
        %2184 = vmatpush1.bf16.msra.mxu0 %v2163
        %2185 = vmatprep.subr.bf16.mxu0 0
        %2186 = vmatpush1.bf16.msra.mxu0 %v2164
        %2187 = vmatprep.subr.bf16.mxu0 0
        %2188 = vmatpush1.bf16.msra.mxu0 %v2165
        %2189 = vmatprep.subr.bf16.mxu0 0
        %2190 = vmatpush1.bf16.msra.mxu0 %v2166
        %2191 = vmatprep.subr.bf16.mxu0 0
        %2192 = vmatpush1.bf16.msra.mxu0 0
        %2193 = vmatprep.subr.bf16.mxu0 0
        %2194 = vmatpush1.bf16.msra.mxu0 0
        %2195 = vmatprep.subr.bf16.mxu0 0
        %2196 = vmatpush1.bf16.msra.mxu0 0
        %2197 = vmatprep.subr.bf16.mxu0 0
        %2198 = vmatpush1.bf16.msra.mxu0 0
        %2199 = vmatprep.subr.bf16.mxu0 0
        %2200 = vmatpush1.bf16.msra.mxu0 0
        %2201 = vmatprep.subr.bf16.mxu0 0
        %2202 = vmatpush1.bf16.msra.mxu0 0
        %2203 = vmatprep.subr.bf16.mxu0 0
        %2204 = vmatpush1.bf16.msra.mxu0 0
        %2205 = vmatprep.subr.bf16.mxu0 0
        %2206 = vmatpush1.bf16.msra.mxu0 0
        %2207 = vmatprep.mubr.bf16.mxu0 0
        %2208 = vmatmul.mubr.bf16.gmra.mrb[0].mxu0 %v1986
        %v2209 = vpop.f32.mrb[0].mxu0
        %v2210 = vadd.f32 %v2113, %v2209
        %v2211 = vpop.f32.mrb[0].mxu0
        %v2212 = vpop.f32.mrb[0].mxu0
        %v2213 = vadd.f32 %v2116, %v2212
        %v2214 = vpop.f32.mrb[0].mxu0
        %2215 = vmatprep.mubr.bf16.mxu0 0
        %2216 = vmatmul.mubr.bf16.gmra.mrb[0].mxu0 %v1987
        %v2217 = vpop.f32.mrb[0].mxu0
        %v2218 = vadd.f32 %v2121, %v2217
        %v2219 = vpop.f32.mrb[0].mxu0
        %v2220 = vpop.f32.mrb[0].mxu0
        %v2221 = vadd.f32 %v2124, %v2220
        %v2222 = vpop.f32.mrb[0].mxu0
        %2223 = vdwg.mxu0
        %v2224 = vmax.f32 %v2210, 0.0
        %v2225 = vmax.f32 %v2213, 0.0
        %v2226 = vmax.f32 %v2218, 0.0
        %v2227 = vmax.f32 %v2221, 0.0
        %2228 = vst [vmem:[%s314] sm:$0xff] %v2224
        %2229 = vst [vmem:[%s314 + $0x8] sm:$0xff] %v2225
        %2230 = vst [vmem:[%s314 + $0x10] sm:$0xff] %v2226
        %2231 = vst [vmem:[%s314 + $0x18] sm:$0xff] %v2227
        %s2232 = sand.u32 %s156, 1
        %s2233 = scalar_lea.sflag [#allocation6], %s2232
        %s2234 = sand.u32 %s156, 1
        %s2235 = smul.addr %s2234, 32
        %s2236 = scalar_lea.vmem [#allocation13], %s2235
        // Predicated region
        $region61: #{tpu_custom_call.1} parent=39 // pred_check
          %p2237 = pneg %p166
        $region62: #{tpu_custom_call.1} parent=39 // pred_check_branch
          %2239 = sbr.rel (%p2237) target = $region64
        $region63: #{tpu_custom_call.1} parent=39 // pred_region
          %s2240 = smul.u32 4, %s29
          %s2242 = ssub.s32 512, 512
          %2243 = vsyncadd %s2233, %s2242
          %s2244 = smul.addr %s28, 8
          %s2245 = sadd.s32 %s2240, %s2244
          %s2246 = smul.addr %s2245, 128
          %s2247 = scalar_lea.hbm %s5, %s2246
          %s2248 = sshll.u32 %s2236, 4
          %s2249 = int_to_ptr.vmem [resolvable:$true] %s2248
          %2254 = dma.vmem_to_hbm [thread:$0]  %s2249, 512, %s2247, %s2233, 128, 128, 8
        $region64: #{tpu_custom_call.1} parent=39 // pred_fallthru
          _
      $region40: #{tpu_custom_call.1} parent=5 // pred_fallthru
        _
      %p2255 = scmp.le.s32.totalorder 2, %s19
      // Predicated region
      $region65: #{tpu_custom_call.1} parent=5 // pred_check
        %p2256 = pneg %p2255
      $region66: #{tpu_custom_call.1} parent=5 // pred_check_branch
        %2258 = sbr.rel (%p2256) target = $region68
      $region67: #{tpu_custom_call.1} parent=5 // pred_region
        %s2259 = ssub.s32 %s19, 2
        // Predicated region
        $region69: #{tpu_custom_call.1} parent=67 // pred_check
          %p2260 = pneg %p172
        $region70: #{tpu_custom_call.1} parent=67 // pred_check_branch
          %2262 = sbr.rel (%p2260) target = $region72
        $region71: #{tpu_custom_call.1} parent=67 // pred_region
          %s2263 = sand.u32 %s157, 1
          %s2264 = scalar_lea.sflag [#allocation6], %s2263
          %s2265 = sand.u32 %s157, 1
          %s2266 = smul.addr %s2265, 32
          %s2267 = scalar_lea.vmem [#allocation13], %s2266
          %2268 = dma.done %s2264, 512
        $region72: #{tpu_custom_call.1} parent=67 // pred_fallthru
          _
      $region68: #{tpu_custom_call.1} parent=5 // pred_fallthru
        _
    $region6: #{tpu_custom_call.1} parent=1 // loop_footer
      %s23 = sadd.s32 1, %s19
    $region7: #{tpu_custom_call.1} parent=1 // loop_footer_branch
      %18 = sbr.rel target = $region3
    $region8: #{tpu_custom_call.1} parent=1 // loop_exit
      _
    %2269 = vsyncpa [#allocation5], 1
    %s2270 = scalar_lea.sflag [#allocation5], 1
    %2271 = vsyncpa %s2270, 1
    %2272 = vsyncpa [#allocation8], 1
    %2273 = vsyncpa [#allocation11], 1
    %2274 = vsyncpa [#allocation6], 1
    %s2275 = scalar_lea.sflag [#allocation6], 1
    %2276 = vsyncpa %s2275, 1

// kernel: tpu_custom_call.1
$region0: #{tpu_custom_call.1}
  #allocation0 [shape = 'u32[]', space=smem, size = 0x4, offset = 0x4, fixed_abs, tag = 'smem constant byte address 0x4 - core index']
  #allocation1 [shape = 'u32[144,128]{1,0:T(1,128)}', space=vmem, size = 0x12000, scoped, tag = 'internal scratch']
  #allocation2 [shape = 'f32[256,128]{1,0:T(8,128)}', space=vmem, size = 0x20000, scoped, tag = 'scratch operand']
  #allocation3 [shape = 'f32[256,128]{1,0:T(8,128)}', space=vmem, size = 0x20000, scoped, tag = 'scratch operand']
  %s0 = inlined_call_operand.hbm [shape: f32[2,448,128], index: 0, kind: input, shape index: {}]
  %s1 = inlined_call_operand.hbm [shape: bf16[128,128], index: 1, kind: input, shape index: {}]
  %s2 = inlined_call_operand.hbm [shape: bf16[3,384,128], index: 2, kind: input, shape index: {}]
  %s3 = inlined_call_operand.hbm [shape: bf16[128,128], index: 3, kind: input, shape index: {}]
  %s4 = inlined_call_operand.hbm [shape: bf16[128,128], index: 4, kind: input, shape index: {}]
  %s5 = inlined_call_operand.hbm [shape: f32[2,64,128], index: 5, kind: output, shape index: {}]
  %s6 = sld [smem:[#allocation0]]
  $region73: #{tpu_custom_call.1} parent=0
    _
  %s8 = ssub.s32 1, %s6
  %s9 = scalar_select 0, %s8, %s6
  $region1: #{tpu_custom_call.1} parent=0
    #allocation4 [shape = 'u8[458752]{0}', space=vmem, size = 0x70000, scoped, tag = 'input window, operand 0']
    #allocation5 [shape = 's32[2]{0}', space=sflag, size = 0x8, scoped, tag = 'scoped memory for tpu_custom_call.1']
    #allocation6 [shape = 's32[2]{0}', space=sflag, size = 0x8, scoped, tag = 'scoped memory for tpu_custom_call.1']
    #allocation7 [shape = 'u8[32768]{0}', space=vmem, size = 0x8000, scoped, tag = 'input window, operand 1, single buffered']
    #allocation8 [shape = 's32[1]{0}', space=sflag, size = 0x4, scoped, tag = 'scoped memory for tpu_custom_call.1']
    #allocation9 [shape = 'u8[294912]{0}', space=vmem, size = 0x48000, scoped, tag = 'input window, operand 2, single buffered']
    #allocation10 [shape = 'u8[32768]{0}', space=vmem, size = 0x8000, scoped, tag = 'input window, operand 3, single buffered']
    #allocation11 [shape = 's32[1]{0}', space=sflag, size = 0x4, scoped, tag = 'scoped memory for tpu_custom_call.1']
    #allocation12 [shape = 'u8[32768]{0}', space=vmem, size = 0x8000, scoped, tag = 'input window, operand 4, single buffered']
    #allocation13 [shape = 'u8[32768]{0}', space=vmem, size = 0x8000, scoped, tag = 'output window, operand 0']
    %10 = vsyncpa [#allocation5], 0
    %s11 = scalar_lea.sflag [#allocation5], 1
    %12 = vsyncpa %s11, 0
    %13 = vsyncpa [#allocation8], 0
    %14 = vsyncpa [#allocation11], 0
    %15 = vsyncpa [#allocation6], 0
    %s16 = scalar_lea.sflag [#allocation6], 1
    %17 = vsyncpa %s16, 0
    loop: start=0, step=1, limit=6
    $region2: #{tpu_custom_call.1} parent=1 // loop_pre_header
      _
    $region3: #{tpu_custom_call.1} parent=1 // loop_header
      %s19 = sphi 0, %s23
      %p20 = scmp.ge.s32.totalorder %s19, 6
      %s26 = sphi 0, %s38
      %s27 = sphi 0, %s34
      %s28 = sphi 0, %s26
      %s29 = sphi 0, %s27
      %s30 = sphi 0, %s28
      %s31 = sphi 0, %s29
      %s41 = sphi 0, %s43
      %s44 = sphi 0, %s41
      %s45 = sphi 0, %s44
      %s61 = sphi 0, %s45
      %s65 = sphi 0, %s65
      %s67 = sphi 0, %s65
      %s68 = sphi 0, %s67
      %s82 = sphi 0, %s68
      %s86 = sphi 0, %s86
      %s88 = sphi 0, %s86
      %s89 = sphi 0, %s88
      %s103 = sphi 0, %s89
      %s107 = sphi 0, %s107
      %s109 = sphi 0, %s107
      %s110 = sphi 0, %s109
      %s124 = sphi 0, %s110
      %s128 = sphi 0, %s128
      %s130 = sphi 0, %s128
      %s131 = sphi 0, %s130
      %s145 = sphi 0, %s131
      %s153 = sphi 0, %s155
      %s156 = sphi 0, %s153
      %s157 = sphi 0, %s156
      %s173 = sphi 0, %s157
    $region4: #{tpu_custom_call.1} parent=1 // loop_header_branch
      %22 = sbr.rel (%p20) target = $region8
    $region5: #{tpu_custom_call.1} parent=1 // loop_body
      %s24 = ssub.s32 %s19, 1
      %s25 = ssub.s32 %s19, 2
      %s32 = sadd.s32 1, %s27
      %p33 = scmp.ge.s32.totalorder %s32, 2
      %s34 = scalar_select %p33, 0, %s32
      %s35 = sadd.s32 1, %s26
      %s36 = scalar_select %p33, %s35, %s26
      %p37 = scmp.ge.s32.totalorder %s36, 2
      %s38 = scalar_select %p37, 0, %s36
      %s39 = ssub.s32 %s26, %s38
      %p40 = scmp.eq.s32.totalorder %s39, 0
      %s42 = sadd.s32 %s41, 1
      %s43 = scalar_select %p40, %s41, %s42
      %p46 = pneg %p40
      %p47 = scmp.eq.s32.totalorder %s19, 3
      %p48 = por %p46, %p47
      %p49 = scmp.ne.s32.totalorder %s41, %s44
      %p50 = scmp.eq.s32.totalorder %s19, 0
      %p51 = por %p49, %p50
      %p52 = scmp.ne.s32.totalorder %s41, %s44
      %p53 = scmp.eq.s32.totalorder %s24, 3
      %p54 = por %p52, %p53
      %p55 = scmp.ne.s32.totalorder %s44, %s45
      %p56 = scmp.eq.s32.totalorder %s24, 0
      %p57 = por %p55, %p56
      %p58 = scmp.ne.s32.totalorder %s44, %s45
      %p59 = scmp.eq.s32.totalorder %s25, 3
      %p60 = por %p58, %p59
      %p62 = scmp.ne.s32.totalorder %s45, %s61
      %p63 = scmp.eq.s32.totalorder %s25, 0
      %p64 = por %p62, %p63
      %s66 = sadd.s32 %s65, 1
      %p69 = scmp.eq.s32.totalorder %s19, 3
      %p70 = scmp.ne.s32.totalorder %s65, %s67
      %p71 = scmp.eq.s32.totalorder %s19, 0
      %p72 = por %p70, %p71
      %p73 = scmp.ne.s32.totalorder %s65, %s67
      %p74 = scmp.eq.s32.totalorder %s24, 3
      %p75 = por %p73, %p74
      %p76 = scmp.ne.s32.totalorder %s67, %s68
      %p77 = scmp.eq.s32.totalorder %s24, 0
      %p78 = por %p76, %p77
      %p79 = scmp.ne.s32.totalorder %s67, %s68
      %p80 = scmp.eq.s32.totalorder %s25, 3
      %p81 = por %p79, %p80
      %p83 = scmp.ne.s32.totalorder %s68, %s82
      %p84 = scmp.eq.s32.totalorder %s25, 0
      %p85 = por %p83, %p84
      %s87 = sadd.s32 %s86, 1
      %p90 = scmp.eq.s32.totalorder %s19, 3
      %p91 = scmp.ne.s32.totalorder %s86, %s88
      %p92 = scmp.eq.s32.totalorder %s19, 0
      %p93 = por %p91, %p92
      %p94 = scmp.ne.s32.totalorder %s86, %s88
      %p95 = scmp.eq.s32.totalorder %s24, 3
      %p96 = por %p94, %p95
      %p97 = scmp.ne.s32.totalorder %s88, %s89
      %p98 = scmp.eq.s32.totalorder %s24, 0
      %p99 = por %p97, %p98
      %p100 = scmp.ne.s32.totalorder %s88, %s89
      %p101 = scmp.eq.s32.totalorder %s25, 3
      %p102 = por %p100, %p101
      %p104 = scmp.ne.s32.totalorder %s89, %s103
      %p105 = scmp.eq.s32.totalorder %s25, 0
      %p106 = por %p104, %p105
      %s108 = sadd.s32 %s107, 1
      %p111 = scmp.eq.s32.totalorder %s19, 3
      %p112 = scmp.ne.s32.totalorder %s107, %s109
      %p113 = scmp.eq.s32.totalorder %s19, 0
      %p114 = por %p112, %p113
      %p115 = scmp.ne.s32.totalorder %s107, %s109
      %p116 = scmp.eq.s32.totalorder %s24, 3
      %p117 = por %p115, %p116
      %p118 = scmp.ne.s32.totalorder %s109, %s110
      %p119 = scmp.eq.s32.totalorder %s24, 0
      %p120 = por %p118, %p119
      %p121 = scmp.ne.s32.totalorder %s109, %s110
      %p122 = scmp.eq.s32.totalorder %s25, 3
      %p123 = por %p121, %p122
      %p125 = scmp.ne.s32.totalorder %s110, %s124
      %p126 = scmp.eq.s32.totalorder %s25, 0
      %p127 = por %p125, %p126
      %s129 = sadd.s32 %s128, 1
      %p132 = scmp.eq.s32.totalorder %s19, 3
      %p133 = scmp.ne.s32.totalorder %s128, %s130
      %p134 = scmp.eq.s32.totalorder %s19, 0
      %p135 = por %p133, %p134
      %p136 = scmp.ne.s32.totalorder %s128, %s130
      %p137 = scmp.eq.s32.totalorder %s24, 3
      %p138 = por %p136, %p137
      %p139 = scmp.ne.s32.totalorder %s130, %s131
      %p140 = scmp.eq.s32.totalorder %s24, 0
      %p141 = por %p139, %p140
      %p142 = scmp.ne.s32.totalorder %s130, %s131
      %p143 = scmp.eq.s32.totalorder %s25, 3
      %p144 = por %p142, %p143
      %p146 = scmp.ne.s32.totalorder %s131, %s145
      %p147 = scmp.eq.s32.totalorder %s25, 0
      %p148 = por %p146, %p147
      %s149 = ssub.s32 %s26, %s38
      %s150 = ssub.s32 %s27, %s34
      %s151 = sor.u32 %s149, %s150
      %p152 = scmp.eq.s32.totalorder %s151, 0
      %s154 = sadd.s32 %s153, 1
      %s155 = scalar_select %p152, %s153, %s154
      %p158 = pneg %p152
      %p159 = scmp.eq.s32.totalorder %s19, 3
      %p160 = por %p158, %p159
      %p161 = scmp.ne.s32.totalorder %s153, %s156
      %p162 = scmp.eq.s32.totalorder %s19, 0
      %p163 = por %p161, %p162
      %p164 = scmp.ne.s32.totalorder %s153, %s156
      %p165 = scmp.eq.s32.totalorder %s24, 3
      %p166 = por %p164, %p165
      %p167 = scmp.ne.s32.totalorder %s156, %s157
      %p168 = scmp.eq.s32.totalorder %s24, 0
      %p169 = por %p167, %p168
      %p170 = scmp.ne.s32.totalorder %s156, %s157
      %p171 = scmp.eq.s32.totalorder %s25, 3
      %p172 = por %p170, %p171
      %p174 = scmp.ne.s32.totalorder %s157, %s173
      %p175 = scmp.eq.s32.totalorder %s25, 0
      %p176 = por %p174, %p175
      %p177 = scmp.le.s32.totalorder 1, %s19
      %p178 = scmp.lt.s32.totalorder %s19, 5
      %p179 = pnand %p177, %p178
      %p180 = pneg %p179
      // Predicated region
      $region9: #{tpu_custom_call.1} parent=5 // pred_check
        _
      $region10: #{tpu_custom_call.1} parent=5 // pred_check_branch
        %182 = sbr.rel (%p179) target = $region12
      $region11: #{tpu_custom_call.1} parent=5 // pred_region
        %s183 = ssub.s32 %s19, 1
        // Predicated region
        $region13: #{tpu_custom_call.1} parent=11 // pred_check
          %p184 = pneg %p78
        $region14: #{tpu_custom_call.1} parent=11 // pred_check_branch
          %186 = sbr.rel (%p184) target = $region16
        $region15: #{tpu_custom_call.1} parent=11 // pred_region
          %s188 = ssub.s32 1024, 1024
          %189 = vsyncadd [#allocation8], %s188
          %s190 = sshll.u32 [#allocation7], 4
          %s191 = int_to_ptr.vmem [resolvable:$true] %s190
          %196 = dma.hbm_to_vmem [thread:$0]  %s1, 1024, %s191, [#allocation8], 64, 64, 4
        $region16: #{tpu_custom_call.1} parent=11 // pred_fallthru
          _
        // Predicated region
        $region17: #{tpu_custom_call.1} parent=11 // pred_check
          %p197 = pneg %p99
        $region18: #{tpu_custom_call.1} parent=11 // pred_check_branch
          %199 = sbr.rel (%p197) target = $region20
        $region19: #{tpu_custom_call.1} parent=11 // pred_region
          %s201 = ssub.s32 9216, 9216
          %202 = vsyncadd [#allocation8], %s201
          %s203 = sshll.u32 [#allocation9], 4
          %s204 = int_to_ptr.vmem [resolvable:$true] %s203
          %209 = dma.hbm_to_vmem [thread:$0]  %s2, 9216, %s204, [#allocation8], 64, 64, 4
        $region20: #{tpu_custom_call.1} parent=11 // pred_fallthru
          _
        // Predicated region
        $region21: #{tpu_custom_call.1} parent=11 // pred_check
          %p210 = pneg %p120
        $region22: #{tpu_custom_call.1} parent=11 // pred_check_branch
          %212 = sbr.rel (%p210) target = $region24
        $region23: #{tpu_custom_call.1} parent=11 // pred_region
          %s214 = ssub.s32 1024, 1024
          %215 = vsyncadd [#allocation11], %s214
          %s216 = sshll.u32 [#allocation10], 4
          %s217 = int_to_ptr.vmem [resolvable:$true] %s216
          %222 = dma.hbm_to_vmem [thread:$0]  %s3, 1024, %s217, [#allocation11], 64, 64, 4
        $region24: #{tpu_custom_call.1} parent=11 // pred_fallthru
          _
        // Predicated region
        $region25: #{tpu_custom_call.1} parent=11 // pred_check
          %p223 = pneg %p141
        $region26: #{tpu_custom_call.1} parent=11 // pred_check_branch
          %225 = sbr.rel (%p223) target = $region28
        $region27: #{tpu_custom_call.1} parent=11 // pred_region
          %s227 = ssub.s32 1024, 1024
          %228 = vsyncadd [#allocation11], %s227
          %s229 = sshll.u32 [#allocation12], 4
          %s230 = int_to_ptr.vmem [resolvable:$true] %s229
          %235 = dma.hbm_to_vmem [thread:$0]  %s4, 1024, %s230, [#allocation11], 64, 64, 4
        $region28: #{tpu_custom_call.1} parent=11 // pred_fallthru
          _
      $region12: #{tpu_custom_call.1} parent=5 // pred_fallthru
        _
      %p236 = scmp.lt.s32.totalorder %s19, 4
      // Predicated region
      $region29: #{tpu_custom_call.1} parent=5 // pred_check
        %p237 = pneg %p236
      $region30: #{tpu_custom_call.1} parent=5 // pred_check_branch
        %239 = sbr.rel (%p237) target = $region32
      $region31: #{tpu_custom_call.1} parent=5 // pred_region
        // Predicated region
        $region33: #{tpu_custom_call.1} parent=31 // pred_check
          %p240 = pneg %p51
        $region34: #{tpu_custom_call.1} parent=31 // pred_check_branch
          %242 = sbr.rel (%p240) target = $region36
        $region35: #{tpu_custom_call.1} parent=31 // pred_region
          %s243 = sand.u32 %s41, 1
          %s244 = scalar_lea.sflag [#allocation5], %s243
          %s245 = sand.u32 %s41, 1
          %s246 = smul.addr %s245, 448
          %s247 = scalar_lea.vmem [#allocation4], %s246
          %s249 = ssub.s32 7168, 7168
          %250 = vsyncadd %s244, %s249
          %s251 = smul.addr %s26, 56
          %s252 = smul.addr %s251, 128
          %s253 = scalar_lea.hbm %s0, %s252
          %s254 = sshll.u32 %s247, 4
          %s255 = int_to_ptr.vmem [resolvable:$true] %s254
          %260 = dma.hbm_to_vmem [thread:$0]  %s253, 7168, %s255, %s244, 128, 128, 8
        $region36: #{tpu_custom_call.1} parent=31 // pred_fallthru
          _
      $region32: #{tpu_custom_call.1} parent=5 // pred_fallthru
        _
      %p261 = scmp.le.s32.totalorder 1, %s19
      %p262 = scmp.lt.s32.totalorder %s19, 5
      %p263 = pnand %p261, %p262
      %p264 = pneg %p263
      // Predicated region
      $region37: #{tpu_custom_call.1} parent=5 // pred_check
        _
      $region38: #{tpu_custom_call.1} parent=5 // pred_check_branch
        %266 = sbr.rel (%p263) target = $region40
      $region39: #{tpu_custom_call.1} parent=5 // pred_region
        %s267 = ssub.s32 %s19, 1
        %s268 = sand.u32 %s44, 1
        %s269 = scalar_lea.sflag [#allocation5], %s268
        %s270 = sand.u32 %s44, 1
        %s271 = smul.addr %s270, 448
        %s272 = scalar_lea.vmem [#allocation4], %s271
        // Predicated region
        $region41: #{tpu_custom_call.1} parent=39 // pred_check
          %p273 = pneg %p57
        $region42: #{tpu_custom_call.1} parent=39 // pred_check_branch
          %275 = sbr.rel (%p273) target = $region44
        $region43: #{tpu_custom_call.1} parent=39 // pred_region
          %276 = dma.done %s269, 7168
        $region44: #{tpu_custom_call.1} parent=39 // pred_fallthru
          _
        // Predicated region
        $region45: #{tpu_custom_call.1} parent=39 // pred_check
          %p277 = pneg %p78
        $region46: #{tpu_custom_call.1} parent=39 // pred_check_branch
          %279 = sbr.rel (%p277) target = $region48
        $region47: #{tpu_custom_call.1} parent=39 // pred_region
          %280 = dma.done [#allocation8], 1024
        $region48: #{tpu_custom_call.1} parent=39 // pred_fallthru
          _
        // Predicated region
        $region49: #{tpu_custom_call.1} parent=39 // pred_check
          %p281 = pneg %p99
        $region50: #{tpu_custom_call.1} parent=39 // pred_check_branch
          %283 = sbr.rel (%p281) target = $region52
        $region51: #{tpu_custom_call.1} parent=39 // pred_region
          %284 = dma.done [#allocation8], 9216
        $region52: #{tpu_custom_call.1} parent=39 // pred_fallthru
          _
        // Predicated region
        $region53: #{tpu_custom_call.1} parent=39 // pred_check
          %p285 = pneg %p120
        $region54: #{tpu_custom_call.1} parent=39 // pred_check_branch
          %287 = sbr.rel (%p285) target = $region56
        $region55: #{tpu_custom_call.1} parent=39 // pred_region
          %288 = dma.done [#allocation11], 1024
        $region56: #{tpu_custom_call.1} parent=39 // pred_fallthru
          _
        // Predicated region
        $region57: #{tpu_custom_call.1} parent=39 // pred_check
          %p289 = pneg %p141
        $region58: #{tpu_custom_call.1} parent=39 // pred_check_branch
          %291 = sbr.rel (%p289) target = $region60
        $region59: #{tpu_custom_call.1} parent=39 // pred_region
          %292 = dma.done [#allocation11], 1024
        $region60: #{tpu_custom_call.1} parent=39 // pred_fallthru
          _
        %s293 = sand.u32 %s44, 1
        %s294 = scalar_lea.sflag [#allocation5], %s293
        %s295 = sand.u32 %s44, 1
        %s296 = smul.addr %s295, 448
        %s297 = scalar_lea.vmem [#allocation4], %s296
        %p298 = pneg %p57
        %p299 = pneg %p54
        %p300 = pneg %p78
        %p301 = pneg %p75
        %p302 = pneg %p99
        %p303 = pneg %p96
        %p304 = pneg %p120
        %p305 = pneg %p117
        %p306 = pneg %p141
        %p307 = pneg %p138
        %p308 = pneg %p169
        %p309 = pneg %p166
        %s310 = sand.u32 %s156, 1
        %s311 = scalar_lea.sflag [#allocation6], %s310
        %s312 = sand.u32 %s156, 1
        %s313 = smul.addr %s312, 32
        %s314 = scalar_lea.vmem [#allocation13], %s313
        %s315 = smul.u32 4, %s29
        %s317 = smul.u32 %s29, 192
        %s318 = scalar_lea.vmem %s272, %s317 [#allocation4]
        %v319 = vld [vmem:[%s318] sm:$0xff]
        %v320 = vld [vmem:[%s318 + $0x8] sm:$0xff]
        %v321 = vld [vmem:[%s318 + $0x10] sm:$0xff]
        %v322 = vld [vmem:[%s318 + $0x18] sm:$0xff]
        %v323 = vld [vmem:[%s318 + $0x20] sm:$0xff]
        %v324 = vld [vmem:[%s318 + $0x28] sm:$0xff]
        %v325 = vld [vmem:[%s318 + $0x30] sm:$0xff]
        %v326 = vld [vmem:[%s318 + $0x38] sm:$0xff]
        %v327 = vld [vmem:[%s318 + $0x40] sm:$0xff]
        %v328 = vld [vmem:[%s318 + $0x48] sm:$0xff]
        %v329 = vld [vmem:[%s318 + $0x50] sm:$0xff]
        %v330 = vld [vmem:[%s318 + $0x58] sm:$0xff]
        %v331 = vld [vmem:[%s318 + $0x60] sm:$0xff]
        %v332 = vld [vmem:[%s318 + $0x68] sm:$0xff]
        %v333 = vld [vmem:[%s318 + $0x70] sm:$0xff]
        %v334 = vld [vmem:[%s318 + $0x78] sm:$0xff]
        %v335 = vld [vmem:[%s318 + $0x80] sm:$0xff]
        %v336 = vld [vmem:[%s318 + $0x88] sm:$0xff]
        %v337 = vld [vmem:[%s318 + $0x90] sm:$0xff]
        %v338 = vld [vmem:[%s318 + $0x98] sm:$0xff]
        %v339 = vld [vmem:[%s318 + $0xa0] sm:$0xff]
        %v340 = vld [vmem:[%s318 + $0xa8] sm:$0xff]
        %v341 = vld [vmem:[%s318 + $0xb0] sm:$0xff]
        %v342 = vld [vmem:[%s318 + $0xb8] sm:$0xff]
        %v343 = vld [vmem:[%s318 + $0xc0] sm:$0xff]
        %v344 = vld [vmem:[%s318 + $0xc8] sm:$0xff]
        %v345 = vld [vmem:[%s318 + $0xd0] sm:$0xff]
        %v346 = vld [vmem:[%s318 + $0xd8] sm:$0xff]
        %v347 = vld [vmem:[%s318 + $0xe0] sm:$0xff]
        %v348 = vld [vmem:[%s318 + $0xe8] sm:$0xff]
        %v349 = vld [vmem:[%s318 + $0xf0] sm:$0xff]
        %v350 = vld [vmem:[%s318 + $0xf8] sm:$0xff]
        %351 = vst [vmem:[#allocation3] sm:$0xff] %v319
        %352 = vst [vmem:[#allocation3 + $0x8] sm:$0xff] %v320
        %353 = vst [vmem:[#allocation3 + $0x10] sm:$0xff] %v321
        %354 = vst [vmem:[#allocation3 + $0x18] sm:$0xff] %v322
        %355 = vst [vmem:[#allocation3 + $0x20] sm:$0xff] %v323
        %356 = vst [vmem:[#allocation3 + $0x28] sm:$0xff] %v324
        %357 = vst [vmem:[#allocation3 + $0x30] sm:$0xff] %v325
        %358 = vst [vmem:[#allocation3 + $0x38] sm:$0xff] %v326
        %359 = vst [vmem:[#allocation3 + $0x40] sm:$0xff] %v327
        %360 = vst [vmem:[#allocation3 + $0x48] sm:$0xff] %v328
        %361 = vst [vmem:[#allocation3 + $0x50] sm:$0xff] %v329
        %362 = vst [vmem:[#allocation3 + $0x58] sm:$0xff] %v330
        %363 = vst [vmem:[#allocation3 + $0x60] sm:$0xff] %v331
        %364 = vst [vmem:[#allocation3 + $0x68] sm:$0xff] %v332
        %365 = vst [vmem:[#allocation3 + $0x70] sm:$0xff] %v333
        %366 = vst [vmem:[#allocation3 + $0x78] sm:$0xff] %v334
        %367 = vst [vmem:[#allocation3 + $0x80] sm:$0xff] %v335
        %368 = vst [vmem:[#allocation3 + $0x88] sm:$0xff] %v336
        %369 = vst [vmem:[#allocation3 + $0x90] sm:$0xff] %v337
        %370 = vst [vmem:[#allocation3 + $0x98] sm:$0xff] %v338
        %371 = vst [vmem:[#allocation3 + $0xa0] sm:$0xff] %v339
        %372 = vst [vmem:[#allocation3 + $0xa8] sm:$0xff] %v340
        %373 = vst [vmem:[#allocation3 + $0xb0] sm:$0xff] %v341
        %374 = vst [vmem:[#allocation3 + $0xb8] sm:$0xff] %v342
        %375 = vst [vmem:[#allocation3 + $0xc0] sm:$0xff] %v343
        %376 = vst [vmem:[#allocation3 + $0xc8] sm:$0xff] %v344
        %377 = vst [vmem:[#allocation3 + $0xd0] sm:$0xff] %v345
        %378 = vst [vmem:[#allocation3 + $0xd8] sm:$0xff] %v346
        %379 = vst [vmem:[#allocation3 + $0xe0] sm:$0xff] %v347
        %380 = vst [vmem:[#allocation3 + $0xe8] sm:$0xff] %v348
        %381 = vst [vmem:[#allocation3 + $0xf0] sm:$0xff] %v349
        %382 = vst [vmem:[#allocation3 + $0xf8] sm:$0xff] %v350
        %v383 = vld [vmem:[#allocation3] sm:$0xff]
        %v384 = vld [vmem:[#allocation3 + $0x8] sm:$0xff]
        %v385 = vld [vmem:[#allocation3 + $0x10] sm:$0xff]
        %v386 = vld [vmem:[#allocation3 + $0x18] sm:$0xff]
        %v387 = vld [vmem:[#allocation3 + $0x20] sm:$0xff]
        %v388 = vld [vmem:[#allocation3 + $0x28] sm:$0xff]
        %v389 = vld [vmem:[#allocation3 + $0x30] sm:$0xff]
        %v390 = vld [vmem:[#allocation3 + $0x38] sm:$0xff]
        %v391 = vld [vmem:[#allocation3 + $0x40] sm:$0xff]
        %v392 = vld [vmem:[#allocation3 + $0x48] sm:$0xff]
        %v393 = vld [vmem:[#allocation3 + $0x50] sm:$0xff]
        %v394 = vld [vmem:[#allocation3 + $0x58] sm:$0xff]
        %v395 = vld [vmem:[#allocation3 + $0x60] sm:$0xff]
        %v396 = vld [vmem:[#allocation3 + $0x68] sm:$0xff]
        %v397 = vld [vmem:[#allocation3 + $0x70] sm:$0xff]
        %v398 = vld [vmem:[#allocation3 + $0x78] sm:$0xff]
        %v399 = vld [vmem:[#allocation3 + $0x80] sm:$0xff]
        %v400 = vld [vmem:[#allocation3 + $0x88] sm:$0xff]
        %v401 = vld [vmem:[#allocation3 + $0x90] sm:$0xff]
        %v402 = vld [vmem:[#allocation3 + $0x98] sm:$0xff]
        %v403 = vld [vmem:[#allocation3 + $0xa0] sm:$0xff]
        %v404 = vld [vmem:[#allocation3 + $0xa8] sm:$0xff]
        %v405 = vld [vmem:[#allocation3 + $0xb0] sm:$0xff]
        %v406 = vld [vmem:[#allocation3 + $0xb8] sm:$0xff]
        %v407 = vld [vmem:[#allocation3 + $0xc0] sm:$0xff]
        %v408 = vld [vmem:[#allocation3 + $0xc8] sm:$0xff]
        %v409 = vld [vmem:[#allocation3 + $0xd0] sm:$0xff]
        %v410 = vld [vmem:[#allocation3 + $0xd8] sm:$0xff]
        %v411 = vld [vmem:[#allocation3 + $0xe0] sm:$0xff]
        %v412 = vld [vmem:[#allocation3 + $0xe8] sm:$0xff]
        %v413 = vld [vmem:[#allocation3 + $0xf0] sm:$0xff]
        %v414 = vld [vmem:[#allocation3 + $0xf8] sm:$0xff]
        %v415 = vpack.c.bf16 %v384, %v383
        %v416 = vpack.c.bf16 %v386, %v385
        %v417 = vpack.c.bf16 %v388, %v387
        %v418 = vpack.c.bf16 %v390, %v389
        %v419 = vpack.c.bf16 %v392, %v391
        %v420 = vpack.c.bf16 %v394, %v393
        %v421 = vpack.c.bf16 %v396, %v395
        %v422 = vpack.c.bf16 %v398, %v397
        %v423 = vpack.c.bf16 %v400, %v399
        %v424 = vpack.c.bf16 %v402, %v401
        %v425 = vpack.c.bf16 %v404, %v403
        %v426 = vpack.c.bf16 %v406, %v405
        %v427 = vpack.c.bf16 %v408, %v407
        %v428 = vpack.c.bf16 %v410, %v409
        %v429 = vpack.c.bf16 %v412, %v411
        %v430 = vpack.c.bf16 %v414, %v413
        %v431 = vld [vmem:[#allocation7] sm:$0xf]
        %v432 = vld [vmem:[#allocation7 + $0x4] sm:$0xf]
        %v433 = vld [vmem:[#allocation7 + $0x8] sm:$0xf]
        %v434 = vld [vmem:[#allocation7 + $0xc] sm:$0xf]
        %v435 = vld [vmem:[#allocation7 + $0x10] sm:$0xf]
        %v436 = vld [vmem:[#allocation7 + $0x14] sm:$0xf]
        %v437 = vld [vmem:[#allocation7 + $0x18] sm:$0xf]
        %v438 = vld [vmem:[#allocation7 + $0x1c] sm:$0xf]
        %v439 = vld [vmem:[#allocation7 + $0x20] sm:$0xf]
        %v440 = vld [vmem:[#allocation7 + $0x24] sm:$0xf]
        %v441 = vld [vmem:[#allocation7 + $0x28] sm:$0xf]
        %v442 = vld [vmem:[#allocation7 + $0x2c] sm:$0xf]
        %v443 = vld [vmem:[#allocation7 + $0x30] sm:$0xf]
        %v444 = vld [vmem:[#allocation7 + $0x34] sm:$0xf]
        %v445 = vld [vmem:[#allocation7 + $0x38] sm:$0xf]
        %v446 = vld [vmem:[#allocation7 + $0x3c] sm:$0xf]
        %v463 = vunpack.c.l.b16 %v431
        %v464 = vunpack.c.l.b16 %v432
        %v465 = vunpack.c.l.b16 %v433
        %v466 = vunpack.c.l.b16 %v434
        %v467 = vunpack.c.l.b16 %v435
        %v468 = vunpack.c.l.b16 %v436
        %v469 = vunpack.c.l.b16 %v437
        %v470 = vunpack.c.l.b16 %v438
        %v471 = vunpack.c.l.b16 %v439
        %v472 = vunpack.c.l.b16 %v440
        %v473 = vunpack.c.l.b16 %v441
        %v474 = vunpack.c.l.b16 %v442
        %v475 = vunpack.c.l.b16 %v443
        %v476 = vunpack.c.l.b16 %v444
        %v477 = vunpack.c.l.b16 %v445
        %v478 = vunpack.c.l.b16 %v446
        %v479 = vpack.c.b16 %v464, %v463
        %v480 = vpack.c.b16 %v466, %v465
        %v481 = vpack.c.b16 %v468, %v467
        %v482 = vpack.c.b16 %v470, %v469
        %v483 = vpack.c.b16 %v472, %v471
        %v484 = vpack.c.b16 %v474, %v473
        %v485 = vpack.c.b16 %v476, %v475
        %v486 = vpack.c.b16 %v478, %v477
        %495 = vmatprep.subr.bf16.mxu0 0
        %496 = vmatpush1.bf16.msra.mxu0 %v479
        %497 = vmatprep.subr.bf16.mxu0 0
        %498 = vmatpush1.bf16.msra.mxu0 %v480
        %499 = vmatprep.subr.bf16.mxu0 0
        %500 = vmatpush1.bf16.msra.mxu0 %v481
        %501 = vmatprep.subr.bf16.mxu0 0
        %502 = vmatpush1.bf16.msra.mxu0 %v482
        %503 = vmatprep.subr.bf16.mxu0 0
        %504 = vmatpush1.bf16.msra.mxu0 %v483
        %505 = vmatprep.subr.bf16.mxu0 0
        %506 = vmatpush1.bf16.msra.mxu0 %v484
        %507 = vmatprep.subr.bf16.mxu0 0
        %508 = vmatpush1.bf16.msra.mxu0 %v485
        %509 = vmatprep.subr.bf16.mxu0 0
        %510 = vmatpush1.bf16.msra.mxu0 %v486
        %511 = vmatprep.subr.bf16.mxu0 0
        %512 = vmatpush1.bf16.msra.mxu0 0
        %513 = vmatprep.subr.bf16.mxu0 0
        %514 = vmatpush1.bf16.msra.mxu0 0
        %515 = vmatprep.subr.bf16.mxu0 0
        %516 = vmatpush1.bf16.msra.mxu0 0
        %517 = vmatprep.subr.bf16.mxu0 0
        %518 = vmatpush1.bf16.msra.mxu0 0
        %519 = vmatprep.subr.bf16.mxu0 0
        %520 = vmatpush1.bf16.msra.mxu0 0
        %521 = vmatprep.subr.bf16.mxu0 0
        %522 = vmatpush1.bf16.msra.mxu0 0
        %523 = vmatprep.subr.bf16.mxu0 0
        %524 = vmatpush1.bf16.msra.mxu0 0
        %525 = vmatprep.subr.bf16.mxu0 0
        %526 = vmatpush1.bf16.msra.mxu0 0
        %527 = vmatprep.mubr.bf16.mxu0 0
        %528 = vmatmul.mubr.bf16.gmra.mrb[0].mxu0 %v415
        %v529 = vpop.f32.mrb[0].mxu0
        %v530 = vadd.f32 0.0, %v529
        %v531 = vpop.f32.mrb[0].mxu0
        %v532 = vpop.f32.mrb[0].mxu0
        %v533 = vadd.f32 0.0, %v532
        %v534 = vpop.f32.mrb[0].mxu0
        %535 = vmatprep.mubr.bf16.mxu0 0
        %536 = vmatmul.mubr.bf16.gmra.mrb[0].mxu0 %v416
        %v537 = vpop.f32.mrb[0].mxu0
        %v538 = vadd.f32 0.0, %v537
        %v539 = vpop.f32.mrb[0].mxu0
        %v540 = vpop.f32.mrb[0].mxu0
        %v541 = vadd.f32 0.0, %v540
        %v542 = vpop.f32.mrb[0].mxu0
        %543 = vmatprep.mubr.bf16.mxu0 0
        %544 = vmatmul.mubr.bf16.gmra.mrb[0].mxu0 %v417
        %v545 = vpop.f32.mrb[0].mxu0
        %v546 = vadd.f32 0.0, %v545
        %v547 = vpop.f32.mrb[0].mxu0
        %v548 = vpop.f32.mrb[0].mxu0
        %v549 = vadd.f32 0.0, %v548
        %v550 = vpop.f32.mrb[0].mxu0
        %551 = vmatprep.mubr.bf16.mxu0 0
        %552 = vmatmul.mubr.bf16.gmra.mrb[0].mxu0 %v418
        %v553 = vpop.f32.mrb[0].mxu0
        %v554 = vadd.f32 0.0, %v553
        %v555 = vpop.f32.mrb[0].mxu0
        %v556 = vpop.f32.mrb[0].mxu0
        %v557 = vadd.f32 0.0, %v556
        %v558 = vpop.f32.mrb[0].mxu0
        %559 = vmatprep.mubr.bf16.mxu0 0
        %560 = vmatmul.mubr.bf16.gmra.mrb[0].mxu0 %v419
        %v561 = vpop.f32.mrb[0].mxu0
        %v562 = vadd.f32 0.0, %v561
        %v563 = vpop.f32.mrb[0].mxu0
        %v564 = vpop.f32.mrb[0].mxu0
        %v565 = vadd.f32 0.0, %v564
        %v566 = vpop.f32.mrb[0].mxu0
        %567 = vmatprep.mubr.bf16.mxu0 0
        %568 = vmatmul.mubr.bf16.gmra.mrb[0].mxu0 %v420
        %v569 = vpop.f32.mrb[0].mxu0
        %v570 = vadd.f32 0.0, %v569
        %v571 = vpop.f32.mrb[0].mxu0
        %v572 = vpop.f32.mrb[0].mxu0
        %v573 = vadd.f32 0.0, %v572
        %v574 = vpop.f32.mrb[0].mxu0
        %575 = vmatprep.mubr.bf16.mxu0 0
        %576 = vmatmul.mubr.bf16.gmra.mrb[0].mxu0 %v421
        %v577 = vpop.f32.mrb[0].mxu0
        %v578 = vadd.f32 0.0, %v577
        %v579 = vpop.f32.mrb[0].mxu0
        %v580 = vpop.f32.mrb[0].mxu0
        %v581 = vadd.f32 0.0, %v580
        %v582 = vpop.f32.mrb[0].mxu0
        %583 = vmatprep.mubr.bf16.mxu0 0
        %584 = vmatmul.mubr.bf16.gmra.mrb[0].mxu0 %v422
        %v585 = vpop.f32.mrb[0].mxu0
        %v586 = vadd.f32 0.0, %v585
        %v587 = vpop.f32.mrb[0].mxu0
        %v588 = vpop.f32.mrb[0].mxu0
        %v589 = vadd.f32 0.0, %v588
        %v590 = vpop.f32.mrb[0].mxu0
        %591 = vmatprep.mubr.bf16.mxu0 0
        %592 = vmatmul.mubr.bf16.gmra.mrb[0].mxu0 %v423
        %v593 = vpop.f32.mrb[0].mxu0
        %v594 = vadd.f32 0.0, %v593
        %v595 = vpop.f32.mrb[0].mxu0
        %v596 = vpop.f32.mrb[0].mxu0
        %v597 = vadd.f32 0.0, %v596
        %v598 = vpop.f32.mrb[0].mxu0
        %599 = vmatprep.mubr.bf16.mxu0 0
        %600 = vmatmul.mubr.bf16.gmra.mrb[0].mxu0 %v424
        %v601 = vpop.f32.mrb[0].mxu0
        %v602 = vadd.f32 0.0, %v601
        %v603 = vpop.f32.mrb[0].mxu0
        %v604 = vpop.f32.mrb[0].mxu0
        %v605 = vadd.f32 0.0, %v604
        %v606 = vpop.f32.mrb[0].mxu0
        %607 = vmatprep.mubr.bf16.mxu0 0
        %608 = vmatmul.mubr.bf16.gmra.mrb[0].mxu0 %v425
        %v609 = vpop.f32.mrb[0].mxu0
        %v610 = vadd.f32 0.0, %v609
        %v611 = vpop.f32.mrb[0].mxu0
        %v612 = vpop.f32.mrb[0].mxu0
        %v613 = vadd.f32 0.0, %v612
        %v614 = vpop.f32.mrb[0].mxu0
        %615 = vmatprep.mubr.bf16.mxu0 0
        %616 = vmatmul.mubr.bf16.gmra.mrb[0].mxu0 %v426
        %v617 = vpop.f32.mrb[0].mxu0
        %v618 = vadd.f32 0.0, %v617
        %v619 = vpop.f32.mrb[0].mxu0
        %v620 = vpop.f32.mrb[0].mxu0
        %v621 = vadd.f32 0.0, %v620
        %v622 = vpop.f32.mrb[0].mxu0
        %623 = vmatprep.mubr.bf16.mxu0 0
        %624 = vmatmul.mubr.bf16.gmra.mrb[0].mxu0 %v427
        %v625 = vpop.f32.mrb[0].mxu0
        %v626 = vadd.f32 0.0, %v625
        %v627 = vpop.f32.mrb[0].mxu0
        %v628 = vpop.f32.mrb[0].mxu0
        %v629 = vadd.f32 0.0, %v628
        %v630 = vpop.f32.mrb[0].mxu0
        %631 = vmatprep.mubr.bf16.mxu0 0
        %632 = vmatmul.mubr.bf16.gmra.mrb[0].mxu0 %v428
        %v633 = vpop.f32.mrb[0].mxu0
        %v634 = vadd.f32 0.0, %v633
        %v635 = vpop.f32.mrb[0].mxu0
        %v636 = vpop.f32.mrb[0].mxu0
        %v637 = vadd.f32 0.0, %v636
        %v638 = vpop.f32.mrb[0].mxu0
        %639 = vmatprep.mubr.bf16.mxu0 0
        %640 = vmatmul.mubr.bf16.gmra.mrb[0].mxu0 %v429
        %v641 = vpop.f32.mrb[0].mxu0
        %v642 = vadd.f32 0.0, %v641
        %v643 = vpop.f32.mrb[0].mxu0
        %v644 = vpop.f32.mrb[0].mxu0
        %v645 = vadd.f32 0.0, %v644
        %v646 = vpop.f32.mrb[0].mxu0
        %647 = vmatprep.mubr.bf16.mxu0 0
        %648 = vmatmul.mubr.bf16.gmra.mrb[0].mxu0 %v430
        %v649 = vpop.f32.mrb[0].mxu0
        %v650 = vadd.f32 0.0, %v649
        %v651 = vpop.f32.mrb[0].mxu0
        %v652 = vpop.f32.mrb[0].mxu0
        %v653 = vadd.f32 0.0, %v652
        %v654 = vpop.f32.mrb[0].mxu0
        %655 = vdwg.mxu0
        %v656 = vmax.f32 %v530, 0.0
        %v657 = vmax.f32 %v533, 0.0
        %v658 = vmax.f32 %v538, 0.0
        %v659 = vmax.f32 %v541, 0.0
        %v660 = vmax.f32 %v546, 0.0
        %v661 = vmax.f32 %v549, 0.0
        %v662 = vmax.f32 %v554, 0.0
        %v663 = vmax.f32 %v557, 0.0
        %v664 = vmax.f32 %v562, 0.0
        %v665 = vmax.f32 %v565, 0.0
        %v666 = vmax.f32 %v570, 0.0
        %v667 = vmax.f32 %v573, 0.0
        %v668 = vmax.f32 %v578, 0.0
        %v669 = vmax.f32 %v581, 0.0
        %v670 = vmax.f32 %v586, 0.0
        %v671 = vmax.f32 %v589, 0.0
        %v672 = vmax.f32 %v594, 0.0
        %v673 = vmax.f32 %v597, 0.0
        %v674 = vmax.f32 %v602, 0.0
        %v675 = vmax.f32 %v605, 0.0
        %v676 = vmax.f32 %v610, 0.0
        %v677 = vmax.f32 %v613, 0.0
        %v678 = vmax.f32 %v618, 0.0
        %v679 = vmax.f32 %v621, 0.0
        %v680 = vmax.f32 %v626, 0.0
        %v681 = vmax.f32 %v629, 0.0
        %v682 = vmax.f32 %v634, 0.0
        %v683 = vmax.f32 %v637, 0.0
        %v684 = vmax.f32 %v642, 0.0
        %v685 = vmax.f32 %v645, 0.0
        %v686 = vmax.f32 %v650, 0.0
        %v687 = vmax.f32 %v653, 0.0
        %688 = vst [vmem:[#allocation2] sm:$0xff] %v656
        %689 = vst [vmem:[#allocation2 + $0x8] sm:$0xff] %v657
        %690 = vst [vmem:[#allocation2 + $0x10] sm:$0xff] %v658
        %691 = vst [vmem:[#allocation2 + $0x18] sm:$0xff] %v659
        %692 = vst [vmem:[#allocation2 + $0x20] sm:$0xff] %v660
        %693 = vst [vmem:[#allocation2 + $0x28] sm:$0xff] %v661
        %694 = vst [vmem:[#allocation2 + $0x30] sm:$0xff] %v662
        %695 = vst [vmem:[#allocation2 + $0x38] sm:$0xff] %v663
        %696 = vst [vmem:[#allocation2 + $0x40] sm:$0xff] %v664
        %697 = vst [vmem:[#allocation2 + $0x48] sm:$0xff] %v665
        %698 = vst [vmem:[#allocation2 + $0x50] sm:$0xff] %v666
        %699 = vst [vmem:[#allocation2 + $0x58] sm:$0xff] %v667
        %700 = vst [vmem:[#allocation2 + $0x60] sm:$0xff] %v668
        %701 = vst [vmem:[#allocation2 + $0x68] sm:$0xff] %v669
        %702 = vst [vmem:[#allocation2 + $0x70] sm:$0xff] %v670
        %703 = vst [vmem:[#allocation2 + $0x78] sm:$0xff] %v671
        %704 = vst [vmem:[#allocation2 + $0x80] sm:$0xff] %v672
        %705 = vst [vmem:[#allocation2 + $0x88] sm:$0xff] %v673
        %706 = vst [vmem:[#allocation2 + $0x90] sm:$0xff] %v674
        %707 = vst [vmem:[#allocation2 + $0x98] sm:$0xff] %v675
        %708 = vst [vmem:[#allocation2 + $0xa0] sm:$0xff] %v676
        %709 = vst [vmem:[#allocation2 + $0xa8] sm:$0xff] %v677
        %710 = vst [vmem:[#allocation2 + $0xb0] sm:$0xff] %v678
        %711 = vst [vmem:[#allocation2 + $0xb8] sm:$0xff] %v679
        %712 = vst [vmem:[#allocation2 + $0xc0] sm:$0xff] %v680
        %713 = vst [vmem:[#allocation2 + $0xc8] sm:$0xff] %v681
        %714 = vst [vmem:[#allocation2 + $0xd0] sm:$0xff] %v682
        %715 = vst [vmem:[#allocation2 + $0xd8] sm:$0xff] %v683
        %716 = vst [vmem:[#allocation2 + $0xe0] sm:$0xff] %v684
        %717 = vst [vmem:[#allocation2 + $0xe8] sm:$0xff] %v685
        %718 = vst [vmem:[#allocation2 + $0xf0] sm:$0xff] %v686
        %719 = vst [vmem:[#allocation2 + $0xf8] sm:$0xff] %v687
        %v720 = vld [vmem:[#allocation2] ss:$2 sm:$0xff]
        %s721 = scalar_lea.vmem [#allocation2], 16
        %v722 = vld [vmem:[%s721] ss:$2 sm:$0xff]
        %s723 = scalar_lea.vmem [#allocation2], 32
        %v724 = vld [vmem:[%s723] ss:$2 sm:$0xff]
        %s725 = scalar_lea.vmem [#allocation2], 48
        %v726 = vld [vmem:[%s725] ss:$2 sm:$0xff]
        %s727 = scalar_lea.vmem [#allocation2], 64
        %v728 = vld [vmem:[%s727] ss:$2 sm:$0xff]
        %s729 = scalar_lea.vmem [#allocation2], 80
        %v730 = vld [vmem:[%s729] ss:$2 sm:$0xff]
        %s731 = scalar_lea.vmem [#allocation2], 96
        %v732 = vld [vmem:[%s731] ss:$2 sm:$0xff]
        %s733 = scalar_lea.vmem [#allocation2], 112
        %v734 = vld [vmem:[%s733] ss:$2 sm:$0xff]
        %s735 = scalar_lea.vmem [#allocation2], 128
        %v736 = vld [vmem:[%s735] ss:$2 sm:$0xff]
        %s737 = scalar_lea.vmem [#allocation2], 144
        %v738 = vld [vmem:[%s737] ss:$2 sm:$0xff]
        %s739 = scalar_lea.vmem [#allocation2], 160
        %v740 = vld [vmem:[%s739] ss:$2 sm:$0xff]
        %s741 = scalar_lea.vmem [#allocation2], 176
        %v742 = vld [vmem:[%s741] ss:$2 sm:$0xff]
        %v743 = vpack.c.bf16 %v722, %v720
        %v744 = vpack.c.bf16 %v726, %v724
        %v745 = vpack.c.bf16 %v730, %v728
        %v746 = vpack.c.bf16 %v734, %v732
        %v747 = vpack.c.bf16 %v738, %v736
        %v748 = vpack.c.bf16 %v742, %v740
        %s749 = scalar_lea.vmem [#allocation2], 1
        %v750 = vld [vmem:[%s749] ss:$2 sm:$0xff]
        %s751 = scalar_lea.vmem [#allocation2], 17
        %v752 = vld [vmem:[%s751] ss:$2 sm:$0xff]
        %s753 = scalar_lea.vmem [#allocation2], 33
        %v754 = vld [vmem:[%s753] ss:$2 sm:$0xff]
        %s755 = scalar_lea.vmem [#allocation2], 49
        %v756 = vld [vmem:[%s755] ss:$2 sm:$0xff]
        %s757 = scalar_lea.vmem [#allocation2], 65
        %v758 = vld [vmem:[%s757] ss:$2 sm:$0xff]
        %s759 = scalar_lea.vmem [#allocation2], 81
        %v760 = vld [vmem:[%s759] ss:$2 sm:$0xff]
        %s761 = scalar_lea.vmem [#allocation2], 97
        %v762 = vld [vmem:[%s761] ss:$2 sm:$0xff]
        %s763 = scalar_lea.vmem [#allocation2], 113
        %v764 = vld [vmem:[%s763] ss:$2 sm:$0xff]
        %s765 = scalar_lea.vmem [#allocation2], 129
        %v766 = vld [vmem:[%s765] ss:$2 sm:$0xff]
        %s767 = scalar_lea.vmem [#allocation2], 145
        %v768 = vld [vmem:[%s767] ss:$2 sm:$0xff]
        %s769 = scalar_lea.vmem [#allocation2], 161
        %v770 = vld [vmem:[%s769] ss:$2 sm:$0xff]
        %s771 = scalar_lea.vmem [#allocation2], 177
        %v772 = vld [vmem:[%s771] ss:$2 sm:$0xff]
        %v773 = vpack.c.bf16 %v752, %v750
        %v774 = vpack.c.bf16 %v756, %v754
        %v775 = vpack.c.bf16 %v760, %v758
        %v776 = vpack.c.bf16 %v764, %v762
        %v777 = vpack.c.bf16 %v768, %v766
        %v778 = vpack.c.bf16 %v772, %v770
        %s779 = scalar_lea.vmem [#allocation2], 2
        %v780 = vld [vmem:[%s779] ss:$2 sm:$0xff]
        %s781 = scalar_lea.vmem [#allocation2], 18
        %v782 = vld [vmem:[%s781] ss:$2 sm:$0xff]
        %s783 = scalar_lea.vmem [#allocation2], 34
        %v784 = vld [vmem:[%s783] ss:$2 sm:$0xff]
        %s785 = scalar_lea.vmem [#allocation2], 50
        %v786 = vld [vmem:[%s785] ss:$2 sm:$0xff]
        %s787 = scalar_lea.vmem [#allocation2], 66
        %v788 = vld [vmem:[%s787] ss:$2 sm:$0xff]
        %s789 = scalar_lea.vmem [#allocation2], 82
        %v790 = vld [vmem:[%s789] ss:$2 sm:$0xff]
        %s791 = scalar_lea.vmem [#allocation2], 98
        %v792 = vld [vmem:[%s791] ss:$2 sm:$0xff]
        %s793 = scalar_lea.vmem [#allocation2], 114
        %v794 = vld [vmem:[%s793] ss:$2 sm:$0xff]
        %s795 = scalar_lea.vmem [#allocation2], 130
        %v796 = vld [vmem:[%s795] ss:$2 sm:$0xff]
        %s797 = scalar_lea.vmem [#allocation2], 146
        %v798 = vld [vmem:[%s797] ss:$2 sm:$0xff]
        %s799 = scalar_lea.vmem [#allocation2], 162
        %v800 = vld [vmem:[%s799] ss:$2 sm:$0xff]
        %s801 = scalar_lea.vmem [#allocation2], 178
        %v802 = vld [vmem:[%s801] ss:$2 sm:$0xff]
        %v803 = vpack.c.bf16 %v782, %v780
        %v804 = vpack.c.bf16 %v786, %v784
        %v805 = vpack.c.bf16 %v790, %v788
        %v806 = vpack.c.bf16 %v794, %v792
        %v807 = vpack.c.bf16 %v798, %v796
        %v808 = vpack.c.bf16 %v802, %v800
        %v809 = vld [vmem:[#allocation9] sm:$0xf]
        %v810 = vld [vmem:[#allocation9 + $0x4] sm:$0xf]
        %v811 = vld [vmem:[#allocation9 + $0x8] sm:$0xf]
        %v812 = vld [vmem:[#allocation9 + $0xc] sm:$0xf]
        %v813 = vld [vmem:[#allocation9 + $0x10] sm:$0xf]
        %v814 = vld [vmem:[#allocation9 + $0x14] sm:$0xf]
        %v815 = vld [vmem:[#allocation9 + $0x18] sm:$0xf]
        %v816 = vld [vmem:[#allocation9 + $0x1c] sm:$0xf]
        %v817 = vld [vmem:[#allocation9 + $0x20] sm:$0xf]
        %v818 = vld [vmem:[#allocation9 + $0x24] sm:$0xf]
        %v819 = vld [vmem:[#allocation9 + $0x28] sm:$0xf]
        %v820 = vld [vmem:[#allocation9 + $0x2c] sm:$0xf]
        %v821 = vld [vmem:[#allocation9 + $0x30] sm:$0xf]
        %v822 = vld [vmem:[#allocation9 + $0x34] sm:$0xf]
        %v823 = vld [vmem:[#allocation9 + $0x38] sm:$0xf]
        %v824 = vld [vmem:[#allocation9 + $0x3c] sm:$0xf]
        %v825 = vld [vmem:[#allocation9 + $0x40] sm:$0xf]
        %v826 = vld [vmem:[#allocation9 + $0x44] sm:$0xf]
        %v827 = vld [vmem:[#allocation9 + $0x48] sm:$0xf]
        %v828 = vld [vmem:[#allocation9 + $0x4c] sm:$0xf]
        %v829 = vld [vmem:[#allocation9 + $0x50] sm:$0xf]
        %v830 = vld [vmem:[#allocation9 + $0x54] sm:$0xf]
        %v831 = vld [vmem:[#allocation9 + $0x58] sm:$0xf]
        %v832 = vld [vmem:[#allocation9 + $0x5c] sm:$0xf]
        %v833 = vld [vmem:[#allocation9 + $0x60] sm:$0xf]
        %v834 = vld [vmem:[#allocation9 + $0x64] sm:$0xf]
        %v835 = vld [vmem:[#allocation9 + $0x68] sm:$0xf]
        %v836 = vld [vmem:[#allocation9 + $0x6c] sm:$0xf]
        %v837 = vld [vmem:[#allocation9 + $0x70] sm:$0xf]
        %v838 = vld [vmem:[#allocation9 + $0x74] sm:$0xf]
        %v839 = vld [vmem:[#allocation9 + $0x78] sm:$0xf]
        %v840 = vld [vmem:[#allocation9 + $0x7c] sm:$0xf]
        %v841 = vld [vmem:[#allocation9 + $0x80] sm:$0xf]
        %v842 = vld [vmem:[#allocation9 + $0x84] sm:$0xf]
        %v843 = vld [vmem:[#allocation9 + $0x88] sm:$0xf]
        %v844 = vld [vmem:[#allocation9 + $0x8c] sm:$0xf]
        %v845 = vld [vmem:[#allocation9 + $0x90] sm:$0xf]
        %v846 = vld [vmem:[#allocation9 + $0x94] sm:$0xf]
        %v847 = vld [vmem:[#allocation9 + $0x98] sm:$0xf]
        %v848 = vld [vmem:[#allocation9 + $0x9c] sm:$0xf]
        %v849 = vld [vmem:[#allocation9 + $0xa0] sm:$0xf]
        %v850 = vld [vmem:[#allocation9 + $0xa4] sm:$0xf]
        %v851 = vld [vmem:[#allocation9 + $0xa8] sm:$0xf]
        %v852 = vld [vmem:[#allocation9 + $0xac] sm:$0xf]
        %v853 = vld [vmem:[#allocation9 + $0xb0] sm:$0xf]
        %v854 = vld [vmem:[#allocation9 + $0xb4] sm:$0xf]
        %v855 = vld [vmem:[#allocation9 + $0xb8] sm:$0xf]
        %v856 = vld [vmem:[#allocation9 + $0xbc] sm:$0xf]
        %s857 = scalar_lea.vmem [#allocation2], 24
        %v858 = vld [vmem:[%s857] ss:$2 sm:$0xff]
        %s859 = scalar_lea.vmem [#allocation2], 40
        %v860 = vld [vmem:[%s859] ss:$2 sm:$0xff]
        %s861 = scalar_lea.vmem [#allocation2], 56
        %v862 = vld [vmem:[%s861] ss:$2 sm:$0xff]
        %s863 = scalar_lea.vmem [#allocation2], 72
        %v864 = vld [vmem:[%s863] ss:$2 sm:$0xff]
        %s865 = scalar_lea.vmem [#allocation2], 88
        %v866 = vld [vmem:[%s865] ss:$2 sm:$0xff]
        %s867 = scalar_lea.vmem [#allocation2], 104
        %v868 = vld [vmem:[%s867] ss:$2 sm:$0xff]
        %s869 = scalar_lea.vmem [#allocation2], 120
        %v870 = vld [vmem:[%s869] ss:$2 sm:$0xff]
        %s871 = scalar_lea.vmem [#allocation2], 136
        %v872 = vld [vmem:[%s871] ss:$2 sm:$0xff]
        %s873 = scalar_lea.vmem [#allocation2], 152
        %v874 = vld [vmem:[%s873] ss:$2 sm:$0xff]
        %s875 = scalar_lea.vmem [#allocation2], 168
        %v876 = vld [vmem:[%s875] ss:$2 sm:$0xff]
        %s877 = scalar_lea.vmem [#allocation2], 184
        %v878 = vld [vmem:[%s877] ss:$2 sm:$0xff]
        %s879 = scalar_lea.vmem [#allocation2], 200
        %v880 = vld [vmem:[%s879] ss:$2 sm:$0xff]
        %v881 = vpack.c.bf16 %v860, %v858
        %v882 = vpack.c.bf16 %v864, %v862
        %v883 = vpack.c.bf16 %v868, %v866
        %v884 = vpack.c.bf16 %v872, %v870
        %v885 = vpack.c.bf16 %v876, %v874
        %v886 = vpack.c.bf16 %v880, %v878
        %s887 = scalar_lea.vmem [#allocation2], 25
        %v888 = vld [vmem:[%s887] ss:$2 sm:$0xff]
        %s889 = scalar_lea.vmem [#allocation2], 41
        %v890 = vld [vmem:[%s889] ss:$2 sm:$0xff]
        %s891 = scalar_lea.vmem [#allocation2], 57
        %v892 = vld [vmem:[%s891] ss:$2 sm:$0xff]
        %s893 = scalar_lea.vmem [#allocation2], 73
        %v894 = vld [vmem:[%s893] ss:$2 sm:$0xff]
        %s895 = scalar_lea.vmem [#allocation2], 89
        %v896 = vld [vmem:[%s895] ss:$2 sm:$0xff]
        %s897 = scalar_lea.vmem [#allocation2], 105
        %v898 = vld [vmem:[%s897] ss:$2 sm:$0xff]
        %s899 = scalar_lea.vmem [#allocation2], 121
        %v900 = vld [vmem:[%s899] ss:$2 sm:$0xff]
        %s901 = scalar_lea.vmem [#allocation2], 137
        %v902 = vld [vmem:[%s901] ss:$2 sm:$0xff]
        %s903 = scalar_lea.vmem [#allocation2], 153
        %v904 = vld [vmem:[%s903] ss:$2 sm:$0xff]
        %s905 = scalar_lea.vmem [#allocation2], 169
        %v906 = vld [vmem:[%s905] ss:$2 sm:$0xff]
        %s907 = scalar_lea.vmem [#allocation2], 185
        %v908 = vld [vmem:[%s907] ss:$2 sm:$0xff]
        %s909 = scalar_lea.vmem [#allocation2], 201
        %v910 = vld [vmem:[%s909] ss:$2 sm:$0xff]
        %v911 = vpack.c.bf16 %v890, %v888
        %v912 = vpack.c.bf16 %v894, %v892
        %v913 = vpack.c.bf16 %v898, %v896
        %v914 = vpack.c.bf16 %v902, %v900
        %v915 = vpack.c.bf16 %v906, %v904
        %v916 = vpack.c.bf16 %v910, %v908
        %s917 = scalar_lea.vmem [#allocation2], 26
        %v918 = vld [vmem:[%s917] ss:$2 sm:$0xff]
        %s919 = scalar_lea.vmem [#allocation2], 42
        %v920 = vld [vmem:[%s919] ss:$2 sm:$0xff]
        %s921 = scalar_lea.vmem [#allocation2], 58
        %v922 = vld [vmem:[%s921] ss:$2 sm:$0xff]
        %s923 = scalar_lea.vmem [#allocation2], 74
        %v924 = vld [vmem:[%s923] ss:$2 sm:$0xff]
        %s925 = scalar_lea.vmem [#allocation2], 90
        %v926 = vld [vmem:[%s925] ss:$2 sm:$0xff]
        %s927 = scalar_lea.vmem [#allocation2], 106
        %v928 = vld [vmem:[%s927] ss:$2 sm:$0xff]
        %s929 = scalar_lea.vmem [#allocation2], 122
        %v930 = vld [vmem:[%s929] ss:$2 sm:$0xff]
        %s931 = scalar_lea.vmem [#allocation2], 138
        %v932 = vld [vmem:[%s931] ss:$2 sm:$0xff]
        %s933 = scalar_lea.vmem [#allocation2], 154
        %v934 = vld [vmem:[%s933] ss:$2 sm:$0xff]
        %s935 = scalar_lea.vmem [#allocation2], 170
        %v936 = vld [vmem:[%s935] ss:$2 sm:$0xff]
        %s937 = scalar_lea.vmem [#allocation2], 186
        %v938 = vld [vmem:[%s937] ss:$2 sm:$0xff]
        %s939 = scalar_lea.vmem [#allocation2], 202
        %v940 = vld [vmem:[%s939] ss:$2 sm:$0xff]
        %v941 = vpack.c.bf16 %v920, %v918
        %v942 = vpack.c.bf16 %v924, %v922
        %v943 = vpack.c.bf16 %v928, %v926
        %v944 = vpack.c.bf16 %v932, %v930
        %v945 = vpack.c.bf16 %v936, %v934
        %v946 = vpack.c.bf16 %v940, %v938
        %s947 = scalar_lea.vmem [#allocation9], 192
        %v948 = vld [vmem:[%s947] sm:$0xf]
        %v949 = vld [vmem:[%s947 + $0x4] sm:$0xf]
        %v950 = vld [vmem:[%s947 + $0x8] sm:$0xf]
        %v951 = vld [vmem:[%s947 + $0xc] sm:$0xf]
        %v952 = vld [vmem:[%s947 + $0x10] sm:$0xf]
        %v953 = vld [vmem:[%s947 + $0x14] sm:$0xf]
        %v954 = vld [vmem:[%s947 + $0x18] sm:$0xf]
        %v955 = vld [vmem:[%s947 + $0x1c] sm:$0xf]
        %v956 = vld [vmem:[%s947 + $0x20] sm:$0xf]
        %v957 = vld [vmem:[%s947 + $0x24] sm:$0xf]
        %v958 = vld [vmem:[%s947 + $0x28] sm:$0xf]
        %v959 = vld [vmem:[%s947 + $0x2c] sm:$0xf]
        %v960 = vld [vmem:[%s947 + $0x30] sm:$0xf]
        %v961 = vld [vmem:[%s947 + $0x34] sm:$0xf]
        %v962 = vld [vmem:[%s947 + $0x38] sm:$0xf]
        %v963 = vld [vmem:[%s947 + $0x3c] sm:$0xf]
        %v964 = vld [vmem:[%s947 + $0x40] sm:$0xf]
        %v965 = vld [vmem:[%s947 + $0x44] sm:$0xf]
        %v966 = vld [vmem:[%s947 + $0x48] sm:$0xf]
        %v967 = vld [vmem:[%s947 + $0x4c] sm:$0xf]
        %v968 = vld [vmem:[%s947 + $0x50] sm:$0xf]
        %v969 = vld [vmem:[%s947 + $0x54] sm:$0xf]
        %v970 = vld [vmem:[%s947 + $0x58] sm:$0xf]
        %v971 = vld [vmem:[%s947 + $0x5c] sm:$0xf]
        %v972 = vld [vmem:[%s947 + $0x60] sm:$0xf]
        %v973 = vld [vmem:[%s947 + $0x64] sm:$0xf]
        %v974 = vld [vmem:[%s947 + $0x68] sm:$0xf]
        %v975 = vld [vmem:[%s947 + $0x6c] sm:$0xf]
        %v976 = vld [vmem:[%s947 + $0x70] sm:$0xf]
        %v977 = vld [vmem:[%s947 + $0x74] sm:$0xf]
        %v978 = vld [vmem:[%s947 + $0x78] sm:$0xf]
        %v979 = vld [vmem:[%s947 + $0x7c] sm:$0xf]
        %v980 = vld [vmem:[%s947 + $0x80] sm:$0xf]
        %v981 = vld [vmem:[%s947 + $0x84] sm:$0xf]
        %v982 = vld [vmem:[%s947 + $0x88] sm:$0xf]
        %v983 = vld [vmem:[%s947 + $0x8c] sm:$0xf]
        %v984 = vld [vmem:[%s947 + $0x90] sm:$0xf]
        %v985 = vld [vmem:[%s947 + $0x94] sm:$0xf]
        %v986 = vld [vmem:[%s947 + $0x98] sm:$0xf]
        %v987 = vld [vmem:[%s947 + $0x9c] sm:$0xf]
        %v988 = vld [vmem:[%s947 + $0xa0] sm:$0xf]
        %v989 = vld [vmem:[%s947 + $0xa4] sm:$0xf]
        %v990 = vld [vmem:[%s947 + $0xa8] sm:$0xf]
        %v991 = vld [vmem:[%s947 + $0xac] sm:$0xf]
        %v992 = vld [vmem:[%s947 + $0xb0] sm:$0xf]
        %v993 = vld [vmem:[%s947 + $0xb4] sm:$0xf]
        %v994 = vld [vmem:[%s947 + $0xb8] sm:$0xf]
        %v995 = vld [vmem:[%s947 + $0xbc] sm:$0xf]
        %v1044 = vunpack.c.l.b16 %v948
        %v1045 = vunpack.c.l.b16 %v949
        %v1046 = vunpack.c.l.b16 %v950
        %v1047 = vunpack.c.l.b16 %v951
        %v1048 = vunpack.c.l.b16 %v952
        %v1049 = vunpack.c.l.b16 %v953
        %v1050 = vunpack.c.l.b16 %v954
        %v1051 = vunpack.c.l.b16 %v955
        %v1052 = vunpack.c.l.b16 %v956
        %v1053 = vunpack.c.l.b16 %v957
        %v1054 = vunpack.c.l.b16 %v958
        %v1055 = vunpack.c.l.b16 %v959
        %v1056 = vunpack.c.l.b16 %v960
        %v1057 = vunpack.c.l.b16 %v961
        %v1058 = vunpack.c.l.b16 %v962
        %v1059 = vunpack.c.l.b16 %v963
        %v1060 = vunpack.c.l.b16 %v964
        %v1061 = vunpack.c.l.b16 %v965
        %v1062 = vunpack.c.l.b16 %v966
        %v1063 = vunpack.c.l.b16 %v967
        %v1064 = vunpack.c.l.b16 %v968
        %v1065 = vunpack.c.l.b16 %v969
        %v1066 = vunpack.c.l.b16 %v970
        %v1067 = vunpack.c.l.b16 %v971
        %v1068 = vunpack.c.l.b16 %v972
        %v1069 = vunpack.c.l.b16 %v973
        %v1070 = vunpack.c.l.b16 %v974
        %v1071 = vunpack.c.l.b16 %v975
        %v1072 = vunpack.c.l.b16 %v976
        %v1073 = vunpack.c.l.b16 %v977
        %v1074 = vunpack.c.l.b16 %v978
        %v1075 = vunpack.c.l.b16 %v979
        %v1076 = vunpack.c.l.b16 %v980
        %v1077 = vunpack.c.l.b16 %v981
        %v1078 = vunpack.c.l.b16 %v982
        %v1079 = vunpack.c.l.b16 %v983
        %v1080 = vunpack.c.l.b16 %v984
        %v1081 = vunpack.c.l.b16 %v985
        %v1082 = vunpack.c.l.b16 %v986
        %v1083 = vunpack.c.l.b16 %v987
        %v1084 = vunpack.c.l.b16 %v988
        %v1085 = vunpack.c.l.b16 %v989
        %v1086 = vunpack.c.l.b16 %v990
        %v1087 = vunpack.c.l.b16 %v991
        %v1088 = vunpack.c.l.b16 %v992
        %v1089 = vunpack.c.l.b16 %v993
        %v1090 = vunpack.c.l.b16 %v994
        %v1091 = vunpack.c.l.b16 %v995
        %v1092 = vpack.c.b16 %v1045, %v1044
        %v1093 = vpack.c.b16 %v1047, %v1046
        %v1094 = vpack.c.b16 %v1049, %v1048
        %v1095 = vpack.c.b16 %v1051, %v1050
        %v1096 = vpack.c.b16 %v1053, %v1052
        %v1097 = vpack.c.b16 %v1055, %v1054
        %v1098 = vpack.c.b16 %v1057, %v1056
        %v1099 = vpack.c.b16 %v1059, %v1058
        %v1100 = vpack.c.b16 %v1061, %v1060
        %v1101 = vpack.c.b16 %v1063, %v1062
        %v1102 = vpack.c.b16 %v1065, %v1064
        %v1103 = vpack.c.b16 %v1067, %v1066
        %v1104 = vpack.c.b16 %v1069, %v1068
        %v1105 = vpack.c.b16 %v1071, %v1070
        %v1106 = vpack.c.b16 %v1073, %v1072
        %v1107 = vpack.c.b16 %v1075, %v1074
        %v1108 = vpack.c.b16 %v1077, %v1076
        %v1109 = vpack.c.b16 %v1079, %v1078
        %v1110 = vpack.c.b16 %v1081, %v1080
        %v1111 = vpack.c.b16 %v1083, %v1082
        %v1112 = vpack.c.b16 %v1085, %v1084
        %v1113 = vpack.c.b16 %v1087, %v1086
        %v1114 = vpack.c.b16 %v1089, %v1088
        %v1115 = vpack.c.b16 %v1091, %v1090
        %1140 = vmatprep.subr.bf16.mxu0 0
        %1141 = vmatpush1.bf16.msra.mxu0 %v1092
        %1142 = vmatprep.subr.bf16.mxu0 0
        %1143 = vmatpush1.bf16.msra.mxu0 %v1093
        %1144 = vmatprep.subr.bf16.mxu0 0
        %1145 = vmatpush1.bf16.msra.mxu0 %v1094
        %1146 = vmatprep.subr.bf16.mxu0 0
        %1147 = vmatpush1.bf16.msra.mxu0 %v1095
        %1148 = vmatprep.subr.bf16.mxu0 0
        %1149 = vmatpush1.bf16.msra.mxu0 %v1096
        %1150 = vmatprep.subr.bf16.mxu0 0
        %1151 = vmatpush1.bf16.msra.mxu0 %v1097
        %1152 = vmatprep.subr.bf16.mxu0 0
        %1153 = vmatpush1.bf16.msra.mxu0 %v1098
        %1154 = vmatprep.subr.bf16.mxu0 0
        %1155 = vmatpush1.bf16.msra.mxu0 %v1099
        %1156 = vmatprep.subr.bf16.mxu0 0
        %1157 = vmatpush1.bf16.msra.mxu0 %v1100
        %1158 = vmatprep.subr.bf16.mxu0 0
        %1159 = vmatpush1.bf16.msra.mxu0 %v1101
        %1160 = vmatprep.subr.bf16.mxu0 0
        %1161 = vmatpush1.bf16.msra.mxu0 %v1102
        %1162 = vmatprep.subr.bf16.mxu0 0
        %1163 = vmatpush1.bf16.msra.mxu0 %v1103
        %1164 = vmatprep.subr.bf16.mxu0 0
        %1165 = vmatpush1.bf16.msra.mxu0 %v1104
        %1166 = vmatprep.subr.bf16.mxu0 0
        %1167 = vmatpush1.bf16.msra.mxu0 %v1105
        %1168 = vmatprep.subr.bf16.mxu0 0
        %1169 = vmatpush1.bf16.msra.mxu0 %v1106
        %1170 = vmatprep.subr.bf16.mxu0 0
        %1171 = vmatpush1.bf16.msra.mxu0 %v1107
        %1172 = vmatprep.mubr.bf16.mxu0 %v911
        %1173 = vmatmul.mubr.bf16.gmra.mrb[0].mxu0 %v881
        %v1174 = vpop.f32.mrb[0].mxu0
        %v1175 = vadd.f32 0.0, %v1174
        %v1176 = vpop.f32.mrb[0].mxu0
        %v1177 = vpop.f32.mrb[0].mxu0
        %v1178 = vpop.f32.mrb[0].mxu0
        %1179 = vmatprep.mubr.bf16.mxu0 %v912
        %1180 = vmatmul.mubr.bf16.gmra.mrb[0].mxu0 %v882
        %v1181 = vpop.f32.mrb[0].mxu0
        %v1182 = vpop.f32.mrb[0].mxu0
        %v1183 = vpop.f32.mrb[0].mxu0
        %v1184 = vadd.f32 0.0, %v1183
        %v1185 = vpop.f32.mrb[0].mxu0
        %1186 = vmatprep.mubr.bf16.mxu0 %v913
        %1187 = vmatmul.mubr.bf16.gmra.mrb[0].mxu0 %v883
        %v1188 = vpop.f32.mrb[0].mxu0
        %v1189 = vpop.f32.mrb[0].mxu0
        %v1190 = vpop.f32.mrb[0].mxu0
        %v1191 = vpop.f32.mrb[0].mxu0
        %1192 = vmatprep.mubr.bf16.mxu0 %v914
        %1193 = vmatmul.mubr.bf16.gmra.mrb[0].mxu0 %v884
        %v1194 = vpop.f32.mrb[0].mxu0
        %v1195 = vadd.f32 0.0, %v1194
        %v1196 = vpop.f32.mrb[0].mxu0
        %v1197 = vpop.f32.mrb[0].mxu0
        %v1198 = vpop.f32.mrb[0].mxu0
        %1199 = vmatprep.mubr.bf16.mxu0 %v915
        %1200 = vmatmul.mubr.bf16.gmra.mrb[0].mxu0 %v885
        %v1201 = vpop.f32.mrb[0].mxu0
        %v1202 = vpop.f32.mrb[0].mxu0
        %v1203 = vpop.f32.mrb[0].mxu0
        %v1204 = vadd.f32 0.0, %v1203
        %v1205 = vpop.f32.mrb[0].mxu0
        %1206 = vmatprep.mubr.bf16.mxu0 %v916
        %1207 = vmatmul.mubr.bf16.gmra.mrb[0].mxu0 %v886
        %v1208 = vpop.f32.mrb[0].mxu0
        %v1209 = vpop.f32.mrb[0].mxu0
        %v1210 = vpop.f32.mrb[0].mxu0
        %v1211 = vpop.f32.mrb[0].mxu0
        %1212 = vdwg.mxu0
        %1213 = vmatprep.subr.bf16.mxu0 0
        %1214 = vmatpush1.bf16.msra.mxu0 %v1108
        %1215 = vmatprep.subr.bf16.mxu0 0
        %1216 = vmatpush1.bf16.msra.mxu0 %v1109
        %1217 = vmatprep.subr.bf16.mxu0 0
        %1218 = vmatpush1.bf16.msra.mxu0 %v1110
        %1219 = vmatprep.subr.bf16.mxu0 0
        %1220 = vmatpush1.bf16.msra.mxu0 %v1111
        %1221 = vmatprep.subr.bf16.mxu0 0
        %1222 = vmatpush1.bf16.msra.mxu0 %v1112
        %1223 = vmatprep.subr.bf16.mxu0 0
        %1224 = vmatpush1.bf16.msra.mxu0 %v1113
        %1225 = vmatprep.subr.bf16.mxu0 0
        %1226 = vmatpush1.bf16.msra.mxu0 %v1114
        %1227 = vmatprep.subr.bf16.mxu0 0
        %1228 = vmatpush1.bf16.msra.mxu0 %v1115
        %1229 = vmatprep.subr.bf16.mxu0 0
        %1230 = vmatpush1.bf16.msra.mxu0 0
        %1231 = vmatprep.subr.bf16.mxu0 0
        %1232 = vmatpush1.bf16.msra.mxu0 0
        %1233 = vmatprep.subr.bf16.mxu0 0
        %1234 = vmatpush1.bf16.msra.mxu0 0
        %1235 = vmatprep.subr.bf16.mxu0 0
        %1236 = vmatpush1.bf16.msra.mxu0 0
        %1237 = vmatprep.subr.bf16.mxu0 0
        %1238 = vmatpush1.bf16.msra.mxu0 0
        %1239 = vmatprep.subr.bf16.mxu0 0
        %1240 = vmatpush1.bf16.msra.mxu0 0
        %1241 = vmatprep.subr.bf16.mxu0 0
        %1242 = vmatpush1.bf16.msra.mxu0 0
        %1243 = vmatprep.subr.bf16.mxu0 0
        %1244 = vmatpush1.bf16.msra.mxu0 0
        %1245 = vmatprep.mubr.bf16.mxu0 0
        %1246 = vmatmul.mubr.bf16.gmra.mrb[0].mxu0 %v941
        %v1247 = vpop.f32.mrb[0].mxu0
        %v1248 = vadd.f32 %v1175, %v1247
        %v1249 = vpop.f32.mrb[0].mxu0
        %v1250 = vpop.f32.mrb[0].mxu0
        %v1251 = vpop.f32.mrb[0].mxu0
        %1252 = vmatprep.mubr.bf16.mxu0 0
        %1253 = vmatmul.mubr.bf16.gmra.mrb[0].mxu0 %v942
        %v1254 = vpop.f32.mrb[0].mxu0
        %v1255 = vpop.f32.mrb[0].mxu0
        %v1256 = vpop.f32.mrb[0].mxu0
        %v1257 = vadd.f32 %v1184, %v1256
        %v1258 = vpop.f32.mrb[0].mxu0
        %1259 = vmatprep.mubr.bf16.mxu0 0
        %1260 = vmatmul.mubr.bf16.gmra.mrb[0].mxu0 %v943
        %v1261 = vpop.f32.mrb[0].mxu0
        %v1262 = vpop.f32.mrb[0].mxu0
        %v1263 = vpop.f32.mrb[0].mxu0
        %v1264 = vpop.f32.mrb[0].mxu0
        %1265 = vmatprep.mubr.bf16.mxu0 0
        %1266 = vmatmul.mubr.bf16.gmra.mrb[0].mxu0 %v944
        %v1267 = vpop.f32.mrb[0].mxu0
        %v1268 = vadd.f32 %v1195, %v1267
        %v1269 = vpop.f32.mrb[0].mxu0
        %v1270 = vpop.f32.mrb[0].mxu0
        %v1271 = vpop.f32.mrb[0].mxu0
        %1272 = vmatprep.mubr.bf16.mxu0 0
        %1273 = vmatmul.mubr.bf16.gmra.mrb[0].mxu0 %v945
        %v1274 = vpop.f32.mrb[0].mxu0
        %v1275 = vpop.f32.mrb[0].mxu0
        %v1276 = vpop.f32.mrb[0].mxu0
        %v1277 = vadd.f32 %v1204, %v1276
        %v1278 = vpop.f32.mrb[0].mxu0
        %1279 = vmatprep.mubr.bf16.mxu0 0
        %1280 = vmatmul.mubr.bf16.gmra.mrb[0].mxu0 %v946
        %v1281 = vpop.f32.mrb[0].mxu0
        %v1282 = vpop.f32.mrb[0].mxu0
        %v1283 = vpop.f32.mrb[0].mxu0
        %v1284 = vpop.f32.mrb[0].mxu0
        %1285 = vdwg.mxu0
        %v1334 = vunpack.c.l.b16 %v809
        %v1335 = vunpack.c.l.b16 %v810
        %v1336 = vunpack.c.l.b16 %v811
        %v1337 = vunpack.c.l.b16 %v812
        %v1338 = vunpack.c.l.b16 %v813
        %v1339 = vunpack.c.l.b16 %v814
        %v1340 = vunpack.c.l.b16 %v815
        %v1341 = vunpack.c.l.b16 %v816
        %v1342 = vunpack.c.l.b16 %v817
        %v1343 = vunpack.c.l.b16 %v818
        %v1344 = vunpack.c.l.b16 %v819
        %v1345 = vunpack.c.l.b16 %v820
        %v1346 = vunpack.c.l.b16 %v821
        %v1347 = vunpack.c.l.b16 %v822
        %v1348 = vunpack.c.l.b16 %v823
        %v1349 = vunpack.c.l.b16 %v824
        %v1350 = vunpack.c.l.b16 %v825
        %v1351 = vunpack.c.l.b16 %v826
        %v1352 = vunpack.c.l.b16 %v827
        %v1353 = vunpack.c.l.b16 %v828
        %v1354 = vunpack.c.l.b16 %v829
        %v1355 = vunpack.c.l.b16 %v830
        %v1356 = vunpack.c.l.b16 %v831
        %v1357 = vunpack.c.l.b16 %v832
        %v1358 = vunpack.c.l.b16 %v833
        %v1359 = vunpack.c.l.b16 %v834
        %v1360 = vunpack.c.l.b16 %v835
        %v1361 = vunpack.c.l.b16 %v836
        %v1362 = vunpack.c.l.b16 %v837
        %v1363 = vunpack.c.l.b16 %v838
        %v1364 = vunpack.c.l.b16 %v839
        %v1365 = vunpack.c.l.b16 %v840
        %v1366 = vunpack.c.l.b16 %v841
        %v1367 = vunpack.c.l.b16 %v842
        %v1368 = vunpack.c.l.b16 %v843
        %v1369 = vunpack.c.l.b16 %v844
        %v1370 = vunpack.c.l.b16 %v845
        %v1371 = vunpack.c.l.b16 %v846
        %v1372 = vunpack.c.l.b16 %v847
        %v1373 = vunpack.c.l.b16 %v848
        %v1374 = vunpack.c.l.b16 %v849
        %v1375 = vunpack.c.l.b16 %v850
        %v1376 = vunpack.c.l.b16 %v851
        %v1377 = vunpack.c.l.b16 %v852
        %v1378 = vunpack.c.l.b16 %v853
        %v1379 = vunpack.c.l.b16 %v854
        %v1380 = vunpack.c.l.b16 %v855
        %v1381 = vunpack.c.l.b16 %v856
        %v1382 = vpack.c.b16 %v1335, %v1334
        %v1383 = vpack.c.b16 %v1337, %v1336
        %v1384 = vpack.c.b16 %v1339, %v1338
        %v1385 = vpack.c.b16 %v1341, %v1340
        %v1386 = vpack.c.b16 %v1343, %v1342
        %v1387 = vpack.c.b16 %v1345, %v1344
        %v1388 = vpack.c.b16 %v1347, %v1346
        %v1389 = vpack.c.b16 %v1349, %v1348
        %v1390 = vpack.c.b16 %v1351, %v1350
        %v1391 = vpack.c.b16 %v1353, %v1352
        %v1392 = vpack.c.b16 %v1355, %v1354
        %v1393 = vpack.c.b16 %v1357, %v1356
        %v1394 = vpack.c.b16 %v1359, %v1358
        %v1395 = vpack.c.b16 %v1361, %v1360
        %v1396 = vpack.c.b16 %v1363, %v1362
        %v1397 = vpack.c.b16 %v1365, %v1364
        %v1398 = vpack.c.b16 %v1367, %v1366
        %v1399 = vpack.c.b16 %v1369, %v1368
        %v1400 = vpack.c.b16 %v1371, %v1370
        %v1401 = vpack.c.b16 %v1373, %v1372
        %v1402 = vpack.c.b16 %v1375, %v1374
        %v1403 = vpack.c.b16 %v1377, %v1376
        %v1404 = vpack.c.b16 %v1379, %v1378
        %v1405 = vpack.c.b16 %v1381, %v1380
        %1430 = vmatprep.subr.bf16.mxu0 0
        %1431 = vmatpush1.bf16.msra.mxu0 %v1382
        %1432 = vmatprep.subr.bf16.mxu0 0
        %1433 = vmatpush1.bf16.msra.mxu0 %v1383
        %1434 = vmatprep.subr.bf16.mxu0 0
        %1435 = vmatpush1.bf16.msra.mxu0 %v1384
        %1436 = vmatprep.subr.bf16.mxu0 0
        %1437 = vmatpush1.bf16.msra.mxu0 %v1385
        %1438 = vmatprep.subr.bf16.mxu0 0
        %1439 = vmatpush1.bf16.msra.mxu0 %v1386
        %1440 = vmatprep.subr.bf16.mxu0 0
        %1441 = vmatpush1.bf16.msra.mxu0 %v1387
        %1442 = vmatprep.subr.bf16.mxu0 0
        %1443 = vmatpush1.bf16.msra.mxu0 %v1388
        %1444 = vmatprep.subr.bf16.mxu0 0
        %1445 = vmatpush1.bf16.msra.mxu0 %v1389
        %1446 = vmatprep.subr.bf16.mxu0 0
        %1447 = vmatpush1.bf16.msra.mxu0 %v1390
        %1448 = vmatprep.subr.bf16.mxu0 0
        %1449 = vmatpush1.bf16.msra.mxu0 %v1391
        %1450 = vmatprep.subr.bf16.mxu0 0
        %1451 = vmatpush1.bf16.msra.mxu0 %v1392
        %1452 = vmatprep.subr.bf16.mxu0 0
        %1453 = vmatpush1.bf16.msra.mxu0 %v1393
        %1454 = vmatprep.subr.bf16.mxu0 0
        %1455 = vmatpush1.bf16.msra.mxu0 %v1394
        %1456 = vmatprep.subr.bf16.mxu0 0
        %1457 = vmatpush1.bf16.msra.mxu0 %v1395
        %1458 = vmatprep.subr.bf16.mxu0 0
        %1459 = vmatpush1.bf16.msra.mxu0 %v1396
        %1460 = vmatprep.subr.bf16.mxu0 0
        %1461 = vmatpush1.bf16.msra.mxu0 %v1397
        %1462 = vmatprep.mubr.bf16.mxu0 %v773
        %1463 = vmatmul.mubr.bf16.gmra.mrb[0].mxu0 %v743
        %v1464 = vpop.f32.mrb[0].mxu0
        %v1465 = vadd.f32 %v1248, %v1464
        %v1466 = vpop.f32.mrb[0].mxu0
        %v1467 = vpop.f32.mrb[0].mxu0
        %v1468 = vpop.f32.mrb[0].mxu0
        %1469 = vmatprep.mubr.bf16.mxu0 %v774
        %1470 = vmatmul.mubr.bf16.gmra.mrb[0].mxu0 %v744
        %v1471 = vpop.f32.mrb[0].mxu0
        %v1472 = vpop.f32.mrb[0].mxu0
        %v1473 = vpop.f32.mrb[0].mxu0
        %v1474 = vadd.f32 %v1257, %v1473
        %v1475 = vpop.f32.mrb[0].mxu0
        %1476 = vmatprep.mubr.bf16.mxu0 %v775
        %1477 = vmatmul.mubr.bf16.gmra.mrb[0].mxu0 %v745
        %v1478 = vpop.f32.mrb[0].mxu0
        %v1479 = vpop.f32.mrb[0].mxu0
        %v1480 = vpop.f32.mrb[0].mxu0
        %v1481 = vpop.f32.mrb[0].mxu0
        %1482 = vmatprep.mubr.bf16.mxu0 %v776
        %1483 = vmatmul.mubr.bf16.gmra.mrb[0].mxu0 %v746
        %v1484 = vpop.f32.mrb[0].mxu0
        %v1485 = vadd.f32 %v1268, %v1484
        %v1486 = vpop.f32.mrb[0].mxu0
        %v1487 = vpop.f32.mrb[0].mxu0
        %v1488 = vpop.f32.mrb[0].mxu0
        %1489 = vmatprep.mubr.bf16.mxu0 %v777
        %1490 = vmatmul.mubr.bf16.gmra.mrb[0].mxu0 %v747
        %v1491 = vpop.f32.mrb[0].mxu0
        %v1492 = vpop.f32.mrb[0].mxu0
        %v1493 = vpop.f32.mrb[0].mxu0
        %v1494 = vadd.f32 %v1277, %v1493
        %v1495 = vpop.f32.mrb[0].mxu0
        %1496 = vmatprep.mubr.bf16.mxu0 %v778
        %1497 = vmatmul.mubr.bf16.gmra.mrb[0].mxu0 %v748
        %v1498 = vpop.f32.mrb[0].mxu0
        %v1499 = vpop.f32.mrb[0].mxu0
        %v1500 = vpop.f32.mrb[0].mxu0
        %v1501 = vpop.f32.mrb[0].mxu0
        %1502 = vdwg.mxu0
        %1503 = vmatprep.subr.bf16.mxu0 0
        %1504 = vmatpush1.bf16.msra.mxu0 %v1398
        %1505 = vmatprep.subr.bf16.mxu0 0
        %1506 = vmatpush1.bf16.msra.mxu0 %v1399
        %1507 = vmatprep.subr.bf16.mxu0 0
        %1508 = vmatpush1.bf16.msra.mxu0 %v1400
        %1509 = vmatprep.subr.bf16.mxu0 0
        %1510 = vmatpush1.bf16.msra.mxu0 %v1401
        %1511 = vmatprep.subr.bf16.mxu0 0
        %1512 = vmatpush1.bf16.msra.mxu0 %v1402
        %1513 = vmatprep.subr.bf16.mxu0 0
        %1514 = vmatpush1.bf16.msra.mxu0 %v1403
        %1515 = vmatprep.subr.bf16.mxu0 0
        %1516 = vmatpush1.bf16.msra.mxu0 %v1404
        %1517 = vmatprep.subr.bf16.mxu0 0
        %1518 = vmatpush1.bf16.msra.mxu0 %v1405
        %1519 = vmatprep.subr.bf16.mxu0 0
        %1520 = vmatpush1.bf16.msra.mxu0 0
        %1521 = vmatprep.subr.bf16.mxu0 0
        %1522 = vmatpush1.bf16.msra.mxu0 0
        %1523 = vmatprep.subr.bf16.mxu0 0
        %1524 = vmatpush1.bf16.msra.mxu0 0
        %1525 = vmatprep.subr.bf16.mxu0 0
        %1526 = vmatpush1.bf16.msra.mxu0 0
        %1527 = vmatprep.subr.bf16.mxu0 0
        %1528 = vmatpush1.bf16.msra.mxu0 0
        %1529 = vmatprep.subr.bf16.mxu0 0
        %1530 = vmatpush1.bf16.msra.mxu0 0
        %1531 = vmatprep.subr.bf16.mxu0 0
        %1532 = vmatpush1.bf16.msra.mxu0 0
        %1533 = vmatprep.subr.bf16.mxu0 0
        %1534 = vmatpush1.bf16.msra.mxu0 0
        %1535 = vmatprep.mubr.bf16.mxu0 0
        %1536 = vmatmul.mubr.bf16.gmra.mrb[0].mxu0 %v803
        %v1537 = vpop.f32.mrb[0].mxu0
        %v1538 = vadd.f32 %v1465, %v1537
        %v1539 = vpop.f32.mrb[0].mxu0
        %v1540 = vpop.f32.mrb[0].mxu0
        %v1541 = vpop.f32.mrb[0].mxu0
        %1542 = vmatprep.mubr.bf16.mxu0 0
        %1543 = vmatmul.mubr.bf16.gmra.mrb[0].mxu0 %v804
        %v1544 = vpop.f32.mrb[0].mxu0
        %v1545 = vpop.f32.mrb[0].mxu0
        %v1546 = vpop.f32.mrb[0].mxu0
        %v1547 = vadd.f32 %v1474, %v1546
        %v1548 = vpop.f32.mrb[0].mxu0
        %1549 = vmatprep.mubr.bf16.mxu0 0
        %1550 = vmatmul.mubr.bf16.gmra.mrb[0].mxu0 %v805
        %v1551 = vpop.f32.mrb[0].mxu0
        %v1552 = vpop.f32.mrb[0].mxu0
        %v1553 = vpop.f32.mrb[0].mxu0
        %v1554 = vpop.f32.mrb[0].mxu0
        %1555 = vmatprep.mubr.bf16.mxu0 0
        %1556 = vmatmul.mubr.bf16.gmra.mrb[0].mxu0 %v806
        %v1557 = vpop.f32.mrb[0].mxu0
        %v1558 = vadd.f32 %v1485, %v1557
        %v1559 = vpop.f32.mrb[0].mxu0
        %v1560 = vpop.f32.mrb[0].mxu0
        %v1561 = vpop.f32.mrb[0].mxu0
        %1562 = vmatprep.mubr.bf16.mxu0 0
        %1563 = vmatmul.mubr.bf16.gmra.mrb[0].mxu0 %v807
        %v1564 = vpop.f32.mrb[0].mxu0
        %v1565 = vpop.f32.mrb[0].mxu0
        %v1566 = vpop.f32.mrb[0].mxu0
        %v1567 = vadd.f32 %v1494, %v1566
        %v1568 = vpop.f32.mrb[0].mxu0
        %1569 = vmatprep.mubr.bf16.mxu0 0
        %1570 = vmatmul.mubr.bf16.gmra.mrb[0].mxu0 %v808
        %v1571 = vpop.f32.mrb[0].mxu0
        %v1572 = vpop.f32.mrb[0].mxu0
        %v1573 = vpop.f32.mrb[0].mxu0
        %v1574 = vpop.f32.mrb[0].mxu0
        %1575 = vdwg.mxu0
        %v1576 = vld [vmem:[%s725] ss:$2 sm:$0xff]
        %v1577 = vld [vmem:[%s727] ss:$2 sm:$0xff]
        %v1578 = vld [vmem:[%s729] ss:$2 sm:$0xff]
        %v1579 = vld [vmem:[%s731] ss:$2 sm:$0xff]
        %v1580 = vld [vmem:[%s733] ss:$2 sm:$0xff]
        %v1581 = vld [vmem:[%s735] ss:$2 sm:$0xff]
        %v1582 = vld [vmem:[%s737] ss:$2 sm:$0xff]
        %v1583 = vld [vmem:[%s739] ss:$2 sm:$0xff]
        %v1584 = vld [vmem:[%s741] ss:$2 sm:$0xff]
        %s1585 = scalar_lea.vmem [#allocation2], 192
        %v1586 = vld [vmem:[%s1585] ss:$2 sm:$0xff]
        %s1587 = scalar_lea.vmem [#allocation2], 208
        %v1588 = vld [vmem:[%s1587] ss:$2 sm:$0xff]
        %s1589 = scalar_lea.vmem [#allocation2], 224
        %v1590 = vld [vmem:[%s1589] ss:$2 sm:$0xff]
        %v1591 = vpack.c.bf16 %v1577, %v1576
        %v1592 = vpack.c.bf16 %v1579, %v1578
        %v1593 = vpack.c.bf16 %v1581, %v1580
        %v1594 = vpack.c.bf16 %v1583, %v1582
        %v1595 = vpack.c.bf16 %v1586, %v1584
        %v1596 = vpack.c.bf16 %v1590, %v1588
        %v1597 = vld [vmem:[%s755] ss:$2 sm:$0xff]
        %v1598 = vld [vmem:[%s757] ss:$2 sm:$0xff]
        %v1599 = vld [vmem:[%s759] ss:$2 sm:$0xff]
        %v1600 = vld [vmem:[%s761] ss:$2 sm:$0xff]
        %v1601 = vld [vmem:[%s763] ss:$2 sm:$0xff]
        %v1602 = vld [vmem:[%s765] ss:$2 sm:$0xff]
        %v1603 = vld [vmem:[%s767] ss:$2 sm:$0xff]
        %v1604 = vld [vmem:[%s769] ss:$2 sm:$0xff]
        %v1605 = vld [vmem:[%s771] ss:$2 sm:$0xff]
        %s1606 = scalar_lea.vmem [#allocation2], 193
        %v1607 = vld [vmem:[%s1606] ss:$2 sm:$0xff]
        %s1608 = scalar_lea.vmem [#allocation2], 209
        %v1609 = vld [vmem:[%s1608] ss:$2 sm:$0xff]
        %s1610 = scalar_lea.vmem [#allocation2], 225
        %v1611 = vld [vmem:[%s1610] ss:$2 sm:$0xff]
        %v1612 = vpack.c.bf16 %v1598, %v1597
        %v1613 = vpack.c.bf16 %v1600, %v1599
        %v1614 = vpack.c.bf16 %v1602, %v1601
        %v1615 = vpack.c.bf16 %v1604, %v1603
        %v1616 = vpack.c.bf16 %v1607, %v1605
        %v1617 = vpack.c.bf16 %v1611, %v1609
        %v1618 = vld [vmem:[%s785] ss:$2 sm:$0xff]
        %v1619 = vld [vmem:[%s787] ss:$2 sm:$0xff]
        %v1620 = vld [vmem:[%s789] ss:$2 sm:$0xff]
        %v1621 = vld [vmem:[%s791] ss:$2 sm:$0xff]
        %v1622 = vld [vmem:[%s793] ss:$2 sm:$0xff]
        %v1623 = vld [vmem:[%s795] ss:$2 sm:$0xff]
        %v1624 = vld [vmem:[%s797] ss:$2 sm:$0xff]
        %v1625 = vld [vmem:[%s799] ss:$2 sm:$0xff]
        %v1626 = vld [vmem:[%s801] ss:$2 sm:$0xff]
        %s1627 = scalar_lea.vmem [#allocation2], 194
        %v1628 = vld [vmem:[%s1627] ss:$2 sm:$0xff]
        %s1629 = scalar_lea.vmem [#allocation2], 210
        %v1630 = vld [vmem:[%s1629] ss:$2 sm:$0xff]
        %s1631 = scalar_lea.vmem [#allocation2], 226
        %v1632 = vld [vmem:[%s1631] ss:$2 sm:$0xff]
        %v1633 = vpack.c.bf16 %v1619, %v1618
        %v1634 = vpack.c.bf16 %v1621, %v1620
        %v1635 = vpack.c.bf16 %v1623, %v1622
        %v1636 = vpack.c.bf16 %v1625, %v1624
        %v1637 = vpack.c.bf16 %v1628, %v1626
        %v1638 = vpack.c.bf16 %v1632, %v1630
        %s1639 = scalar_lea.vmem [#allocation9], 384
        %v1640 = vld [vmem:[%s1639] sm:$0xf]
        %v1641 = vld [vmem:[%s1639 + $0x4] sm:$0xf]
        %v1642 = vld [vmem:[%s1639 + $0x8] sm:$0xf]
        %v1643 = vld [vmem:[%s1639 + $0xc] sm:$0xf]
        %v1644 = vld [vmem:[%s1639 + $0x10] sm:$0xf]
        %v1645 = vld [vmem:[%s1639 + $0x14] sm:$0xf]
        %v1646 = vld [vmem:[%s1639 + $0x18] sm:$0xf]
        %v1647 = vld [vmem:[%s1639 + $0x1c] sm:$0xf]
        %v1648 = vld [vmem:[%s1639 + $0x20] sm:$0xf]
        %v1649 = vld [vmem:[%s1639 + $0x24] sm:$0xf]
        %v1650 = vld [vmem:[%s1639 + $0x28] sm:$0xf]
        %v1651 = vld [vmem:[%s1639 + $0x2c] sm:$0xf]
        %v1652 = vld [vmem:[%s1639 + $0x30] sm:$0xf]
        %v1653 = vld [vmem:[%s1639 + $0x34] sm:$0xf]
        %v1654 = vld [vmem:[%s1639 + $0x38] sm:$0xf]
        %v1655 = vld [vmem:[%s1639 + $0x3c] sm:$0xf]
        %v1656 = vld [vmem:[%s1639 + $0x40] sm:$0xf]
        %v1657 = vld [vmem:[%s1639 + $0x44] sm:$0xf]
        %v1658 = vld [vmem:[%s1639 + $0x48] sm:$0xf]
        %v1659 = vld [vmem:[%s1639 + $0x4c] sm:$0xf]
        %v1660 = vld [vmem:[%s1639 + $0x50] sm:$0xf]
        %v1661 = vld [vmem:[%s1639 + $0x54] sm:$0xf]
        %v1662 = vld [vmem:[%s1639 + $0x58] sm:$0xf]
        %v1663 = vld [vmem:[%s1639 + $0x5c] sm:$0xf]
        %v1664 = vld [vmem:[%s1639 + $0x60] sm:$0xf]
        %v1665 = vld [vmem:[%s1639 + $0x64] sm:$0xf]
        %v1666 = vld [vmem:[%s1639 + $0x68] sm:$0xf]
        %v1667 = vld [vmem:[%s1639 + $0x6c] sm:$0xf]
        %v1668 = vld [vmem:[%s1639 + $0x70] sm:$0xf]
        %v1669 = vld [vmem:[%s1639 + $0x74] sm:$0xf]
        %v1670 = vld [vmem:[%s1639 + $0x78] sm:$0xf]
        %v1671 = vld [vmem:[%s1639 + $0x7c] sm:$0xf]
        %v1672 = vld [vmem:[%s1639 + $0x80] sm:$0xf]
        %v1673 = vld [vmem:[%s1639 + $0x84] sm:$0xf]
        %v1674 = vld [vmem:[%s1639 + $0x88] sm:$0xf]
        %v1675 = vld [vmem:[%s1639 + $0x8c] sm:$0xf]
        %v1676 = vld [vmem:[%s1639 + $0x90] sm:$0xf]
        %v1677 = vld [vmem:[%s1639 + $0x94] sm:$0xf]
        %v1678 = vld [vmem:[%s1639 + $0x98] sm:$0xf]
        %v1679 = vld [vmem:[%s1639 + $0x9c] sm:$0xf]
        %v1680 = vld [vmem:[%s1639 + $0xa0] sm:$0xf]
        %v1681 = vld [vmem:[%s1639 + $0xa4] sm:$0xf]
        %v1682 = vld [vmem:[%s1639 + $0xa8] sm:$0xf]
        %v1683 = vld [vmem:[%s1639 + $0xac] sm:$0xf]
        %v1684 = vld [vmem:[%s1639 + $0xb0] sm:$0xf]
        %v1685 = vld [vmem:[%s1639 + $0xb4] sm:$0xf]
        %v1686 = vld [vmem:[%s1639 + $0xb8] sm:$0xf]
        %v1687 = vld [vmem:[%s1639 + $0xbc] sm:$0xf]
        %v1736 = vunpack.c.l.b16 %v1640
        %v1737 = vunpack.c.l.b16 %v1641
        %v1738 = vunpack.c.l.b16 %v1642
        %v1739 = vunpack.c.l.b16 %v1643
        %v1740 = vunpack.c.l.b16 %v1644
        %v1741 = vunpack.c.l.b16 %v1645
        %v1742 = vunpack.c.l.b16 %v1646
        %v1743 = vunpack.c.l.b16 %v1647
        %v1744 = vunpack.c.l.b16 %v1648
        %v1745 = vunpack.c.l.b16 %v1649
        %v1746 = vunpack.c.l.b16 %v1650
        %v1747 = vunpack.c.l.b16 %v1651
        %v1748 = vunpack.c.l.b16 %v1652
        %v1749 = vunpack.c.l.b16 %v1653
        %v1750 = vunpack.c.l.b16 %v1654
        %v1751 = vunpack.c.l.b16 %v1655
        %v1752 = vunpack.c.l.b16 %v1656
        %v1753 = vunpack.c.l.b16 %v1657
        %v1754 = vunpack.c.l.b16 %v1658
        %v1755 = vunpack.c.l.b16 %v1659
        %v1756 = vunpack.c.l.b16 %v1660
        %v1757 = vunpack.c.l.b16 %v1661
        %v1758 = vunpack.c.l.b16 %v1662
        %v1759 = vunpack.c.l.b16 %v1663
        %v1760 = vunpack.c.l.b16 %v1664
        %v1761 = vunpack.c.l.b16 %v1665
        %v1762 = vunpack.c.l.b16 %v1666
        %v1763 = vunpack.c.l.b16 %v1667
        %v1764 = vunpack.c.l.b16 %v1668
        %v1765 = vunpack.c.l.b16 %v1669
        %v1766 = vunpack.c.l.b16 %v1670
        %v1767 = vunpack.c.l.b16 %v1671
        %v1768 = vunpack.c.l.b16 %v1672
        %v1769 = vunpack.c.l.b16 %v1673
        %v1770 = vunpack.c.l.b16 %v1674
        %v1771 = vunpack.c.l.b16 %v1675
        %v1772 = vunpack.c.l.b16 %v1676
        %v1773 = vunpack.c.l.b16 %v1677
        %v1774 = vunpack.c.l.b16 %v1678
        %v1775 = vunpack.c.l.b16 %v1679
        %v1776 = vunpack.c.l.b16 %v1680
        %v1777 = vunpack.c.l.b16 %v1681
        %v1778 = vunpack.c.l.b16 %v1682
        %v1779 = vunpack.c.l.b16 %v1683
        %v1780 = vunpack.c.l.b16 %v1684
        %v1781 = vunpack.c.l.b16 %v1685
        %v1782 = vunpack.c.l.b16 %v1686
        %v1783 = vunpack.c.l.b16 %v1687
        %v1784 = vpack.c.b16 %v1737, %v1736
        %v1785 = vpack.c.b16 %v1739, %v1738
        %v1786 = vpack.c.b16 %v1741, %v1740
        %v1787 = vpack.c.b16 %v1743, %v1742
        %v1788 = vpack.c.b16 %v1745, %v1744
        %v1789 = vpack.c.b16 %v1747, %v1746
        %v1790 = vpack.c.b16 %v1749, %v1748
        %v1791 = vpack.c.b16 %v1751, %v1750
        %v1792 = vpack.c.b16 %v1753, %v1752
        %v1793 = vpack.c.b16 %v1755, %v1754
        %v1794 = vpack.c.b16 %v1757, %v1756
        %v1795 = vpack.c.b16 %v1759, %v1758
        %v1796 = vpack.c.b16 %v1761, %v1760
        %v1797 = vpack.c.b16 %v1763, %v1762
        %v1798 = vpack.c.b16 %v1765, %v1764
        %v1799 = vpack.c.b16 %v1767, %v1766
        %v1800 = vpack.c.b16 %v1769, %v1768
        %v1801 = vpack.c.b16 %v1771, %v1770
        %v1802 = vpack.c.b16 %v1773, %v1772
        %v1803 = vpack.c.b16 %v1775, %v1774
        %v1804 = vpack.c.b16 %v1777, %v1776
        %v1805 = vpack.c.b16 %v1779, %v1778
        %v1806 = vpack.c.b16 %v1781, %v1780
        %v1807 = vpack.c.b16 %v1783, %v1782
        %1832 = vmatprep.subr.bf16.mxu0 0
        %1833 = vmatpush1.bf16.msra.mxu0 %v1784
        %1834 = vmatprep.subr.bf16.mxu0 0
        %1835 = vmatpush1.bf16.msra.mxu0 %v1785
        %1836 = vmatprep.subr.bf16.mxu0 0
        %1837 = vmatpush1.bf16.msra.mxu0 %v1786
        %1838 = vmatprep.subr.bf16.mxu0 0
        %1839 = vmatpush1.bf16.msra.mxu0 %v1787
        %1840 = vmatprep.subr.bf16.mxu0 0
        %1841 = vmatpush1.bf16.msra.mxu0 %v1788
        %1842 = vmatprep.subr.bf16.mxu0 0
        %1843 = vmatpush1.bf16.msra.mxu0 %v1789
        %1844 = vmatprep.subr.bf16.mxu0 0
        %1845 = vmatpush1.bf16.msra.mxu0 %v1790
        %1846 = vmatprep.subr.bf16.mxu0 0
        %1847 = vmatpush1.bf16.msra.mxu0 %v1791
        %1848 = vmatprep.subr.bf16.mxu0 0
        %1849 = vmatpush1.bf16.msra.mxu0 %v1792
        %1850 = vmatprep.subr.bf16.mxu0 0
        %1851 = vmatpush1.bf16.msra.mxu0 %v1793
        %1852 = vmatprep.subr.bf16.mxu0 0
        %1853 = vmatpush1.bf16.msra.mxu0 %v1794
        %1854 = vmatprep.subr.bf16.mxu0 0
        %1855 = vmatpush1.bf16.msra.mxu0 %v1795
        %1856 = vmatprep.subr.bf16.mxu0 0
        %1857 = vmatpush1.bf16.msra.mxu0 %v1796
        %1858 = vmatprep.subr.bf16.mxu0 0
        %1859 = vmatpush1.bf16.msra.mxu0 %v1797
        %1860 = vmatprep.subr.bf16.mxu0 0
        %1861 = vmatpush1.bf16.msra.mxu0 %v1798
        %1862 = vmatprep.subr.bf16.mxu0 0
        %1863 = vmatpush1.bf16.msra.mxu0 %v1799
        %1864 = vmatprep.mubr.bf16.mxu0 %v1612
        %1865 = vmatmul.mubr.bf16.gmra.mrb[0].mxu0 %v1591
        %v1866 = vpop.f32.mrb[0].mxu0
        %v1867 = vadd.f32 0.0, %v1866
        %v1868 = vpop.f32.mrb[0].mxu0
        %v1869 = vpop.f32.mrb[0].mxu0
        %v1870 = vpop.f32.mrb[0].mxu0
        %1871 = vmatprep.mubr.bf16.mxu0 %v1613
        %1872 = vmatmul.mubr.bf16.gmra.mrb[0].mxu0 %v1592
        %v1873 = vpop.f32.mrb[0].mxu0
        %v1874 = vpop.f32.mrb[0].mxu0
        %v1875 = vpop.f32.mrb[0].mxu0
        %v1876 = vadd.f32 0.0, %v1875
        %v1877 = vpop.f32.mrb[0].mxu0
        %1878 = vmatprep.mubr.bf16.mxu0 %v1614
        %1879 = vmatmul.mubr.bf16.gmra.mrb[0].mxu0 %v1593
        %v1880 = vpop.f32.mrb[0].mxu0
        %v1881 = vpop.f32.mrb[0].mxu0
        %v1882 = vpop.f32.mrb[0].mxu0
        %v1883 = vpop.f32.mrb[0].mxu0
        %1884 = vmatprep.mubr.bf16.mxu0 %v1615
        %1885 = vmatmul.mubr.bf16.gmra.mrb[0].mxu0 %v1594
        %v1886 = vpop.f32.mrb[0].mxu0
        %v1887 = vadd.f32 0.0, %v1886
        %v1888 = vpop.f32.mrb[0].mxu0
        %v1889 = vpop.f32.mrb[0].mxu0
        %v1890 = vpop.f32.mrb[0].mxu0
        %1891 = vmatprep.mubr.bf16.mxu0 %v1616
        %1892 = vmatmul.mubr.bf16.gmra.mrb[0].mxu0 %v1595
        %v1893 = vpop.f32.mrb[0].mxu0
        %v1894 = vpop.f32.mrb[0].mxu0
        %v1895 = vpop.f32.mrb[0].mxu0
        %v1896 = vadd.f32 0.0, %v1895
        %v1897 = vpop.f32.mrb[0].mxu0
        %1898 = vmatprep.mubr.bf16.mxu0 %v1617
        %1899 = vmatmul.mubr.bf16.gmra.mrb[0].mxu0 %v1596
        %v1900 = vpop.f32.mrb[0].mxu0
        %v1901 = vpop.f32.mrb[0].mxu0
        %v1902 = vpop.f32.mrb[0].mxu0
        %v1903 = vpop.f32.mrb[0].mxu0
        %1904 = vdwg.mxu0
        %1905 = vmatprep.subr.bf16.mxu0 0
        %1906 = vmatpush1.bf16.msra.mxu0 %v1800
        %1907 = vmatprep.subr.bf16.mxu0 0
        %1908 = vmatpush1.bf16.msra.mxu0 %v1801
        %1909 = vmatprep.subr.bf16.mxu0 0
        %1910 = vmatpush1.bf16.msra.mxu0 %v1802
        %1911 = vmatprep.subr.bf16.mxu0 0
        %1912 = vmatpush1.bf16.msra.mxu0 %v1803
        %1913 = vmatprep.subr.bf16.mxu0 0
        %1914 = vmatpush1.bf16.msra.mxu0 %v1804
        %1915 = vmatprep.subr.bf16.mxu0 0
        %1916 = vmatpush1.bf16.msra.mxu0 %v1805
        %1917 = vmatprep.subr.bf16.mxu0 0
        %1918 = vmatpush1.bf16.msra.mxu0 %v1806
        %1919 = vmatprep.subr.bf16.mxu0 0
        %1920 = vmatpush1.bf16.msra.mxu0 %v1807
        %1921 = vmatprep.subr.bf16.mxu0 0
        %1922 = vmatpush1.bf16.msra.mxu0 0
        %1923 = vmatprep.subr.bf16.mxu0 0
        %1924 = vmatpush1.bf16.msra.mxu0 0
        %1925 = vmatprep.subr.bf16.mxu0 0
        %1926 = vmatpush1.bf16.msra.mxu0 0
        %1927 = vmatprep.subr.bf16.mxu0 0
        %1928 = vmatpush1.bf16.msra.mxu0 0
        %1929 = vmatprep.subr.bf16.mxu0 0
        %1930 = vmatpush1.bf16.msra.mxu0 0
        %1931 = vmatprep.subr.bf16.mxu0 0
        %1932 = vmatpush1.bf16.msra.mxu0 0
        %1933 = vmatprep.subr.bf16.mxu0 0
        %1934 = vmatpush1.bf16.msra.mxu0 0
        %1935 = vmatprep.subr.bf16.mxu0 0
        %1936 = vmatpush1.bf16.msra.mxu0 0
        %1937 = vmatprep.mubr.bf16.mxu0 0
        %1938 = vmatmul.mubr.bf16.gmra.mrb[0].mxu0 %v1633
        %v1939 = vpop.f32.mrb[0].mxu0
        %v1940 = vadd.f32 %v1867, %v1939
        %v1941 = vpop.f32.mrb[0].mxu0
        %v1942 = vpop.f32.mrb[0].mxu0
        %v1943 = vpop.f32.mrb[0].mxu0
        %1944 = vmatprep.mubr.bf16.mxu0 0
        %1945 = vmatmul.mubr.bf16.gmra.mrb[0].mxu0 %v1634
        %v1946 = vpop.f32.mrb[0].mxu0
        %v1947 = vpop.f32.mrb[0].mxu0
        %v1948 = vpop.f32.mrb[0].mxu0
        %v1949 = vadd.f32 %v1876, %v1948
        %v1950 = vpop.f32.mrb[0].mxu0
        %1951 = vmatprep.mubr.bf16.mxu0 0
        %1952 = vmatmul.mubr.bf16.gmra.mrb[0].mxu0 %v1635
        %v1953 = vpop.f32.mrb[0].mxu0
        %v1954 = vpop.f32.mrb[0].mxu0
        %v1955 = vpop.f32.mrb[0].mxu0
        %v1956 = vpop.f32.mrb[0].mxu0
        %1957 = vmatprep.mubr.bf16.mxu0 0
        %1958 = vmatmul.mubr.bf16.gmra.mrb[0].mxu0 %v1636
        %v1959 = vpop.f32.mrb[0].mxu0
        %v1960 = vadd.f32 %v1887, %v1959
        %v1961 = vpop.f32.mrb[0].mxu0
        %v1962 = vpop.f32.mrb[0].mxu0
        %v1963 = vpop.f32.mrb[0].mxu0
        %1964 = vmatprep.mubr.bf16.mxu0 0
        %1965 = vmatmul.mubr.bf16.gmra.mrb[0].mxu0 %v1637
        %v1966 = vpop.f32.mrb[0].mxu0
        %v1967 = vpop.f32.mrb[0].mxu0
        %v1968 = vpop.f32.mrb[0].mxu0
        %v1969 = vadd.f32 %v1896, %v1968
        %v1970 = vpop.f32.mrb[0].mxu0
        %1971 = vmatprep.mubr.bf16.mxu0 0
        %1972 = vmatmul.mubr.bf16.gmra.mrb[0].mxu0 %v1638
        %v1973 = vpop.f32.mrb[0].mxu0
        %v1974 = vpop.f32.mrb[0].mxu0
        %v1975 = vpop.f32.mrb[0].mxu0
        %v1976 = vpop.f32.mrb[0].mxu0
        %1977 = vdwg.mxu0
        %v1978 = vadd.f32 %v1538, %v1940
        %v1979 = vadd.f32 %v1547, %v1949
        %v1980 = vadd.f32 %v1558, %v1960
        %v1981 = vadd.f32 %v1567, %v1969
        %v1982 = vmax.f32 %v1978, 0.0
        %v1983 = vmax.f32 %v1979, 0.0
        %v1984 = vmax.f32 %v1980, 0.0
        %v1985 = vmax.f32 %v1981, 0.0
        %v1986 = vpack.c.bf16 %v1983, %v1982
        %v1987 = vpack.c.bf16 %v1985, %v1984
        %v1988 = vld [vmem:[#allocation10] sm:$0xf]
        %v1989 = vld [vmem:[#allocation10 + $0x4] sm:$0xf]
        %v1990 = vld [vmem:[#allocation10 + $0x8] sm:$0xf]
        %v1991 = vld [vmem:[#allocation10 + $0xc] sm:$0xf]
        %v1992 = vld [vmem:[#allocation10 + $0x10] sm:$0xf]
        %v1993 = vld [vmem:[#allocation10 + $0x14] sm:$0xf]
        %v1994 = vld [vmem:[#allocation10 + $0x18] sm:$0xf]
        %v1995 = vld [vmem:[#allocation10 + $0x1c] sm:$0xf]
        %v1996 = vld [vmem:[#allocation10 + $0x20] sm:$0xf]
        %v1997 = vld [vmem:[#allocation10 + $0x24] sm:$0xf]
        %v1998 = vld [vmem:[#allocation10 + $0x28] sm:$0xf]
        %v1999 = vld [vmem:[#allocation10 + $0x2c] sm:$0xf]
        %v2000 = vld [vmem:[#allocation10 + $0x30] sm:$0xf]
        %v2001 = vld [vmem:[#allocation10 + $0x34] sm:$0xf]
        %v2002 = vld [vmem:[#allocation10 + $0x38] sm:$0xf]
        %v2003 = vld [vmem:[#allocation10 + $0x3c] sm:$0xf]
        %s2004 = scalar_lea.vmem [#allocation3], 25
        %v2005 = vld [vmem:[%s2004] ss:$2 sm:$0xff]
        %s2006 = scalar_lea.vmem [#allocation3], 73
        %v2007 = vld [vmem:[%s2006] ss:$2 sm:$0xff]
        %s2008 = scalar_lea.vmem [#allocation3], 121
        %v2009 = vld [vmem:[%s2008] ss:$2 sm:$0xff]
        %s2010 = scalar_lea.vmem [#allocation3], 169
        %v2011 = vld [vmem:[%s2010] ss:$2 sm:$0xff]
        %v2012 = vpack.c.bf16 %v2007, %v2005
        %v2013 = vpack.c.bf16 %v2011, %v2009
        %v2014 = vld [vmem:[#allocation12] sm:$0xf]
        %v2015 = vld [vmem:[#allocation12 + $0x4] sm:$0xf]
        %v2016 = vld [vmem:[#allocation12 + $0x8] sm:$0xf]
        %v2017 = vld [vmem:[#allocation12 + $0xc] sm:$0xf]
        %v2018 = vld [vmem:[#allocation12 + $0x10] sm:$0xf]
        %v2019 = vld [vmem:[#allocation12 + $0x14] sm:$0xf]
        %v2020 = vld [vmem:[#allocation12 + $0x18] sm:$0xf]
        %v2021 = vld [vmem:[#allocation12 + $0x1c] sm:$0xf]
        %v2022 = vld [vmem:[#allocation12 + $0x20] sm:$0xf]
        %v2023 = vld [vmem:[#allocation12 + $0x24] sm:$0xf]
        %v2024 = vld [vmem:[#allocation12 + $0x28] sm:$0xf]
        %v2025 = vld [vmem:[#allocation12 + $0x2c] sm:$0xf]
        %v2026 = vld [vmem:[#allocation12 + $0x30] sm:$0xf]
        %v2027 = vld [vmem:[#allocation12 + $0x34] sm:$0xf]
        %v2028 = vld [vmem:[#allocation12 + $0x38] sm:$0xf]
        %v2029 = vld [vmem:[#allocation12 + $0x3c] sm:$0xf]
        %v2046 = vunpack.c.l.b16 %v2014
        %v2047 = vunpack.c.l.b16 %v2015
        %v2048 = vunpack.c.l.b16 %v2016
        %v2049 = vunpack.c.l.b16 %v2017
        %v2050 = vunpack.c.l.b16 %v2018
        %v2051 = vunpack.c.l.b16 %v2019
        %v2052 = vunpack.c.l.b16 %v2020
        %v2053 = vunpack.c.l.b16 %v2021
        %v2054 = vunpack.c.l.b16 %v2022
        %v2055 = vunpack.c.l.b16 %v2023
        %v2056 = vunpack.c.l.b16 %v2024
        %v2057 = vunpack.c.l.b16 %v2025
        %v2058 = vunpack.c.l.b16 %v2026
        %v2059 = vunpack.c.l.b16 %v2027
        %v2060 = vunpack.c.l.b16 %v2028
        %v2061 = vunpack.c.l.b16 %v2029
        %v2062 = vpack.c.b16 %v2047, %v2046
        %v2063 = vpack.c.b16 %v2049, %v2048
        %v2064 = vpack.c.b16 %v2051, %v2050
        %v2065 = vpack.c.b16 %v2053, %v2052
        %v2066 = vpack.c.b16 %v2055, %v2054
        %v2067 = vpack.c.b16 %v2057, %v2056
        %v2068 = vpack.c.b16 %v2059, %v2058
        %v2069 = vpack.c.b16 %v2061, %v2060
        %2078 = vmatprep.subr.bf16.mxu0 0
        %2079 = vmatpush1.bf16.msra.mxu0 %v2062
        %2080 = vmatprep.subr.bf16.mxu0 0
        %2081 = vmatpush1.bf16.msra.mxu0 %v2063
        %2082 = vmatprep.subr.bf16.mxu0 0
        %2083 = vmatpush1.bf16.msra.mxu0 %v2064
        %2084 = vmatprep.subr.bf16.mxu0 0
        %2085 = vmatpush1.bf16.msra.mxu0 %v2065
        %2086 = vmatprep.subr.bf16.mxu0 0
        %2087 = vmatpush1.bf16.msra.mxu0 %v2066
        %2088 = vmatprep.subr.bf16.mxu0 0
        %2089 = vmatpush1.bf16.msra.mxu0 %v2067
        %2090 = vmatprep.subr.bf16.mxu0 0
        %2091 = vmatpush1.bf16.msra.mxu0 %v2068
        %2092 = vmatprep.subr.bf16.mxu0 0
        %2093 = vmatpush1.bf16.msra.mxu0 %v2069
        %2094 = vmatprep.subr.bf16.mxu0 0
        %2095 = vmatpush1.bf16.msra.mxu0 0
        %2096 = vmatprep.subr.bf16.mxu0 0
        %2097 = vmatpush1.bf16.msra.mxu0 0
        %2098 = vmatprep.subr.bf16.mxu0 0
        %2099 = vmatpush1.bf16.msra.mxu0 0
        %2100 = vmatprep.subr.bf16.mxu0 0
        %2101 = vmatpush1.bf16.msra.mxu0 0
        %2102 = vmatprep.subr.bf16.mxu0 0
        %2103 = vmatpush1.bf16.msra.mxu0 0
        %2104 = vmatprep.subr.bf16.mxu0 0
        %2105 = vmatpush1.bf16.msra.mxu0 0
        %2106 = vmatprep.subr.bf16.mxu0 0
        %2107 = vmatpush1.bf16.msra.mxu0 0
        %2108 = vmatprep.subr.bf16.mxu0 0
        %2109 = vmatpush1.bf16.msra.mxu0 0
        %2110 = vmatprep.mubr.bf16.mxu0 0
        %2111 = vmatmul.mubr.bf16.gmra.mrb[0].mxu0 %v2012
        %v2112 = vpop.f32.mrb[0].mxu0
        %v2113 = vadd.f32 0.0, %v2112
        %v2114 = vpop.f32.mrb[0].mxu0
        %v2115 = vpop.f32.mrb[0].mxu0
        %v2116 = vadd.f32 0.0, %v2115
        %v2117 = vpop.f32.mrb[0].mxu0
        %2118 = vmatprep.mubr.bf16.mxu0 0
        %2119 = vmatmul.mubr.bf16.gmra.mrb[0].mxu0 %v2013
        %v2120 = vpop.f32.mrb[0].mxu0
        %v2121 = vadd.f32 0.0, %v2120
        %v2122 = vpop.f32.mrb[0].mxu0
        %v2123 = vpop.f32.mrb[0].mxu0
        %v2124 = vadd.f32 0.0, %v2123
        %v2125 = vpop.f32.mrb[0].mxu0
        %2126 = vdwg.mxu0
        %v2143 = vunpack.c.l.b16 %v1988
        %v2144 = vunpack.c.l.b16 %v1989
        %v2145 = vunpack.c.l.b16 %v1990
        %v2146 = vunpack.c.l.b16 %v1991
        %v2147 = vunpack.c.l.b16 %v1992
        %v2148 = vunpack.c.l.b16 %v1993
        %v2149 = vunpack.c.l.b16 %v1994
        %v2150 = vunpack.c.l.b16 %v1995
        %v2151 = vunpack.c.l.b16 %v1996
        %v2152 = vunpack.c.l.b16 %v1997
        %v2153 = vunpack.c.l.b16 %v1998
        %v2154 = vunpack.c.l.b16 %v1999
        %v2155 = vunpack.c.l.b16 %v2000
        %v2156 = vunpack.c.l.b16 %v2001
        %v2157 = vunpack.c.l.b16 %v2002
        %v2158 = vunpack.c.l.b16 %v2003
        %v2159 = vpack.c.b16 %v2144, %v2143
        %v2160 = vpack.c.b16 %v2146, %v2145
        %v2161 = vpack.c.b16 %v2148, %v2147
        %v2162 = vpack.c.b16 %v2150, %v2149
        %v2163 = vpack.c.b16 %v2152, %v2151
        %v2164 = vpack.c.b16 %v2154, %v2153
        %v2165 = vpack.c.b16 %v2156, %v2155
        %v2166 = vpack.c.b16 %v2158, %v2157
        %2175 = vmatprep.subr.bf16.mxu0 0
        %2176 = vmatpush1.bf16.msra.mxu0 %v2159
        %2177 = vmatprep.subr.bf16.mxu0 0
        %2178 = vmatpush1.bf16.msra.mxu0 %v2160
        %2179 = vmatprep.subr.bf16.mxu0 0
        %2180 = vmatpush1.bf16.msra.mxu0 %v2161
        %2181 = vmatprep.subr.bf16.mxu0 0
        %2182 = vmatpush1.bf16.msra.mxu0 %v2162
        %2183 = vmatprep.subr.bf16.mxu0 0
        %2184 = vmatpush1.bf16.msra.mxu0 %v2163
        %2185 = vmatprep.subr.bf16.mxu0 0
        %2186 = vmatpush1.bf16.msra.mxu0 %v2164
        %2187 = vmatprep.subr.bf16.mxu0 0
        %2188 = vmatpush1.bf16.msra.mxu0 %v2165
        %2189 = vmatprep.subr.bf16.mxu0 0
        %2190 = vmatpush1.bf16.msra.mxu0 %v2166
        %2191 = vmatprep.subr.bf16.mxu0 0
        %2192 = vmatpush1.bf16.msra.mxu0 0
        %2193 = vmatprep.subr.bf16.mxu0 0
        %2194 = vmatpush1.bf16.msra.mxu0 0
        %2195 = vmatprep.subr.bf16.mxu0 0
        %2196 = vmatpush1.bf16.msra.mxu0 0
        %2197 = vmatprep.subr.bf16.mxu0 0
        %2198 = vmatpush1.bf16.msra.mxu0 0
        %2199 = vmatprep.subr.bf16.mxu0 0
        %2200 = vmatpush1.bf16.msra.mxu0 0
        %2201 = vmatprep.subr.bf16.mxu0 0
        %2202 = vmatpush1.bf16.msra.mxu0 0
        %2203 = vmatprep.subr.bf16.mxu0 0
        %2204 = vmatpush1.bf16.msra.mxu0 0
        %2205 = vmatprep.subr.bf16.mxu0 0
        %2206 = vmatpush1.bf16.msra.mxu0 0
        %2207 = vmatprep.mubr.bf16.mxu0 0
        %2208 = vmatmul.mubr.bf16.gmra.mrb[0].mxu0 %v1986
        %v2209 = vpop.f32.mrb[0].mxu0
        %v2210 = vadd.f32 %v2113, %v2209
        %v2211 = vpop.f32.mrb[0].mxu0
        %v2212 = vpop.f32.mrb[0].mxu0
        %v2213 = vadd.f32 %v2116, %v2212
        %v2214 = vpop.f32.mrb[0].mxu0
        %2215 = vmatprep.mubr.bf16.mxu0 0
        %2216 = vmatmul.mubr.bf16.gmra.mrb[0].mxu0 %v1987
        %v2217 = vpop.f32.mrb[0].mxu0
        %v2218 = vadd.f32 %v2121, %v2217
        %v2219 = vpop.f32.mrb[0].mxu0
        %v2220 = vpop.f32.mrb[0].mxu0
        %v2221 = vadd.f32 %v2124, %v2220
        %v2222 = vpop.f32.mrb[0].mxu0
        %2223 = vdwg.mxu0
        %v2224 = vmax.f32 %v2210, 0.0
        %v2225 = vmax.f32 %v2213, 0.0
        %v2226 = vmax.f32 %v2218, 0.0
        %v2227 = vmax.f32 %v2221, 0.0
        %2228 = vst [vmem:[%s314] sm:$0xff] %v2224
        %2229 = vst [vmem:[%s314 + $0x8] sm:$0xff] %v2225
        %2230 = vst [vmem:[%s314 + $0x10] sm:$0xff] %v2226
        %2231 = vst [vmem:[%s314 + $0x18] sm:$0xff] %v2227
        %s2232 = sand.u32 %s156, 1
        %s2233 = scalar_lea.sflag [#allocation6], %s2232
        %s2234 = sand.u32 %s156, 1
        %s2235 = smul.addr %s2234, 32
        %s2236 = scalar_lea.vmem [#allocation13], %s2235
        // Predicated region
        $region61: #{tpu_custom_call.1} parent=39 // pred_check
          %p2237 = pneg %p166
        $region62: #{tpu_custom_call.1} parent=39 // pred_check_branch
          %2239 = sbr.rel (%p2237) target = $region64
        $region63: #{tpu_custom_call.1} parent=39 // pred_region
          %s2240 = smul.u32 4, %s29
          %s2242 = ssub.s32 512, 512
          %2243 = vsyncadd %s2233, %s2242
          %s2244 = smul.addr %s28, 8
          %s2245 = sadd.s32 %s2240, %s2244
          %s2246 = smul.addr %s2245, 128
          %s2247 = scalar_lea.hbm %s5, %s2246
          %s2248 = sshll.u32 %s2236, 4
          %s2249 = int_to_ptr.vmem [resolvable:$true] %s2248
          %2254 = dma.vmem_to_hbm [thread:$0]  %s2249, 512, %s2247, %s2233, 128, 128, 8
        $region64: #{tpu_custom_call.1} parent=39 // pred_fallthru
          _
      $region40: #{tpu_custom_call.1} parent=5 // pred_fallthru
        _
      %p2255 = scmp.le.s32.totalorder 2, %s19
      // Predicated region
      $region65: #{tpu_custom_call.1} parent=5 // pred_check
        %p2256 = pneg %p2255
      $region66: #{tpu_custom_call.1} parent=5 // pred_check_branch
        %2258 = sbr.rel (%p2256) target = $region68
      $region67: #{tpu_custom_call.1} parent=5 // pred_region
        %s2259 = ssub.s32 %s19, 2
        // Predicated region
        $region69: #{tpu_custom_call.1} parent=67 // pred_check
          %p2260 = pneg %p172
        $region70: #{tpu_custom_call.1} parent=67 // pred_check_branch
          %2262 = sbr.rel (%p2260) target = $region72
        $region71: #{tpu_custom_call.1} parent=67 // pred_region
          %s2263 = sand.u32 %s157, 1
          %s2264 = scalar_lea.sflag [#allocation6], %s2263
          %s2265 = sand.u32 %s157, 1
          %s2266 = smul.addr %s2265, 32
          %s2267 = scalar_lea.vmem [#allocation13], %s2266
          %2268 = dma.done %s2264, 512
        $region72: #{tpu_custom_call.1} parent=67 // pred_fallthru
          _
      $region68: #{tpu_custom_call.1} parent=5 // pred_fallthru
        _
    $region6: #{tpu_custom_call.1} parent=1 // loop_footer
      %s23 = sadd.s32 1, %s19
    $region7: #{tpu_custom_call.1} parent=1 // loop_footer_branch
      %18 = sbr.rel target = $region3
    $region8: #{tpu_custom_call.1} parent=1 // loop_exit
      _
    %2269 = vsyncpa [#allocation5], 1
    %s2270 = scalar_lea.sflag [#allocation5], 1
    %2271 = vsyncpa %s2270, 1
    %2272 = vsyncpa [#allocation8], 1
    %2273 = vsyncpa [#allocation11], 1
    %2274 = vsyncpa [#allocation6], 1
    %s2275 = scalar_lea.sflag [#allocation6], 1
    %2276 = vsyncpa %s2275, 1

</llo_original>
